<compile_context>
chip_gen: v7x
topology: tpu7x:2x2x1
jax: 0.10.0
libtpu: 0.0.40
codegen_flags: <defaults>
</compile_context>

<pallas_src>
import functools

import jax
import jax.numpy as jnp
from jax.experimental import pallas as pl
from jax.experimental.pallas import tpu as pltpu


# --------------------------------- kernel ----------------------------------- #

def _fused_cnn_kernel(x_ref, w1a, b1a, w1b, b1b, w2a, b2a, w2b, b2b,
                      wl, bl, o_ref, stack_ref, *, cfg):
    (W, cp1, cp2, cp3, cp4, r1, r2, r3, r4, r5, r6, feat_q) = cfg
    # Tap shift patterns: stride-1 grid for block 1, stride-2 grid after pool1.
    s1 = tuple(kh * W + kw for kh in range(3) for kw in range(3))
    s2 = tuple(2 * s for s in s1)
    p1 = (0, 1, W, W + 1)              # 2x2 pool on the stride-1 grid
    p2 = (0, 2, 2 * W, 2 * W + 2)      # 2x2 pool on the stride-2 grid

    def conv_relu(x, w_ref, b_ref, shifts, cin, r_out):
        # im2col into the VMEM scratch (one shifted tap live at a time), then a
        # single MXU dot with contraction depth K = 9*Cin.
        for k, s in enumerate(shifts):
            stack_ref[k * cin:(k + 1) * cin, :r_out] = x[:, s:s + r_out]
        patches = stack_ref[:9 * cin, :r_out]                  # (9*Cin, r_out)
        acc = jnp.dot(w_ref[...], patches, preferred_element_type=jnp.float32)
        return jnp.maximum(acc + b_ref[...], 0.0)

    def maxpool(x, shifts, r_out):
        a0, a1, a2, a3 = shifts
        return jnp.maximum(
            jnp.maximum(x[:, a0:a0 + r_out], x[:, a1:a1 + r_out]),
            jnp.maximum(x[:, a2:a2 + r_out], x[:, a3:a3 + r_out]))

    x = x_ref[0]                              # (Cin_pad, 784) flattened NCHW image
    a = conv_relu(x, w1a, b1a, s1, cp1, r1)   # (H,  726)
    a = conv_relu(a, w1b, b1b, s1, cp2, r2)   # (H,  668)
    a = maxpool(a, p1, r3)                    # (H,  639)  valid on stride-2 grid
    a = conv_relu(a, w2a, b2a, s2, cp3, r4)   # (2H, 523)
    a = conv_relu(a, w2b, b2b, s2, cp4, r5)   # (2H, 407)
    a = maxpool(a, p2, r6)                    # (2H, 349)  valid on stride-4 grid

    # Classifier: gather the 16 static feature columns (PyTorch flatten order is
    # folded into the weight permutation) and do ONE dot with K = 16*C2 (= 256).
    c2 = cp4
    for p, q in enumerate(feat_q):
        stack_ref[p * c2:(p + 1) * c2, :1] = a[:, q:q + 1]
    feat = stack_ref[:16 * c2, :1]                               # (16*C2, 1)
    o_ref[0] = jnp.dot(wl[...], feat, preferred_element_type=jnp.float32) + bl[...]


# ------------------------------ host-side wrapper ---------------------------- #

def _prep_conv_w(w_oihw, cin_pad):
    """(Cout, Cin, 3, 3) -> (Cout, 9*Cin_pad); column = (kh*3+kw)*Cin_pad + c."""
    cout, cin = w_oihw.shape[0], w_oihw.shape[1]
    w = jnp.transpose(w_oihw, (0, 2, 3, 1))                 # (Cout, 3, 3, Cin)
    if cin_pad > cin:
        w = jnp.pad(w, ((0, 0), (0, 0), (0, 0), (0, cin_pad - cin)))
    return w.reshape(cout, 9 * cin_pad)


def _const_spec(shape):
    nd = len(shape)
    return pl.BlockSpec(shape, lambda b, _nd=nd: (0,) * _nd)


def cnn_forward(x_nchw, params):
    """Mirrors CNN.forward. x_nchw: (B, input_size, 28, 28) f32 -> (B, O)."""
    B, Cin, Hs, Ws = x_nchw.shape
    assert Hs == 28 and Ws == 28, "Linear(in=hidden*16*2) implies 28x28 input"
    Hid = params["w1a"].shape[0]
    C2 = 2 * Hid
    O = params["wl"].shape[0]
    W = Ws
    R0 = Hs * Ws
    cin_pad = ((Cin + 7) // 8) * 8

    # Frame length after each stage (each layer shrinks by its max tap shift).
    r1 = R0 - (2 * W + 2)          # conv1a: 726
    r2 = r1 - (2 * W + 2)          # conv1b: 668
    r3 = r2 - (W + 1)              # pool1 : 639
    r4 = r3 - 2 * (2 * W + 2)      # conv2a: 523
    r5 = r4 - 2 * (2 * W + 2)      # conv2b: 407
    r6 = r5 - 2 * (W + 1)          # pool2 : 349
    feat_q = tuple(4 * (i * W + j) for i in range(4) for j in range(4))
    cfg = (W, cin_pad, Hid, Hid, C2, r1, r2, r3, r4, r5, r6, feat_q)

    # Host-side prep: flatten frame, zero-pad input channels to 8, permute
    # weights.  No activation transposes anywhere.
    x_flat = x_nchw.reshape(B, Cin, R0)
    if cin_pad > Cin:
        x_flat = jnp.pad(x_flat, ((0, 0), (0, cin_pad - Cin), (0, 0)))

    w1a = _prep_conv_w(params["w1a"], cin_pad); b1a = params["b1a"].reshape(Hid, 1)
    w1b = _prep_conv_w(params["w1b"], Hid);     b1b = params["b1b"].reshape(Hid, 1)
    w2a = _prep_conv_w(params["w2a"], Hid);     b2a = params["b2a"].reshape(C2, 1)
    w2b = _prep_conv_w(params["w2b"], C2);      b2b = params["b2b"].reshape(C2, 1)
    # PyTorch flatten index c*16 + p  ->  stacked-gather index p*C2 + c.
    wl = params["wl"].reshape(O, C2, 16).transpose(0, 2, 1).reshape(O, 16 * C2)
    bl = params["bl"].reshape(O, 1)

    stack_rows = max(9 * max(cin_pad, Hid, C2), 16 * C2)
    stack_cols = pl.cdiv(r1, 128) * 128

    flops = 2 * B * (9 * cin_pad * Hid * r1 + 9 * Hid * Hid * r2
                     + 9 * Hid * C2 * r4 + 9 * C2 * C2 * r5 + 16 * C2 * O)
    bytes_accessed = 4 * (x_flat.size + w1a.size + w1b.size + w2a.size + w2b.size
                          + wl.size + b1a.size + b1b.size + b2a.size + b2b.size
                          + bl.size + B * O)

    kern = functools.partial(_fused_cnn_kernel, cfg=cfg)
    out = pl.pallas_call(
        kern,
        out_shape=jax.ShapeDtypeStruct((B, O, 1), jnp.float32),
        grid=(B,),
        in_specs=[
            pl.BlockSpec((1, cin_pad, R0), lambda b: (b, 0, 0)),
            _const_spec(w1a.shape), _const_spec(b1a.shape),
            _const_spec(w1b.shape), _const_spec(b1b.shape),
            _const_spec(w2a.shape), _const_spec(b2a.shape),
            _const_spec(w2b.shape), _const_spec(b2b.shape),
            _const_spec(wl.shape), _const_spec(bl.shape),
        ],
        out_specs=pl.BlockSpec((1, O, 1), lambda b: (b, 0, 0)),
        scratch_shapes=[pltpu.VMEM((stack_rows, stack_cols), jnp.float32)],
        compiler_params=pltpu.CompilerParams(
            dimension_semantics=("parallel",)),
        cost_estimate=pl.CostEstimate(
            flops=flops, transcendentals=0, bytes_accessed=bytes_accessed),
    )(x_flat, w1a, b1a, w1b, b1b, w2a, b2a, w2b, b2b, wl, bl)
    return out[:, :, 0]


# --------------------------- parameters & reference ------------------------- #

def init_params(key, input_size, hidden_size, output_size):
    def conv_init(k, cout, cin):
        k1, k2 = jax.random.split(k)
        bound = 1.0 / jnp.sqrt(cin * 9.0)
        w = jax.random.uniform(k1, (cout, cin, 3, 3), jnp.float32, -bound, bound)
        b = jax.random.uniform(k2, (cout,), jnp.float32, -bound, bound)
        return w, b

    def lin_init(k, fout, fin):
        k1, k2 = jax.random.split(k)
        bound = 1.0 / jnp.sqrt(float(fin))
        w = jax.random.uniform(k1, (fout, fin), jnp.float32, -bound, bound)
        b = jax.random.uniform(k2, (fout,), jnp.float32, -bound, bound)
        return w, b

    ks = jax.random.split(key, 5)
    p = {}
    p["w1a"], p["b1a"] = conv_init(ks[0], hidden_size, input_size)
    p["w1b"], p["b1b"] = conv_init(ks[1], hidden_size, hidden_size)
    p["w2a"], p["b2a"] = conv_init(ks[2], hidden_size * 2, hidden_size)
    p["w2b"], p["b2b"] = conv_init(ks[3], hidden_size * 2, hidden_size * 2)
    p["wl"], p["bl"] = lin_init(ks[4], output_size, hidden_size * 16 * 2)
    return p


def ref_forward(x_nchw, p):
    """Pure-JAX (XLA) reference with PyTorch semantics, highest precision."""
    prec = jax.lax.Precision.HIGHEST

    def conv(x, w, b):
        y = jax.lax.conv_general_dilated(
            x, w, (1, 1), "VALID",
            dimension_numbers=("NCHW", "OIHW", "NCHW"), precision=prec)
        return y + b[None, :, None, None]

    def pool(x):
        return jax.lax.reduce_window(x, -jnp.inf, jax.lax.max,
                                     (1, 1, 2, 2), (1, 1, 2, 2), "VALID")

    x = jnp.maximum(conv(x_nchw, p["w1a"], p["b1a"]), 0.0)
    x = jnp.maximum(conv(x, p["w1b"], p["b1b"]), 0.0)
    x = pool(x)
    x = jnp.maximum(conv(x, p["w2a"], p["b2a"]), 0.0)
    x = jnp.maximum(conv(x, p["w2b"], p["b2b"]), 0.0)
    x = pool(x)
    x = x.reshape(x.shape[0], -1)
    return jnp.dot(x, p["wl"].T, precision=prec) + p["bl"]


# ----------------------------------- main ----------------------------------- #

if __name__ == "__main__":
    # 28x28 spatial input is implied by Linear(in_features=hidden_size*16*2).
    input_size, hidden_size, output_size = 3, 8, 10
    batch = 2

    key = jax.random.PRNGKey(0)
    kx, kp = jax.random.split(key)
    x = jax.random.normal(kx, (batch, input_size, 28, 28), jnp.float32)
    params = init_params(kp, input_size, hidden_size, output_size)

    out = jax.jit(cnn_forward)(x, params)
    out = jax.block_until_ready(out)
    assert out.shape == (batch, output_size)

    ref = ref_forward(x, params)
    err = float(jnp.max(jnp.abs(out - ref)))
    # Default MXU precision may run f32 dots with bf16 passes -> allow a few e-3.
    assert jnp.allclose(out, ref, atol=5e-3, rtol=5e-3), f"max|err|={err}"

    print("KERNEL_OK")
</pallas_src>

<mosaic_0001>
module attributes {stable_mosaic.version = 11 : i64} {
  func.func @_fused_cnn_kernel(%arg0: i32, %arg1: memref<1x8x784xf32, #tpu.memory_space<vmem>>, %arg2: memref<8x72xf32, #tpu.memory_space<vmem>>, %arg3: memref<8x1xf32, #tpu.memory_space<vmem>>, %arg4: memref<8x72xf32, #tpu.memory_space<vmem>>, %arg5: memref<8x1xf32, #tpu.memory_space<vmem>>, %arg6: memref<16x72xf32, #tpu.memory_space<vmem>>, %arg7: memref<16x1xf32, #tpu.memory_space<vmem>>, %arg8: memref<16x144xf32, #tpu.memory_space<vmem>>, %arg9: memref<16x1xf32, #tpu.memory_space<vmem>>, %arg10: memref<10x256xf32, #tpu.memory_space<vmem>>, %arg11: memref<10x1xf32, #tpu.memory_space<vmem>>, %arg12: memref<1x10x1xf32, #tpu.memory_space<vmem>>, %arg13: memref<256x768xf32, #tpu.memory_space<vmem>>) attributes {dimension_semantics = [#tpu.dimension_semantics<parallel>], iteration_bounds = array<i64: 2>, scalar_prefetch = 0 : i64, scratch_operands = 1 : i64, tpu.core_type = #tpu.core_type<tc>, window_params = [{transform_indices = @transform_0, window_bounds = array<i64: 1, 8, 784>}, {pipeline_mode = #tpu.pipeline_mode<synchronous>, transform_indices = @transform_1, window_bounds = array<i64: 8, 72>}, {pipeline_mode = #tpu.pipeline_mode<synchronous>, transform_indices = @transform_2, window_bounds = array<i64: 8, 1>}, {pipeline_mode = #tpu.pipeline_mode<synchronous>, transform_indices = @transform_3, window_bounds = array<i64: 8, 72>}, {pipeline_mode = #tpu.pipeline_mode<synchronous>, transform_indices = @transform_4, window_bounds = array<i64: 8, 1>}, {pipeline_mode = #tpu.pipeline_mode<synchronous>, transform_indices = @transform_5, window_bounds = array<i64: 16, 72>}, {pipeline_mode = #tpu.pipeline_mode<synchronous>, transform_indices = @transform_6, window_bounds = array<i64: 16, 1>}, {pipeline_mode = #tpu.pipeline_mode<synchronous>, transform_indices = @transform_7, window_bounds = array<i64: 16, 144>}, {pipeline_mode = #tpu.pipeline_mode<synchronous>, transform_indices = @transform_8, window_bounds = array<i64: 16, 1>}, {pipeline_mode = #tpu.pipeline_mode<synchronous>, transform_indices = @transform_9, window_bounds = array<i64: 10, 256>}, {pipeline_mode = #tpu.pipeline_mode<synchronous>, transform_indices = @transform_10, window_bounds = array<i64: 10, 1>}, {transform_indices = @transform_11, window_bounds = array<i64: 1, 10, 1>}]} {
    %c0 = arith.constant 0 : index
    %c0_0 = arith.constant 0 : index
    %c0_1 = arith.constant 0 : index
    %0 = vector.load %arg1[%c0, %c0_0, %c0_1] : memref<1x8x784xf32, #tpu.memory_space<vmem>>, vector<1x8x784xf32>
    %1 = vector.shape_cast %0 : vector<1x8x784xf32> to vector<8x784xf32>
    %2 = vector.extract_strided_slice %1 {offsets = [0, 0], sizes = [8, 726], strides = [1, 1]} : vector<8x784xf32> to vector<8x726xf32>
    %c0_2 = arith.constant 0 : index
    %c0_3 = arith.constant 0 : index
    %3 = vector.load %arg13[%c0_2, %c0_3] : memref<256x768xf32, #tpu.memory_space<vmem>>, vector<8x726xf32>
    tpu.vector_store %arg13[%c0_2, %c0_3], %2 {strides = array<i32>} : memref<256x768xf32, #tpu.memory_space<vmem>>, vector<8x726xf32>,
    %4 = vector.extract_strided_slice %1 {offsets = [0, 1], sizes = [8, 726], strides = [1, 1]} : vector<8x784xf32> to vector<8x726xf32>
    %c8 = arith.constant 8 : index
    %c0_4 = arith.constant 0 : index
    %5 = vector.load %arg13[%c8, %c0_4] : memref<256x768xf32, #tpu.memory_space<vmem>>, vector<8x726xf32>
    tpu.vector_store %arg13[%c8, %c0_4], %4 {strides = array<i32>} : memref<256x768xf32, #tpu.memory_space<vmem>>, vector<8x726xf32>,
    %6 = vector.extract_strided_slice %1 {offsets = [0, 2], sizes = [8, 726], strides = [1, 1]} : vector<8x784xf32> to vector<8x726xf32>
    %c16 = arith.constant 16 : index
    %c0_5 = arith.constant 0 : index
    %7 = vector.load %arg13[%c16, %c0_5] : memref<256x768xf32, #tpu.memory_space<vmem>>, vector<8x726xf32>
    tpu.vector_store %arg13[%c16, %c0_5], %6 {strides = array<i32>} : memref<256x768xf32, #tpu.memory_space<vmem>>, vector<8x726xf32>,
    %8 = vector.extract_strided_slice %1 {offsets = [0, 28], sizes = [8, 726], strides = [1, 1]} : vector<8x784xf32> to vector<8x726xf32>
    %c24 = arith.constant 24 : index
    %c0_6 = arith.constant 0 : index
    %9 = vector.load %arg13[%c24, %c0_6] : memref<256x768xf32, #tpu.memory_space<vmem>>, vector<8x726xf32>
    tpu.vector_store %arg13[%c24, %c0_6], %8 {strides = array<i32>} : memref<256x768xf32, #tpu.memory_space<vmem>>, vector<8x726xf32>,
    %10 = vector.extract_strided_slice %1 {offsets = [0, 29], sizes = [8, 726], strides = [1, 1]} : vector<8x784xf32> to vector<8x726xf32>
    %c32 = arith.constant 32 : index
    %c0_7 = arith.constant 0 : index
    %11 = vector.load %arg13[%c32, %c0_7] : memref<256x768xf32, #tpu.memory_space<vmem>>, vector<8x726xf32>
    tpu.vector_store %arg13[%c32, %c0_7], %10 {strides = array<i32>} : memref<256x768xf32, #tpu.memory_space<vmem>>, vector<8x726xf32>,
    %12 = vector.extract_strided_slice %1 {offsets = [0, 30], sizes = [8, 726], strides = [1, 1]} : vector<8x784xf32> to vector<8x726xf32>
    %c40 = arith.constant 40 : index
    %c0_8 = arith.constant 0 : index
    %13 = vector.load %arg13[%c40, %c0_8] : memref<256x768xf32, #tpu.memory_space<vmem>>, vector<8x726xf32>
    tpu.vector_store %arg13[%c40, %c0_8], %12 {strides = array<i32>} : memref<256x768xf32, #tpu.memory_space<vmem>>, vector<8x726xf32>,
    %14 = vector.extract_strided_slice %1 {offsets = [0, 56], sizes = [8, 726], strides = [1, 1]} : vector<8x784xf32> to vector<8x726xf32>
    %c48 = arith.constant 48 : index
    %c0_9 = arith.constant 0 : index
    %15 = vector.load %arg13[%c48, %c0_9] : memref<256x768xf32, #tpu.memory_space<vmem>>, vector<8x726xf32>
    tpu.vector_store %arg13[%c48, %c0_9], %14 {strides = array<i32>} : memref<256x768xf32, #tpu.memory_space<vmem>>, vector<8x726xf32>,
    %16 = vector.extract_strided_slice %1 {offsets = [0, 57], sizes = [8, 726], strides = [1, 1]} : vector<8x784xf32> to vector<8x726xf32>
    %c56 = arith.constant 56 : index
    %c0_10 = arith.constant 0 : index
    %17 = vector.load %arg13[%c56, %c0_10] : memref<256x768xf32, #tpu.memory_space<vmem>>, vector<8x726xf32>
    tpu.vector_store %arg13[%c56, %c0_10], %16 {strides = array<i32>} : memref<256x768xf32, #tpu.memory_space<vmem>>, vector<8x726xf32>,
    %18 = vector.extract_strided_slice %1 {offsets = [0, 58], sizes = [8, 726], strides = [1, 1]} : vector<8x784xf32> to vector<8x726xf32>
    %c64 = arith.constant 64 : index
    %c0_11 = arith.constant 0 : index
    %19 = vector.load %arg13[%c64, %c0_11] : memref<256x768xf32, #tpu.memory_space<vmem>>, vector<8x726xf32>
    tpu.vector_store %arg13[%c64, %c0_11], %18 {strides = array<i32>} : memref<256x768xf32, #tpu.memory_space<vmem>>, vector<8x726xf32>,
    %c0_12 = arith.constant 0 : index
    %c0_13 = arith.constant 0 : index
    %20 = vector.load %arg13[%c0_12, %c0_13] : memref<256x768xf32, #tpu.memory_space<vmem>>, vector<72x726xf32>
    %c0_14 = arith.constant 0 : index
    %c0_15 = arith.constant 0 : index
    %21 = vector.load %arg2[%c0_14, %c0_15] : memref<8x72xf32, #tpu.memory_space<vmem>>, vector<8x72xf32>
    %cst = arith.constant dense<0.000000e+00> : vector<8x726xf32>
    %22 = tpu.matmul %21, %20, %cst {dimension_numbers = #tpu.dot_dimension_numbers<[1], [0], [0], [1], [0, 0, 1, 1], [], []>} : vector<8x72xf32>, vector<72x726xf32>, vector<8x726xf32> -> vector<8x726xf32>
    %c0_16 = arith.constant 0 : index
    %c0_17 = arith.constant 0 : index
    %23 = vector.load %arg3[%c0_16, %c0_17] : memref<8x1xf32, #tpu.memory_space<vmem>>, vector<8x1xf32>
    %24 = vector.broadcast %23 : vector<8x1xf32> to vector<8x726xf32>
    %25 = arith.addf %22, %24 : vector<8x726xf32>
    %cst_18 = arith.constant 0.000000e+00 : f32
    %26 = vector.broadcast %cst_18 : f32 to vector<8x726xf32>
    %27 = arith.maximumf %25, %26 : vector<8x726xf32>
    %28 = vector.extract_strided_slice %27 {offsets = [0, 0], sizes = [8, 668], strides = [1, 1]} : vector<8x726xf32> to vector<8x668xf32>
    %c0_19 = arith.constant 0 : index
    %c0_20 = arith.constant 0 : index
    %29 = vector.load %arg13[%c0_19, %c0_20] : memref<256x768xf32, #tpu.memory_space<vmem>>, vector<8x668xf32>
    tpu.vector_store %arg13[%c0_19, %c0_20], %28 {strides = array<i32>} : memref<256x768xf32, #tpu.memory_space<vmem>>, vector<8x668xf32>,
    %30 = vector.extract_strided_slice %27 {offsets = [0, 1], sizes = [8, 668], strides = [1, 1]} : vector<8x726xf32> to vector<8x668xf32>
    %c8_21 = arith.constant 8 : index
    %c0_22 = arith.constant 0 : index
    %31 = vector.load %arg13[%c8_21, %c0_22] : memref<256x768xf32, #tpu.memory_space<vmem>>, vector<8x668xf32>
    tpu.vector_store %arg13[%c8_21, %c0_22], %30 {strides = array<i32>} : memref<256x768xf32, #tpu.memory_space<vmem>>, vector<8x668xf32>,
    %32 = vector.extract_strided_slice %27 {offsets = [0, 2], sizes = [8, 668], strides = [1, 1]} : vector<8x726xf32> to vector<8x668xf32>
    %c16_23 = arith.constant 16 : index
    %c0_24 = arith.constant 0 : index
    %33 = vector.load %arg13[%c16_23, %c0_24] : memref<256x768xf32, #tpu.memory_space<vmem>>, vector<8x668xf32>
    tpu.vector_store %arg13[%c16_23, %c0_24], %32 {strides = array<i32>} : memref<256x768xf32, #tpu.memory_space<vmem>>, vector<8x668xf32>,
    %34 = vector.extract_strided_slice %27 {offsets = [0, 28], sizes = [8, 668], strides = [1, 1]} : vector<8x726xf32> to vector<8x668xf32>
    %c24_25 = arith.constant 24 : index
    %c0_26 = arith.constant 0 : index
    %35 = vector.load %arg13[%c24_25, %c0_26] : memref<256x768xf32, #tpu.memory_space<vmem>>, vector<8x668xf32>
    tpu.vector_store %arg13[%c24_25, %c0_26], %34 {strides = array<i32>} : memref<256x768xf32, #tpu.memory_space<vmem>>, vector<8x668xf32>,
    %36 = vector.extract_strided_slice %27 {offsets = [0, 29], sizes = [8, 668], strides = [1, 1]} : vector<8x726xf32> to vector<8x668xf32>
    %c32_27 = arith.constant 32 : index
    %c0_28 = arith.constant 0 : index
    %37 = vector.load %arg13[%c32_27, %c0_28] : memref<256x768xf32, #tpu.memory_space<vmem>>, vector<8x668xf32>
    tpu.vector_store %arg13[%c32_27, %c0_28], %36 {strides = array<i32>} : memref<256x768xf32, #tpu.memory_space<vmem>>, vector<8x668xf32>,
    %38 = vector.extract_strided_slice %27 {offsets = [0, 30], sizes = [8, 668], strides = [1, 1]} : vector<8x726xf32> to vector<8x668xf32>
    %c40_29 = arith.constant 40 : index
    %c0_30 = arith.constant 0 : index
    %39 = vector.load %arg13[%c40_29, %c0_30] : memref<256x768xf32, #tpu.memory_space<vmem>>, vector<8x668xf32>
    tpu.vector_store %arg13[%c40_29, %c0_30], %38 {strides = array<i32>} : memref<256x768xf32, #tpu.memory_space<vmem>>, vector<8x668xf32>,
    %40 = vector.extract_strided_slice %27 {offsets = [0, 56], sizes = [8, 668], strides = [1, 1]} : vector<8x726xf32> to vector<8x668xf32>
    %c48_31 = arith.constant 48 : index
    %c0_32 = arith.constant 0 : index
    %41 = vector.load %arg13[%c48_31, %c0_32] : memref<256x768xf32, #tpu.memory_space<vmem>>, vector<8x668xf32>
    tpu.vector_store %arg13[%c48_31, %c0_32], %40 {strides = array<i32>} : memref<256x768xf32, #tpu.memory_space<vmem>>, vector<8x668xf32>,
    %42 = vector.extract_strided_slice %27 {offsets = [0, 57], sizes = [8, 668], strides = [1, 1]} : vector<8x726xf32> to vector<8x668xf32>
    %c56_33 = arith.constant 56 : index
    %c0_34 = arith.constant 0 : index
    %43 = vector.load %arg13[%c56_33, %c0_34] : memref<256x768xf32, #tpu.memory_space<vmem>>, vector<8x668xf32>
    tpu.vector_store %arg13[%c56_33, %c0_34], %42 {strides = array<i32>} : memref<256x768xf32, #tpu.memory_space<vmem>>, vector<8x668xf32>,
    %44 = vector.extract_strided_slice %27 {offsets = [0, 58], sizes = [8, 668], strides = [1, 1]} : vector<8x726xf32> to vector<8x668xf32>
    %c64_35 = arith.constant 64 : index
    %c0_36 = arith.constant 0 : index
    %45 = vector.load %arg13[%c64_35, %c0_36] : memref<256x768xf32, #tpu.memory_space<vmem>>, vector<8x668xf32>
    tpu.vector_store %arg13[%c64_35, %c0_36], %44 {strides = array<i32>} : memref<256x768xf32, #tpu.memory_space<vmem>>, vector<8x668xf32>,
    %c0_37 = arith.constant 0 : index
    %c0_38 = arith.constant 0 : index
    %46 = vector.load %arg13[%c0_37, %c0_38] : memref<256x768xf32, #tpu.memory_space<vmem>>, vector<72x668xf32>
    %c0_39 = arith.constant 0 : index
    %c0_40 = arith.constant 0 : index
    %47 = vector.load %arg4[%c0_39, %c0_40] : memref<8x72xf32, #tpu.memory_space<vmem>>, vector<8x72xf32>
    %cst_41 = arith.constant dense<0.000000e+00> : vector<8x668xf32>
    %48 = tpu.matmul %47, %46, %cst_41 {dimension_numbers = #tpu.dot_dimension_numbers<[1], [0], [0], [1], [0, 0, 1, 1], [], []>} : vector<8x72xf32>, vector<72x668xf32>, vector<8x668xf32> -> vector<8x668xf32>
    %c0_42 = arith.constant 0 : index
    %c0_43 = arith.constant 0 : index
    %49 = vector.load %arg5[%c0_42, %c0_43] : memref<8x1xf32, #tpu.memory_space<vmem>>, vector<8x1xf32>
    %50 = vector.broadcast %49 : vector<8x1xf32> to vector<8x668xf32>
    %51 = arith.addf %48, %50 : vector<8x668xf32>
    %cst_44 = arith.constant 0.000000e+00 : f32
    %52 = vector.broadcast %cst_44 : f32 to vector<8x668xf32>
    %53 = arith.maximumf %51, %52 : vector<8x668xf32>
    %54 = vector.extract_strided_slice %53 {offsets = [0, 0], sizes = [8, 639], strides = [1, 1]} : vector<8x668xf32> to vector<8x639xf32>
    %55 = vector.extract_strided_slice %53 {offsets = [0, 1], sizes = [8, 639], strides = [1, 1]} : vector<8x668xf32> to vector<8x639xf32>
    %56 = arith.maximumf %54, %55 : vector<8x639xf32>
    %57 = vector.extract_strided_slice %53 {offsets = [0, 28], sizes = [8, 639], strides = [1, 1]} : vector<8x668xf32> to vector<8x639xf32>
    %58 = vector.extract_strided_slice %53 {offsets = [0, 29], sizes = [8, 639], strides = [1, 1]} : vector<8x668xf32> to vector<8x639xf32>
    %59 = arith.maximumf %57, %58 : vector<8x639xf32>
    %60 = arith.maximumf %56, %59 : vector<8x639xf32>
    %61 = vector.extract_strided_slice %60 {offsets = [0, 0], sizes = [8, 523], strides = [1, 1]} : vector<8x639xf32> to vector<8x523xf32>
    %c0_45 = arith.constant 0 : index
    %c0_46 = arith.constant 0 : index
    %62 = vector.load %arg13[%c0_45, %c0_46] : memref<256x768xf32, #tpu.memory_space<vmem>>, vector<8x523xf32>
    tpu.vector_store %arg13[%c0_45, %c0_46], %61 {strides = array<i32>} : memref<256x768xf32, #tpu.memory_space<vmem>>, vector<8x523xf32>,
    %63 = vector.extract_strided_slice %60 {offsets = [0, 2], sizes = [8, 523], strides = [1, 1]} : vector<8x639xf32> to vector<8x523xf32>
    %c8_47 = arith.constant 8 : index
    %c0_48 = arith.constant 0 : index
    %64 = vector.load %arg13[%c8_47, %c0_48] : memref<256x768xf32, #tpu.memory_space<vmem>>, vector<8x523xf32>
    tpu.vector_store %arg13[%c8_47, %c0_48], %63 {strides = array<i32>} : memref<256x768xf32, #tpu.memory_space<vmem>>, vector<8x523xf32>,
    %65 = vector.extract_strided_slice %60 {offsets = [0, 4], sizes = [8, 523], strides = [1, 1]} : vector<8x639xf32> to vector<8x523xf32>
    %c16_49 = arith.constant 16 : index
    %c0_50 = arith.constant 0 : index
    %66 = vector.load %arg13[%c16_49, %c0_50] : memref<256x768xf32, #tpu.memory_space<vmem>>, vector<8x523xf32>
    tpu.vector_store %arg13[%c16_49, %c0_50], %65 {strides = array<i32>} : memref<256x768xf32, #tpu.memory_space<vmem>>, vector<8x523xf32>,
    %67 = vector.extract_strided_slice %60 {offsets = [0, 56], sizes = [8, 523], strides = [1, 1]} : vector<8x639xf32> to vector<8x523xf32>
    %c24_51 = arith.constant 24 : index
    %c0_52 = arith.constant 0 : index
    %68 = vector.load %arg13[%c24_51, %c0_52] : memref<256x768xf32, #tpu.memory_space<vmem>>, vector<8x523xf32>
    tpu.vector_store %arg13[%c24_51, %c0_52], %67 {strides = array<i32>} : memref<256x768xf32, #tpu.memory_space<vmem>>, vector<8x523xf32>,
    %69 = vector.extract_strided_slice %60 {offsets = [0, 58], sizes = [8, 523], strides = [1, 1]} : vector<8x639xf32> to vector<8x523xf32>
    %c32_53 = arith.constant 32 : index
    %c0_54 = arith.constant 0 : index
    %70 = vector.load %arg13[%c32_53, %c0_54] : memref<256x768xf32, #tpu.memory_space<vmem>>, vector<8x523xf32>
    tpu.vector_store %arg13[%c32_53, %c0_54], %69 {strides = array<i32>} : memref<256x768xf32, #tpu.memory_space<vmem>>, vector<8x523xf32>,
    %71 = vector.extract_strided_slice %60 {offsets = [0, 60], sizes = [8, 523], strides = [1, 1]} : vector<8x639xf32> to vector<8x523xf32>
    %c40_55 = arith.constant 40 : index
    %c0_56 = arith.constant 0 : index
    %72 = vector.load %arg13[%c40_55, %c0_56] : memref<256x768xf32, #tpu.memory_space<vmem>>, vector<8x523xf32>
    tpu.vector_store %arg13[%c40_55, %c0_56], %71 {strides = array<i32>} : memref<256x768xf32, #tpu.memory_space<vmem>>, vector<8x523xf32>,
    %73 = vector.extract_strided_slice %60 {offsets = [0, 112], sizes = [8, 523], strides = [1, 1]} : vector<8x639xf32> to vector<8x523xf32>
    %c48_57 = arith.constant 48 : index
    %c0_58 = arith.constant 0 : index
    %74 = vector.load %arg13[%c48_57, %c0_58] : memref<256x768xf32, #tpu.memory_space<vmem>>, vector<8x523xf32>
    tpu.vector_store %arg13[%c48_57, %c0_58], %73 {strides = array<i32>} : memref<256x768xf32, #tpu.memory_space<vmem>>, vector<8x523xf32>,
    %75 = vector.extract_strided_slice %60 {offsets = [0, 114], sizes = [8, 523], strides = [1, 1]} : vector<8x639xf32> to vector<8x523xf32>
    %c56_59 = arith.constant 56 : index
    %c0_60 = arith.constant 0 : index
    %76 = vector.load %arg13[%c56_59, %c0_60] : memref<256x768xf32, #tpu.memory_space<vmem>>, vector<8x523xf32>
    tpu.vector_store %arg13[%c56_59, %c0_60], %75 {strides = array<i32>} : memref<256x768xf32, #tpu.memory_space<vmem>>, vector<8x523xf32>,
    %77 = vector.extract_strided_slice %60 {offsets = [0, 116], sizes = [8, 523], strides = [1, 1]} : vector<8x639xf32> to vector<8x523xf32>
    %c64_61 = arith.constant 64 : index
    %c0_62 = arith.constant 0 : index
    %78 = vector.load %arg13[%c64_61, %c0_62] : memref<256x768xf32, #tpu.memory_space<vmem>>, vector<8x523xf32>
    tpu.vector_store %arg13[%c64_61, %c0_62], %77 {strides = array<i32>} : memref<256x768xf32, #tpu.memory_space<vmem>>, vector<8x523xf32>,
    %c0_63 = arith.constant 0 : index
    %c0_64 = arith.constant 0 : index
    %79 = vector.load %arg13[%c0_63, %c0_64] : memref<256x768xf32, #tpu.memory_space<vmem>>, vector<72x523xf32>
    %c0_65 = arith.constant 0 : index
    %c0_66 = arith.constant 0 : index
    %80 = vector.load %arg6[%c0_65, %c0_66] : memref<16x72xf32, #tpu.memory_space<vmem>>, vector<16x72xf32>
    %cst_67 = arith.constant dense<0.000000e+00> : vector<16x523xf32>
    %81 = tpu.matmul %80, %79, %cst_67 {dimension_numbers = #tpu.dot_dimension_numbers<[1], [0], [0], [1], [0, 0, 1, 1], [], []>} : vector<16x72xf32>, vector<72x523xf32>, vector<16x523xf32> -> vector<16x523xf32>
    %c0_68 = arith.constant 0 : index
    %c0_69 = arith.constant 0 : index
    %82 = vector.load %arg7[%c0_68, %c0_69] : memref<16x1xf32, #tpu.memory_space<vmem>>, vector<16x1xf32>
    %83 = vector.broadcast %82 : vector<16x1xf32> to vector<16x523xf32>
    %84 = arith.addf %81, %83 : vector<16x523xf32>
    %cst_70 = arith.constant 0.000000e+00 : f32
    %85 = vector.broadcast %cst_70 : f32 to vector<16x523xf32>
    %86 = arith.maximumf %84, %85 : vector<16x523xf32>
    %87 = vector.extract_strided_slice %86 {offsets = [0, 0], sizes = [16, 407], strides = [1, 1]} : vector<16x523xf32> to vector<16x407xf32>
    %c0_71 = arith.constant 0 : index
    %c0_72 = arith.constant 0 : index
    %88 = vector.load %arg13[%c0_71, %c0_72] : memref<256x768xf32, #tpu.memory_space<vmem>>, vector<16x407xf32>
    tpu.vector_store %arg13[%c0_71, %c0_72], %87 {strides = array<i32>} : memref<256x768xf32, #tpu.memory_space<vmem>>, vector<16x407xf32>,
    %89 = vector.extract_strided_slice %86 {offsets = [0, 2], sizes = [16, 407], strides = [1, 1]} : vector<16x523xf32> to vector<16x407xf32>
    %c16_73 = arith.constant 16 : index
    %c0_74 = arith.constant 0 : index
    %90 = vector.load %arg13[%c16_73, %c0_74] : memref<256x768xf32, #tpu.memory_space<vmem>>, vector<16x407xf32>
    tpu.vector_store %arg13[%c16_73, %c0_74], %89 {strides = array<i32>} : memref<256x768xf32, #tpu.memory_space<vmem>>, vector<16x407xf32>,
    %91 = vector.extract_strided_slice %86 {offsets = [0, 4], sizes = [16, 407], strides = [1, 1]} : vector<16x523xf32> to vector<16x407xf32>
    %c32_75 = arith.constant 32 : index
    %c0_76 = arith.constant 0 : index
    %92 = vector.load %arg13[%c32_75, %c0_76] : memref<256x768xf32, #tpu.memory_space<vmem>>, vector<16x407xf32>
    tpu.vector_store %arg13[%c32_75, %c0_76], %91 {strides = array<i32>} : memref<256x768xf32, #tpu.memory_space<vmem>>, vector<16x407xf32>,
    %93 = vector.extract_strided_slice %86 {offsets = [0, 56], sizes = [16, 407], strides = [1, 1]} : vector<16x523xf32> to vector<16x407xf32>
    %c48_77 = arith.constant 48 : index
    %c0_78 = arith.constant 0 : index
    %94 = vector.load %arg13[%c48_77, %c0_78] : memref<256x768xf32, #tpu.memory_space<vmem>>, vector<16x407xf32>
    tpu.vector_store %arg13[%c48_77, %c0_78], %93 {strides = array<i32>} : memref<256x768xf32, #tpu.memory_space<vmem>>, vector<16x407xf32>,
    %95 = vector.extract_strided_slice %86 {offsets = [0, 58], sizes = [16, 407], strides = [1, 1]} : vector<16x523xf32> to vector<16x407xf32>
    %c64_79 = arith.constant 64 : index
    %c0_80 = arith.constant 0 : index
    %96 = vector.load %arg13[%c64_79, %c0_80] : memref<256x768xf32, #tpu.memory_space<vmem>>, vector<16x407xf32>
    tpu.vector_store %arg13[%c64_79, %c0_80], %95 {strides = array<i32>} : memref<256x768xf32, #tpu.memory_space<vmem>>, vector<16x407xf32>,
    %97 = vector.extract_strided_slice %86 {offsets = [0, 60], sizes = [16, 407], strides = [1, 1]} : vector<16x523xf32> to vector<16x407xf32>
    %c80 = arith.constant 80 : index
    %c0_81 = arith.constant 0 : index
    %98 = vector.load %arg13[%c80, %c0_81] : memref<256x768xf32, #tpu.memory_space<vmem>>, vector<16x407xf32>
    tpu.vector_store %arg13[%c80, %c0_81], %97 {strides = array<i32>} : memref<256x768xf32, #tpu.memory_space<vmem>>, vector<16x407xf32>,
    %99 = vector.extract_strided_slice %86 {offsets = [0, 112], sizes = [16, 407], strides = [1, 1]} : vector<16x523xf32> to vector<16x407xf32>
    %c96 = arith.constant 96 : index
    %c0_82 = arith.constant 0 : index
    %100 = vector.load %arg13[%c96, %c0_82] : memref<256x768xf32, #tpu.memory_space<vmem>>, vector<16x407xf32>
    tpu.vector_store %arg13[%c96, %c0_82], %99 {strides = array<i32>} : memref<256x768xf32, #tpu.memory_space<vmem>>, vector<16x407xf32>,
    %101 = vector.extract_strided_slice %86 {offsets = [0, 114], sizes = [16, 407], strides = [1, 1]} : vector<16x523xf32> to vector<16x407xf32>
    %c112 = arith.constant 112 : index
    %c0_83 = arith.constant 0 : index
    %102 = vector.load %arg13[%c112, %c0_83] : memref<256x768xf32, #tpu.memory_space<vmem>>, vector<16x407xf32>
    tpu.vector_store %arg13[%c112, %c0_83], %101 {strides = array<i32>} : memref<256x768xf32, #tpu.memory_space<vmem>>, vector<16x407xf32>,
    %103 = vector.extract_strided_slice %86 {offsets = [0, 116], sizes = [16, 407], strides = [1, 1]} : vector<16x523xf32> to vector<16x407xf32>
    %c128 = arith.constant 128 : index
    %c0_84 = arith.constant 0 : index
    %104 = vector.load %arg13[%c128, %c0_84] : memref<256x768xf32, #tpu.memory_space<vmem>>, vector<16x407xf32>
    tpu.vector_store %arg13[%c128, %c0_84], %103 {strides = array<i32>} : memref<256x768xf32, #tpu.memory_space<vmem>>, vector<16x407xf32>,
    %c0_85 = arith.constant 0 : index
    %c0_86 = arith.constant 0 : index
    %105 = vector.load %arg13[%c0_85, %c0_86] : memref<256x768xf32, #tpu.memory_space<vmem>>, vector<144x407xf32>
    %c0_87 = arith.constant 0 : index
    %c0_88 = arith.constant 0 : index
    %106 = vector.load %arg8[%c0_87, %c0_88] : memref<16x144xf32, #tpu.memory_space<vmem>>, vector<16x144xf32>
    %cst_89 = arith.constant dense<0.000000e+00> : vector<16x407xf32>
    %107 = tpu.matmul %106, %105, %cst_89 {dimension_numbers = #tpu.dot_dimension_numbers<[1], [0], [0], [1], [0, 0, 1, 1], [], []>} : vector<16x144xf32>, vector<144x407xf32>, vector<16x407xf32> -> vector<16x407xf32>
    %c0_90 = arith.constant 0 : index
    %c0_91 = arith.constant 0 : index
    %108 = vector.load %arg9[%c0_90, %c0_91] : memref<16x1xf32, #tpu.memory_space<vmem>>, vector<16x1xf32>
    %109 = vector.broadcast %108 : vector<16x1xf32> to vector<16x407xf32>
    %110 = arith.addf %107, %109 : vector<16x407xf32>
    %cst_92 = arith.constant 0.000000e+00 : f32
    %111 = vector.broadcast %cst_92 : f32 to vector<16x407xf32>
    %112 = arith.maximumf %110, %111 : vector<16x407xf32>
    %113 = vector.extract_strided_slice %112 {offsets = [0, 0], sizes = [16, 349], strides = [1, 1]} : vector<16x407xf32> to vector<16x349xf32>
    %114 = vector.extract_strided_slice %112 {offsets = [0, 2], sizes = [16, 349], strides = [1, 1]} : vector<16x407xf32> to vector<16x349xf32>
    %115 = arith.maximumf %113, %114 : vector<16x349xf32>
    %116 = vector.extract_strided_slice %112 {offsets = [0, 56], sizes = [16, 349], strides = [1, 1]} : vector<16x407xf32> to vector<16x349xf32>
    %117 = vector.extract_strided_slice %112 {offsets = [0, 58], sizes = [16, 349], strides = [1, 1]} : vector<16x407xf32> to vector<16x349xf32>
    %118 = arith.maximumf %116, %117 : vector<16x349xf32>
    %119 = arith.maximumf %115, %118 : vector<16x349xf32>
    %120 = vector.extract_strided_slice %119 {offsets = [0, 0], sizes = [16, 1], strides = [1, 1]} : vector<16x349xf32> to vector<16x1xf32>
    %c0_93 = arith.constant 0 : index
    %c0_94 = arith.constant 0 : index
    %121 = vector.load %arg13[%c0_93, %c0_94] : memref<256x768xf32, #tpu.memory_space<vmem>>, vector<16x1xf32>
    tpu.vector_store %arg13[%c0_93, %c0_94], %120 {strides = array<i32>} : memref<256x768xf32, #tpu.memory_space<vmem>>, vector<16x1xf32>,
    %122 = vector.extract_strided_slice %119 {offsets = [0, 4], sizes = [16, 1], strides = [1, 1]} : vector<16x349xf32> to vector<16x1xf32>
    %c16_95 = arith.constant 16 : index
    %c0_96 = arith.constant 0 : index
    %123 = vector.load %arg13[%c16_95, %c0_96] : memref<256x768xf32, #tpu.memory_space<vmem>>, vector<16x1xf32>
    tpu.vector_store %arg13[%c16_95, %c0_96], %122 {strides = array<i32>} : memref<256x768xf32, #tpu.memory_space<vmem>>, vector<16x1xf32>,
    %124 = vector.extract_strided_slice %119 {offsets = [0, 8], sizes = [16, 1], strides = [1, 1]} : vector<16x349xf32> to vector<16x1xf32>
    %c32_97 = arith.constant 32 : index
    %c0_98 = arith.constant 0 : index
    %125 = vector.load %arg13[%c32_97, %c0_98] : memref<256x768xf32, #tpu.memory_space<vmem>>, vector<16x1xf32>
    tpu.vector_store %arg13[%c32_97, %c0_98], %124 {strides = array<i32>} : memref<256x768xf32, #tpu.memory_space<vmem>>, vector<16x1xf32>,
    %126 = vector.extract_strided_slice %119 {offsets = [0, 12], sizes = [16, 1], strides = [1, 1]} : vector<16x349xf32> to vector<16x1xf32>
    %c48_99 = arith.constant 48 : index
    %c0_100 = arith.constant 0 : index
    %127 = vector.load %arg13[%c48_99, %c0_100] : memref<256x768xf32, #tpu.memory_space<vmem>>, vector<16x1xf32>
    tpu.vector_store %arg13[%c48_99, %c0_100], %126 {strides = array<i32>} : memref<256x768xf32, #tpu.memory_space<vmem>>, vector<16x1xf32>,
    %128 = vector.extract_strided_slice %119 {offsets = [0, 112], sizes = [16, 1], strides = [1, 1]} : vector<16x349xf32> to vector<16x1xf32>
    %c64_101 = arith.constant 64 : index
    %c0_102 = arith.constant 0 : index
    %129 = vector.load %arg13[%c64_101, %c0_102] : memref<256x768xf32, #tpu.memory_space<vmem>>, vector<16x1xf32>
    tpu.vector_store %arg13[%c64_101, %c0_102], %128 {strides = array<i32>} : memref<256x768xf32, #tpu.memory_space<vmem>>, vector<16x1xf32>,
    %130 = vector.extract_strided_slice %119 {offsets = [0, 116], sizes = [16, 1], strides = [1, 1]} : vector<16x349xf32> to vector<16x1xf32>
    %c80_103 = arith.constant 80 : index
    %c0_104 = arith.constant 0 : index
    %131 = vector.load %arg13[%c80_103, %c0_104] : memref<256x768xf32, #tpu.memory_space<vmem>>, vector<16x1xf32>
    tpu.vector_store %arg13[%c80_103, %c0_104], %130 {strides = array<i32>} : memref<256x768xf32, #tpu.memory_space<vmem>>, vector<16x1xf32>,
    %132 = vector.extract_strided_slice %119 {offsets = [0, 120], sizes = [16, 1], strides = [1, 1]} : vector<16x349xf32> to vector<16x1xf32>
    %c96_105 = arith.constant 96 : index
    %c0_106 = arith.constant 0 : index
    %133 = vector.load %arg13[%c96_105, %c0_106] : memref<256x768xf32, #tpu.memory_space<vmem>>, vector<16x1xf32>
    tpu.vector_store %arg13[%c96_105, %c0_106], %132 {strides = array<i32>} : memref<256x768xf32, #tpu.memory_space<vmem>>, vector<16x1xf32>,
    %134 = vector.extract_strided_slice %119 {offsets = [0, 124], sizes = [16, 1], strides = [1, 1]} : vector<16x349xf32> to vector<16x1xf32>
    %c112_107 = arith.constant 112 : index
    %c0_108 = arith.constant 0 : index
    %135 = vector.load %arg13[%c112_107, %c0_108] : memref<256x768xf32, #tpu.memory_space<vmem>>, vector<16x1xf32>
    tpu.vector_store %arg13[%c112_107, %c0_108], %134 {strides = array<i32>} : memref<256x768xf32, #tpu.memory_space<vmem>>, vector<16x1xf32>,
    %136 = vector.extract_strided_slice %119 {offsets = [0, 224], sizes = [16, 1], strides = [1, 1]} : vector<16x349xf32> to vector<16x1xf32>
    %c128_109 = arith.constant 128 : index
    %c0_110 = arith.constant 0 : index
    %137 = vector.load %arg13[%c128_109, %c0_110] : memref<256x768xf32, #tpu.memory_space<vmem>>, vector<16x1xf32>
    tpu.vector_store %arg13[%c128_109, %c0_110], %136 {strides = array<i32>} : memref<256x768xf32, #tpu.memory_space<vmem>>, vector<16x1xf32>,
    %138 = vector.extract_strided_slice %119 {offsets = [0, 228], sizes = [16, 1], strides = [1, 1]} : vector<16x349xf32> to vector<16x1xf32>
    %c144 = arith.constant 144 : index
    %c0_111 = arith.constant 0 : index
    %139 = vector.load %arg13[%c144, %c0_111] : memref<256x768xf32, #tpu.memory_space<vmem>>, vector<16x1xf32>
    tpu.vector_store %arg13[%c144, %c0_111], %138 {strides = array<i32>} : memref<256x768xf32, #tpu.memory_space<vmem>>, vector<16x1xf32>,
    %140 = vector.extract_strided_slice %119 {offsets = [0, 232], sizes = [16, 1], strides = [1, 1]} : vector<16x349xf32> to vector<16x1xf32>
    %c160 = arith.constant 160 : index
    %c0_112 = arith.constant 0 : index
    %141 = vector.load %arg13[%c160, %c0_112] : memref<256x768xf32, #tpu.memory_space<vmem>>, vector<16x1xf32>
    tpu.vector_store %arg13[%c160, %c0_112], %140 {strides = array<i32>} : memref<256x768xf32, #tpu.memory_space<vmem>>, vector<16x1xf32>,
    %142 = vector.extract_strided_slice %119 {offsets = [0, 236], sizes = [16, 1], strides = [1, 1]} : vector<16x349xf32> to vector<16x1xf32>
    %c176 = arith.constant 176 : index
    %c0_113 = arith.constant 0 : index
    %143 = vector.load %arg13[%c176, %c0_113] : memref<256x768xf32, #tpu.memory_space<vmem>>, vector<16x1xf32>
    tpu.vector_store %arg13[%c176, %c0_113], %142 {strides = array<i32>} : memref<256x768xf32, #tpu.memory_space<vmem>>, vector<16x1xf32>,
    %144 = vector.extract_strided_slice %119 {offsets = [0, 336], sizes = [16, 1], strides = [1, 1]} : vector<16x349xf32> to vector<16x1xf32>
    %c192 = arith.constant 192 : index
    %c0_114 = arith.constant 0 : index
    %145 = vector.load %arg13[%c192, %c0_114] : memref<256x768xf32, #tpu.memory_space<vmem>>, vector<16x1xf32>
    tpu.vector_store %arg13[%c192, %c0_114], %144 {strides = array<i32>} : memref<256x768xf32, #tpu.memory_space<vmem>>, vector<16x1xf32>,
    %146 = vector.extract_strided_slice %119 {offsets = [0, 340], sizes = [16, 1], strides = [1, 1]} : vector<16x349xf32> to vector<16x1xf32>
    %c208 = arith.constant 208 : index
    %c0_115 = arith.constant 0 : index
    %147 = vector.load %arg13[%c208, %c0_115] : memref<256x768xf32, #tpu.memory_space<vmem>>, vector<16x1xf32>
    tpu.vector_store %arg13[%c208, %c0_115], %146 {strides = array<i32>} : memref<256x768xf32, #tpu.memory_space<vmem>>, vector<16x1xf32>,
    %148 = vector.extract_strided_slice %119 {offsets = [0, 344], sizes = [16, 1], strides = [1, 1]} : vector<16x349xf32> to vector<16x1xf32>
    %c224 = arith.constant 224 : index
    %c0_116 = arith.constant 0 : index
    %149 = vector.load %arg13[%c224, %c0_116] : memref<256x768xf32, #tpu.memory_space<vmem>>, vector<16x1xf32>
    tpu.vector_store %arg13[%c224, %c0_116], %148 {strides = array<i32>} : memref<256x768xf32, #tpu.memory_space<vmem>>, vector<16x1xf32>,
    %150 = vector.extract_strided_slice %119 {offsets = [0, 348], sizes = [16, 1], strides = [1, 1]} : vector<16x349xf32> to vector<16x1xf32>
    %c240 = arith.constant 240 : index
    %c0_117 = arith.constant 0 : index
    %151 = vector.load %arg13[%c240, %c0_117] : memref<256x768xf32, #tpu.memory_space<vmem>>, vector<16x1xf32>
    tpu.vector_store %arg13[%c240, %c0_117], %150 {strides = array<i32>} : memref<256x768xf32, #tpu.memory_space<vmem>>, vector<16x1xf32>,
    %c0_118 = arith.constant 0 : index
    %c0_119 = arith.constant 0 : index
    %152 = vector.load %arg13[%c0_118, %c0_119] : memref<256x768xf32, #tpu.memory_space<vmem>>, vector<256x1xf32>
    %c0_120 = arith.constant 0 : index
    %c0_121 = arith.constant 0 : index
    %153 = vector.load %arg10[%c0_120, %c0_121] : memref<10x256xf32, #tpu.memory_space<vmem>>, vector<10x256xf32>
    %cst_122 = arith.constant dense<0.000000e+00> : vector<10x1xf32>
    %154 = tpu.matmul %153, %152, %cst_122 {dimension_numbers = #tpu.dot_dimension_numbers<[1], [0], [0], [1], [0, 0, 1, 1], [], []>} : vector<10x256xf32>, vector<256x1xf32>, vector<10x1xf32> -> vector<10x1xf32>
    %c0_123 = arith.constant 0 : index
    %c0_124 = arith.constant 0 : index
    %155 = vector.load %arg11[%c0_123, %c0_124] : memref<10x1xf32, #tpu.memory_space<vmem>>, vector<10x1xf32>
    %156 = arith.addf %154, %155 : vector<10x1xf32>
    %c0_125 = arith.constant 0 : index
    %c0_126 = arith.constant 0 : index
    %c0_127 = arith.constant 0 : index
    %157 = vector.load %arg12[%c0_125, %c0_126, %c0_127] : memref<1x10x1xf32, #tpu.memory_space<vmem>>, vector<1x10x1xf32>
    %158 = vector.shape_cast %157 : vector<1x10x1xf32> to vector<10x1xf32>
    %159 = vector.shape_cast %156 : vector<10x1xf32> to vector<1x10x1xf32>
    tpu.vector_store %arg12[%c0_125, %c0_126, %c0_127], %159 {strides = array<i32>} : memref<1x10x1xf32, #tpu.memory_space<vmem>>, vector<1x10x1xf32>,
    return
  }
  func.func @transform_0(%arg0: i32) -> (i32, i32, i32) {
    %c0_i32 = arith.constant 0 : i32
    %c0_i32_0 = arith.constant 0 : i32
    %c0_i32_1 = arith.constant 0 : i32
    return %arg0, %c0_i32, %c0_i32_0 : i32, i32, i32
  }
  func.func @transform_1(%arg0: i32) -> (i32, i32) {
    %c0_i32 = arith.constant 0 : i32
    %c0_i32_0 = arith.constant 0 : i32
    %c0_i32_1 = arith.constant 0 : i32
    return %c0_i32, %c0_i32_0 : i32, i32
  }
  func.func @transform_2(%arg0: i32) -> (i32, i32) {
    %c0_i32 = arith.constant 0 : i32
    %c0_i32_0 = arith.constant 0 : i32
    %c0_i32_1 = arith.constant 0 : i32
    return %c0_i32, %c0_i32_0 : i32, i32
  }
  func.func @transform_3(%arg0: i32) -> (i32, i32) {
    %c0_i32 = arith.constant 0 : i32
    %c0_i32_0 = arith.constant 0 : i32
    %c0_i32_1 = arith.constant 0 : i32
    return %c0_i32, %c0_i32_0 : i32, i32
  }
  func.func @transform_4(%arg0: i32) -> (i32, i32) {
    %c0_i32 = arith.constant 0 : i32
    %c0_i32_0 = arith.constant 0 : i32
    %c0_i32_1 = arith.constant 0 : i32
    return %c0_i32, %c0_i32_0 : i32, i32
  }
  func.func @transform_5(%arg0: i32) -> (i32, i32) {
    %c0_i32 = arith.constant 0 : i32
    %c0_i32_0 = arith.constant 0 : i32
    %c0_i32_1 = arith.constant 0 : i32
    return %c0_i32, %c0_i32_0 : i32, i32
  }
  func.func @transform_6(%arg0: i32) -> (i32, i32) {
    %c0_i32 = arith.constant 0 : i32
    %c0_i32_0 = arith.constant 0 : i32
    %c0_i32_1 = arith.constant 0 : i32
    return %c0_i32, %c0_i32_0 : i32, i32
  }
  func.func @transform_7(%arg0: i32) -> (i32, i32) {
    %c0_i32 = arith.constant 0 : i32
    %c0_i32_0 = arith.constant 0 : i32
    %c0_i32_1 = arith.constant 0 : i32
    return %c0_i32, %c0_i32_0 : i32, i32
  }
  func.func @transform_8(%arg0: i32) -> (i32, i32) {
    %c0_i32 = arith.constant 0 : i32
    %c0_i32_0 = arith.constant 0 : i32
    %c0_i32_1 = arith.constant 0 : i32
    return %c0_i32, %c0_i32_0 : i32, i32
  }
  func.func @transform_9(%arg0: i32) -> (i32, i32) {
    %c0_i32 = arith.constant 0 : i32
    %c0_i32_0 = arith.constant 0 : i32
    %c0_i32_1 = arith.constant 0 : i32
    return %c0_i32, %c0_i32_0 : i32, i32
  }
  func.func @transform_10(%arg0: i32) -> (i32, i32) {
    %c0_i32 = arith.constant 0 : i32
    %c0_i32_0 = arith.constant 0 : i32
    %c0_i32_1 = arith.constant 0 : i32
    return %c0_i32, %c0_i32_0 : i32, i32
  }
  func.func @transform_11(%arg0: i32) -> (i32, i32, i32) {
    %c0_i32 = arith.constant 0 : i32
    %c0_i32_0 = arith.constant 0 : i32
    %c0_i32_1 = arith.constant 0 : i32
    return %arg0, %c0_i32, %c0_i32_0 : i32, i32, i32
  }
}

</mosaic_0001>

<llo_original>
// kernel: cnn_forward.1
$region0: #{cnn_forward.1}
  #allocation0 [shape = 'u32[]', space=smem, size = 0x4, offset = 0x4, fixed_abs, tag = 'smem constant byte address 0x4 - core index']
  #allocation1 [shape = 'u32[144,128]{1,0:T(1,128)}', space=vmem, size = 0x12000, scoped, tag = 'internal scratch']
  #allocation2 [shape = 'f32[256,768]{1,0:T(8,128)}', space=vmem, size = 0xc0000, scoped, tag = 'scratch operand']
  %s0 = inlined_call_operand.vmem [shape: f32[2,8,784], index: 0, kind: input, shape index: {}]
  %s1 = inlined_call_operand.vmem [shape: f32[8,72], index: 1, kind: input, shape index: {}]
  %s2 = inlined_call_operand.vmem [shape: f32[8,1], index: 2, kind: input, shape index: {}]
  %s3 = inlined_call_operand.vmem [shape: f32[8,72], index: 3, kind: input, shape index: {}]
  %s4 = inlined_call_operand.vmem [shape: f32[8,1], index: 4, kind: input, shape index: {}]
  %s5 = inlined_call_operand.vmem [shape: f32[16,72], index: 5, kind: input, shape index: {}]
  %s6 = inlined_call_operand.vmem [shape: f32[16,1], index: 6, kind: input, shape index: {}]
  %s7 = inlined_call_operand.vmem [shape: f32[16,144], index: 7, kind: input, shape index: {}]
  %s8 = inlined_call_operand.vmem [shape: f32[16,1], index: 8, kind: input, shape index: {}]
  %s9 = inlined_call_operand.vmem [shape: f32[10,256], index: 9, kind: input, shape index: {}]
  %s10 = inlined_call_operand.vmem [shape: f32[10,1], index: 10, kind: input, shape index: {}]
  %s11 = inlined_call_operand.vmem [shape: f32[2,10,1], index: 11, kind: output, shape index: {}]
  %s12 = sld [smem:[#allocation0]]
  $region77: #{cnn_forward.1} parent=0
    _
  %s14 = ssub.s32 1, %s12
  %s15 = scalar_select 0, %s14, %s12
  loop: start=0, step=1, limit=4
  $region2: #{cnn_forward.1} parent=0 // loop_pre_header
    _
  $region3: #{cnn_forward.1} parent=0 // loop_header
    %s17 = sphi 0, %s21
    %p18 = scmp.ge.s32.totalorder %s17, 4
    %s27 = sphi 0, %s29
    %s30 = sphi 0, %s27
    %s31 = sphi 0, %s30
    %s47 = sphi 0, %s31
    %s51 = sphi 0, %s51
    %s53 = sphi 0, %s51
    %s54 = sphi 0, %s53
    %s68 = sphi 0, %s54
    %s72 = sphi 0, %s72
    %s74 = sphi 0, %s72
    %s75 = sphi 0, %s74
    %s89 = sphi 0, %s75
    %s93 = sphi 0, %s93
    %s95 = sphi 0, %s93
    %s96 = sphi 0, %s95
    %s110 = sphi 0, %s96
    %s114 = sphi 0, %s114
    %s116 = sphi 0, %s114
    %s117 = sphi 0, %s116
    %s131 = sphi 0, %s117
    %s135 = sphi 0, %s135
    %s137 = sphi 0, %s135
    %s138 = sphi 0, %s137
    %s152 = sphi 0, %s138
    %s156 = sphi 0, %s156
    %s158 = sphi 0, %s156
    %s159 = sphi 0, %s158
    %s173 = sphi 0, %s159
    %s177 = sphi 0, %s177
    %s179 = sphi 0, %s177
    %s180 = sphi 0, %s179
    %s194 = sphi 0, %s180
    %s198 = sphi 0, %s198
    %s200 = sphi 0, %s198
    %s201 = sphi 0, %s200
    %s215 = sphi 0, %s201
    %s219 = sphi 0, %s219
    %s221 = sphi 0, %s219
    %s222 = sphi 0, %s221
    %s236 = sphi 0, %s222
    %s240 = sphi 0, %s240
    %s242 = sphi 0, %s240
    %s243 = sphi 0, %s242
    %s257 = sphi 0, %s243
    %s263 = sphi 0, %s265
    %s266 = sphi 0, %s263
    %s267 = sphi 0, %s266
    %s283 = sphi 0, %s267
  $region4: #{cnn_forward.1} parent=0 // loop_header_branch
    %20 = sbr.rel (%p18) target = $region8
  $region5: #{cnn_forward.1} parent=0 // loop_body
    %s22 = ssub.s32 %s17, 1
    %s23 = ssub.s32 %s17, 2
    %s24 = sadd.s32 %s17, 1
    %s25 = ssub.s32 %s17, %s24
    %p26 = scmp.eq.s32.totalorder %s25, 0
    %s28 = sadd.s32 %s27, 1
    %s29 = scalar_select %p26, %s27, %s28
    %p32 = pneg %p26
    %p33 = scmp.eq.s32.totalorder %s17, 1
    %p34 = por %p32, %p33
    %p35 = scmp.ne.s32.totalorder %s27, %s30
    %p36 = scmp.eq.s32.totalorder %s17, 0
    %p37 = por %p35, %p36
    %p38 = scmp.ne.s32.totalorder %s27, %s30
    %p39 = scmp.eq.s32.totalorder %s22, 1
    %p40 = por %p38, %p39
    %p41 = scmp.ne.s32.totalorder %s30, %s31
    %p42 = scmp.eq.s32.totalorder %s22, 0
    %p43 = por %p41, %p42
    %p44 = scmp.ne.s32.totalorder %s30, %s31
    %p45 = scmp.eq.s32.totalorder %s23, 1
    %p46 = por %p44, %p45
    %p48 = scmp.ne.s32.totalorder %s31, %s47
    %p49 = scmp.eq.s32.totalorder %s23, 0
    %p50 = por %p48, %p49
    %s52 = sadd.s32 %s51, 1
    %p55 = scmp.eq.s32.totalorder %s17, 1
    %p56 = scmp.ne.s32.totalorder %s51, %s53
    %p57 = scmp.eq.s32.totalorder %s17, 0
    %p58 = por %p56, %p57
    %p59 = scmp.ne.s32.totalorder %s51, %s53
    %p60 = scmp.eq.s32.totalorder %s22, 1
    %p61 = por %p59, %p60
    %p62 = scmp.ne.s32.totalorder %s53, %s54
    %p63 = scmp.eq.s32.totalorder %s22, 0
    %p64 = por %p62, %p63
    %p65 = scmp.ne.s32.totalorder %s53, %s54
    %p66 = scmp.eq.s32.totalorder %s23, 1
    %p67 = por %p65, %p66
    %p69 = scmp.ne.s32.totalorder %s54, %s68
    %p70 = scmp.eq.s32.totalorder %s23, 0
    %p71 = por %p69, %p70
    %s73 = sadd.s32 %s72, 1
    %p76 = scmp.eq.s32.totalorder %s17, 1
    %p77 = scmp.ne.s32.totalorder %s72, %s74
    %p78 = scmp.eq.s32.totalorder %s17, 0
    %p79 = por %p77, %p78
    %p80 = scmp.ne.s32.totalorder %s72, %s74
    %p81 = scmp.eq.s32.totalorder %s22, 1
    %p82 = por %p80, %p81
    %p83 = scmp.ne.s32.totalorder %s74, %s75
    %p84 = scmp.eq.s32.totalorder %s22, 0
    %p85 = por %p83, %p84
    %p86 = scmp.ne.s32.totalorder %s74, %s75
    %p87 = scmp.eq.s32.totalorder %s23, 1
    %p88 = por %p86, %p87
    %p90 = scmp.ne.s32.totalorder %s75, %s89
    %p91 = scmp.eq.s32.totalorder %s23, 0
    %p92 = por %p90, %p91
    %s94 = sadd.s32 %s93, 1
    %p97 = scmp.eq.s32.totalorder %s17, 1
    %p98 = scmp.ne.s32.totalorder %s93, %s95
    %p99 = scmp.eq.s32.totalorder %s17, 0
    %p100 = por %p98, %p99
    %p101 = scmp.ne.s32.totalorder %s93, %s95
    %p102 = scmp.eq.s32.totalorder %s22, 1
    %p103 = por %p101, %p102
    %p104 = scmp.ne.s32.totalorder %s95, %s96
    %p105 = scmp.eq.s32.totalorder %s22, 0
    %p106 = por %p104, %p105
    %p107 = scmp.ne.s32.totalorder %s95, %s96
    %p108 = scmp.eq.s32.totalorder %s23, 1
    %p109 = por %p107, %p108
    %p111 = scmp.ne.s32.totalorder %s96, %s110
    %p112 = scmp.eq.s32.totalorder %s23, 0
    %p113 = por %p111, %p112
    %s115 = sadd.s32 %s114, 1
    %p118 = scmp.eq.s32.totalorder %s17, 1
    %p119 = scmp.ne.s32.totalorder %s114, %s116
    %p120 = scmp.eq.s32.totalorder %s17, 0
    %p121 = por %p119, %p120
    %p122 = scmp.ne.s32.totalorder %s114, %s116
    %p123 = scmp.eq.s32.totalorder %s22, 1
    %p124 = por %p122, %p123
    %p125 = scmp.ne.s32.totalorder %s116, %s117
    %p126 = scmp.eq.s32.totalorder %s22, 0
    %p127 = por %p125, %p126
    %p128 = scmp.ne.s32.totalorder %s116, %s117
    %p129 = scmp.eq.s32.totalorder %s23, 1
    %p130 = por %p128, %p129
    %p132 = scmp.ne.s32.totalorder %s117, %s131
    %p133 = scmp.eq.s32.totalorder %s23, 0
    %p134 = por %p132, %p133
    %s136 = sadd.s32 %s135, 1
    %p139 = scmp.eq.s32.totalorder %s17, 1
    %p140 = scmp.ne.s32.totalorder %s135, %s137
    %p141 = scmp.eq.s32.totalorder %s17, 0
    %p142 = por %p140, %p141
    %p143 = scmp.ne.s32.totalorder %s135, %s137
    %p144 = scmp.eq.s32.totalorder %s22, 1
    %p145 = por %p143, %p144
    %p146 = scmp.ne.s32.totalorder %s137, %s138
    %p147 = scmp.eq.s32.totalorder %s22, 0
    %p148 = por %p146, %p147
    %p149 = scmp.ne.s32.totalorder %s137, %s138
    %p150 = scmp.eq.s32.totalorder %s23, 1
    %p151 = por %p149, %p150
    %p153 = scmp.ne.s32.totalorder %s138, %s152
    %p154 = scmp.eq.s32.totalorder %s23, 0
    %p155 = por %p153, %p154
    %s157 = sadd.s32 %s156, 1
    %p160 = scmp.eq.s32.totalorder %s17, 1
    %p161 = scmp.ne.s32.totalorder %s156, %s158
    %p162 = scmp.eq.s32.totalorder %s17, 0
    %p163 = por %p161, %p162
    %p164 = scmp.ne.s32.totalorder %s156, %s158
    %p165 = scmp.eq.s32.totalorder %s22, 1
    %p166 = por %p164, %p165
    %p167 = scmp.ne.s32.totalorder %s158, %s159
    %p168 = scmp.eq.s32.totalorder %s22, 0
    %p169 = por %p167, %p168
    %p170 = scmp.ne.s32.totalorder %s158, %s159
    %p171 = scmp.eq.s32.totalorder %s23, 1
    %p172 = por %p170, %p171
    %p174 = scmp.ne.s32.totalorder %s159, %s173
    %p175 = scmp.eq.s32.totalorder %s23, 0
    %p176 = por %p174, %p175
    %s178 = sadd.s32 %s177, 1
    %p181 = scmp.eq.s32.totalorder %s17, 1
    %p182 = scmp.ne.s32.totalorder %s177, %s179
    %p183 = scmp.eq.s32.totalorder %s17, 0
    %p184 = por %p182, %p183
    %p185 = scmp.ne.s32.totalorder %s177, %s179
    %p186 = scmp.eq.s32.totalorder %s22, 1
    %p187 = por %p185, %p186
    %p188 = scmp.ne.s32.totalorder %s179, %s180
    %p189 = scmp.eq.s32.totalorder %s22, 0
    %p190 = por %p188, %p189
    %p191 = scmp.ne.s32.totalorder %s179, %s180
    %p192 = scmp.eq.s32.totalorder %s23, 1
    %p193 = por %p191, %p192
    %p195 = scmp.ne.s32.totalorder %s180, %s194
    %p196 = scmp.eq.s32.totalorder %s23, 0
    %p197 = por %p195, %p196
    %s199 = sadd.s32 %s198, 1
    %p202 = scmp.eq.s32.totalorder %s17, 1
    %p203 = scmp.ne.s32.totalorder %s198, %s200
    %p204 = scmp.eq.s32.totalorder %s17, 0
    %p205 = por %p203, %p204
    %p206 = scmp.ne.s32.totalorder %s198, %s200
    %p207 = scmp.eq.s32.totalorder %s22, 1
    %p208 = por %p206, %p207
    %p209 = scmp.ne.s32.totalorder %s200, %s201
    %p210 = scmp.eq.s32.totalorder %s22, 0
    %p211 = por %p209, %p210
    %p212 = scmp.ne.s32.totalorder %s200, %s201
    %p213 = scmp.eq.s32.totalorder %s23, 1
    %p214 = por %p212, %p213
    %p216 = scmp.ne.s32.totalorder %s201, %s215
    %p217 = scmp.eq.s32.totalorder %s23, 0
    %p218 = por %p216, %p217
    %s220 = sadd.s32 %s219, 1
    %p223 = scmp.eq.s32.totalorder %s17, 1
    %p224 = scmp.ne.s32.totalorder %s219, %s221
    %p225 = scmp.eq.s32.totalorder %s17, 0
    %p226 = por %p224, %p225
    %p227 = scmp.ne.s32.totalorder %s219, %s221
    %p228 = scmp.eq.s32.totalorder %s22, 1
    %p229 = por %p227, %p228
    %p230 = scmp.ne.s32.totalorder %s221, %s222
    %p231 = scmp.eq.s32.totalorder %s22, 0
    %p232 = por %p230, %p231
    %p233 = scmp.ne.s32.totalorder %s221, %s222
    %p234 = scmp.eq.s32.totalorder %s23, 1
    %p235 = por %p233, %p234
    %p237 = scmp.ne.s32.totalorder %s222, %s236
    %p238 = scmp.eq.s32.totalorder %s23, 0
    %p239 = por %p237, %p238
    %s241 = sadd.s32 %s240, 1
    %p244 = scmp.eq.s32.totalorder %s17, 1
    %p245 = scmp.ne.s32.totalorder %s240, %s242
    %p246 = scmp.eq.s32.totalorder %s17, 0
    %p247 = por %p245, %p246
    %p248 = scmp.ne.s32.totalorder %s240, %s242
    %p249 = scmp.eq.s32.totalorder %s22, 1
    %p250 = por %p248, %p249
    %p251 = scmp.ne.s32.totalorder %s242, %s243
    %p252 = scmp.eq.s32.totalorder %s22, 0
    %p253 = por %p251, %p252
    %p254 = scmp.ne.s32.totalorder %s242, %s243
    %p255 = scmp.eq.s32.totalorder %s23, 1
    %p256 = por %p254, %p255
    %p258 = scmp.ne.s32.totalorder %s243, %s257
    %p259 = scmp.eq.s32.totalorder %s23, 0
    %p260 = por %p258, %p259
    %s261 = ssub.s32 %s17, %s24
    %p262 = scmp.eq.s32.totalorder %s261, 0
    %s264 = sadd.s32 %s263, 1
    %s265 = scalar_select %p262, %s263, %s264
    %p268 = pneg %p262
    %p269 = scmp.eq.s32.totalorder %s17, 1
    %p270 = por %p268, %p269
    %p271 = scmp.ne.s32.totalorder %s263, %s266
    %p272 = scmp.eq.s32.totalorder %s17, 0
    %p273 = por %p271, %p272
    %p274 = scmp.ne.s32.totalorder %s263, %s266
    %p275 = scmp.eq.s32.totalorder %s22, 1
    %p276 = por %p274, %p275
    %p277 = scmp.ne.s32.totalorder %s266, %s267
    %p278 = scmp.eq.s32.totalorder %s22, 0
    %p279 = por %p277, %p278
    %p280 = scmp.ne.s32.totalorder %s266, %s267
    %p281 = scmp.eq.s32.totalorder %s23, 1
    %p282 = por %p280, %p281
    %p284 = scmp.ne.s32.totalorder %s267, %s283
    %p285 = scmp.eq.s32.totalorder %s23, 0
    %p286 = por %p284, %p285
    %p287 = scmp.le.s32.totalorder 1, %s17
    %p288 = scmp.lt.s32.totalorder %s17, 3
    %p289 = pnand %p287, %p288
    %p290 = pneg %p289
    // Predicated region
    $region9: #{cnn_forward.1} parent=5 // pred_check
      _
    $region10: #{cnn_forward.1} parent=5 // pred_check_branch
      %292 = sbr.rel (%p289) target = $region12
    $region11: #{cnn_forward.1} parent=5 // pred_region
      %s293 = ssub.s32 %s17, 1
      // Predicated region
      $region13: #{cnn_forward.1} parent=11 // pred_check
        %p294 = pneg %p64
      $region14: #{cnn_forward.1} parent=11 // pred_check_branch
        %296 = sbr.rel (%p294) target = $region16
      $region15: #{cnn_forward.1} parent=11 // pred_region
        _
      $region16: #{cnn_forward.1} parent=11 // pred_fallthru
        _
      // Predicated region
      $region17: #{cnn_forward.1} parent=11 // pred_check
        %p297 = pneg %p85
      $region18: #{cnn_forward.1} parent=11 // pred_check_branch
        %299 = sbr.rel (%p297) target = $region20
      $region19: #{cnn_forward.1} parent=11 // pred_region
        _
      $region20: #{cnn_forward.1} parent=11 // pred_fallthru
        _
      // Predicated region
      $region21: #{cnn_forward.1} parent=11 // pred_check
        %p300 = pneg %p106
      $region22: #{cnn_forward.1} parent=11 // pred_check_branch
        %302 = sbr.rel (%p300) target = $region24
      $region23: #{cnn_forward.1} parent=11 // pred_region
        _
      $region24: #{cnn_forward.1} parent=11 // pred_fallthru
        _
      // Predicated region
      $region25: #{cnn_forward.1} parent=11 // pred_check
        %p303 = pneg %p127
      $region26: #{cnn_forward.1} parent=11 // pred_check_branch
        %305 = sbr.rel (%p303) target = $region28
      $region27: #{cnn_forward.1} parent=11 // pred_region
        _
      $region28: #{cnn_forward.1} parent=11 // pred_fallthru
        _
      // Predicated region
      $region29: #{cnn_forward.1} parent=11 // pred_check
        %p306 = pneg %p148
      $region30: #{cnn_forward.1} parent=11 // pred_check_branch
        %308 = sbr.rel (%p306) target = $region32
      $region31: #{cnn_forward.1} parent=11 // pred_region
        _
      $region32: #{cnn_forward.1} parent=11 // pred_fallthru
        _
      // Predicated region
      $region33: #{cnn_forward.1} parent=11 // pred_check
        %p309 = pneg %p169
      $region34: #{cnn_forward.1} parent=11 // pred_check_branch
        %311 = sbr.rel (%p309) target = $region36
      $region35: #{cnn_forward.1} parent=11 // pred_region
        _
      $region36: #{cnn_forward.1} parent=11 // pred_fallthru
        _
      // Predicated region
      $region37: #{cnn_forward.1} parent=11 // pred_check
        %p312 = pneg %p190
      $region38: #{cnn_forward.1} parent=11 // pred_check_branch
        %314 = sbr.rel (%p312) target = $region40
      $region39: #{cnn_forward.1} parent=11 // pred_region
        _
      $region40: #{cnn_forward.1} parent=11 // pred_fallthru
        _
      // Predicated region
      $region41: #{cnn_forward.1} parent=11 // pred_check
        %p315 = pneg %p211
      $region42: #{cnn_forward.1} parent=11 // pred_check_branch
        %317 = sbr.rel (%p315) target = $region44
      $region43: #{cnn_forward.1} parent=11 // pred_region
        _
      $region44: #{cnn_forward.1} parent=11 // pred_fallthru
        _
      // Predicated region
      $region45: #{cnn_forward.1} parent=11 // pred_check
        %p318 = pneg %p232
      $region46: #{cnn_forward.1} parent=11 // pred_check_branch
        %320 = sbr.rel (%p318) target = $region48
      $region47: #{cnn_forward.1} parent=11 // pred_region
        _
      $region48: #{cnn_forward.1} parent=11 // pred_fallthru
        _
      // Predicated region
      $region49: #{cnn_forward.1} parent=11 // pred_check
        %p321 = pneg %p253
      $region50: #{cnn_forward.1} parent=11 // pred_check_branch
        %323 = sbr.rel (%p321) target = $region52
      $region51: #{cnn_forward.1} parent=11 // pred_region
        _
      $region52: #{cnn_forward.1} parent=11 // pred_fallthru
        _
    $region12: #{cnn_forward.1} parent=5 // pred_fallthru
      _
    %p324 = scmp.lt.s32.totalorder %s17, 2
    // Predicated region
    $region53: #{cnn_forward.1} parent=5 // pred_check
      %p325 = pneg %p324
    $region54: #{cnn_forward.1} parent=5 // pred_check_branch
      %327 = sbr.rel (%p325) target = $region56
    $region55: #{cnn_forward.1} parent=5 // pred_region
      // Predicated region
      $region57: #{cnn_forward.1} parent=55 // pred_check
        %p328 = pneg %p37
      $region58: #{cnn_forward.1} parent=55 // pred_check_branch
        %330 = sbr.rel (%p328) target = $region60
      $region59: #{cnn_forward.1} parent=55 // pred_region
        %p331 = scmp.lt.s32.totalorder %s17, 1
        %s332 = scalar_select %p331, %s17, 1
        %s333 = smul.addr %s332, 7
        %s334 = smul.addr %s333, 8
        %s335 = scalar_lea.vmem %s0, %s334
      $region60: #{cnn_forward.1} parent=55 // pred_fallthru
        _
    $region56: #{cnn_forward.1} parent=5 // pred_fallthru
      _
    %p336 = scmp.le.s32.totalorder 1, %s17
    %p337 = scmp.lt.s32.totalorder %s17, 3
    %p338 = pnand %p336, %p337
    %p339 = pneg %p338
    // Predicated region
    $region61: #{cnn_forward.1} parent=5 // pred_check
      _
    $region62: #{cnn_forward.1} parent=5 // pred_check_branch
      %341 = sbr.rel (%p338) target = $region64
    $region63: #{cnn_forward.1} parent=5 // pred_region
      %s342 = ssub.s32 %s17, 1
      %p343 = scmp.lt.s32.totalorder %s22, 1
      %s344 = scalar_select %p343, %s22, 1
      %s345 = smul.addr %s344, 7
      %s346 = smul.addr %s345, 8
      %s347 = scalar_lea.vmem %s0, %s346
      %p348 = pneg %p43
      %p349 = pneg %p40
      %p350 = pneg %p64
      %p351 = pneg %p61
      %p352 = pneg %p85
      %p353 = pneg %p82
      %p354 = pneg %p106
      %p355 = pneg %p103
      %p356 = pneg %p127
      %p357 = pneg %p124
      %p358 = pneg %p148
      %p359 = pneg %p145
      %p360 = pneg %p169
      %p361 = pneg %p166
      %p362 = pneg %p190
      %p363 = pneg %p187
      %p364 = pneg %p211
      %p365 = pneg %p208
      %p366 = pneg %p232
      %p367 = pneg %p229
      %p368 = pneg %p253
      %p369 = pneg %p250
      %p370 = pneg %p279
      %p371 = pneg %p276
      %p372 = scmp.lt.s32.totalorder %s22, 1
      %s373 = scalar_select %p372, %s22, 1
      %s374 = smul.addr %s373, 2
      %s375 = smul.addr %s374, 8
      %s376 = scalar_lea.vmem %s11, %s375
      %p377 = scmp.lt.s32.totalorder %s22, 1
      %s378 = scalar_select %p377, %s22, 1
      %s379 = smul.addr %s378, 7
      %s380 = smul.addr %s379, 8
      %s381 = scalar_lea.vmem %s0, %s380
      %p382 = scmp.lt.s32.totalorder %s22, 1
      %s383 = scalar_select %p382, %s22, 1
      %s384 = smul.addr %s383, 2
      %s385 = smul.addr %s384, 8
      %s386 = scalar_lea.vmem %s11, %s385
      %v387 = vld [vmem:[%s381] sm:$0xff]
      %v388 = vld [vmem:[%s381 + $0x8] sm:$0xff]
      %v389 = vld [vmem:[%s381 + $0x10] sm:$0xff]
      %v390 = vld [vmem:[%s381 + $0x18] sm:$0xff]
      %v391 = vld [vmem:[%s381 + $0x20] sm:$0xff]
      %v392 = vld [vmem:[%s381 + $0x28] sm:$0xff]
      %v393 = vld [vmem:[%s381 + $0x30] sm:$0xff]
      %394 = vst [vmem:[#allocation2] sm:$0xff] %v387
      %395 = vst [vmem:[#allocation2 + $0x8] sm:$0xff] %v388
      %396 = vst [vmem:[#allocation2 + $0x10] sm:$0xff] %v389
      %397 = vst [vmem:[#allocation2 + $0x18] sm:$0xff] %v390
      %398 = vst [vmem:[#allocation2 + $0x20] sm:$0xff] %v391
      %vm399 = vcmask 703488
      %400 = vst.msk [vmem:[#allocation2 + $0x28] sm:$0xff] %vm399, %v392
      %407 = vrot.lane.b32.xlu0 %v387, 127
      %v408 = vpop.permute.xlu0 %407
      %409 = vrot.lane.b32.xlu0 %v388, 127
      %v410 = vpop.permute.xlu0 %409
      %411 = vrot.lane.b32.xlu0 %v389, 127
      %v412 = vpop.permute.xlu0 %411
      %413 = vrot.lane.b32.xlu0 %v390, 127
      %v414 = vpop.permute.xlu0 %413
      %415 = vrot.lane.b32.xlu0 %v391, 127
      %v416 = vpop.permute.xlu0 %415
      %417 = vrot.lane.b32.xlu0 %v392, 127
      %v418 = vpop.permute.xlu0 %417
      %vm419 = vcmask 1039360
      %v420 = vsel %vm419, %v408, %v410
      %v421 = vsel %vm419, %v410, %v412
      %v422 = vsel %vm419, %v412, %v414
      %v423 = vsel %vm419, %v414, %v416
      %v424 = vsel %vm419, %v416, %v418
      %431 = vst [vmem:[#allocation2 + $0x30] sm:$0xff] %v420
      %432 = vst [vmem:[#allocation2 + $0x38] sm:$0xff] %v421
      %433 = vst [vmem:[#allocation2 + $0x40] sm:$0xff] %v422
      %434 = vst [vmem:[#allocation2 + $0x48] sm:$0xff] %v423
      %435 = vst [vmem:[#allocation2 + $0x50] sm:$0xff] %v424
      %436 = vst.msk [vmem:[#allocation2 + $0x58] sm:$0xff] %vm399, %v418
      %437 = vrot.lane.b32.xlu0 %v387, 126
      %v438 = vpop.permute.xlu0 %437
      %439 = vrot.lane.b32.xlu0 %v388, 126
      %v440 = vpop.permute.xlu0 %439
      %441 = vrot.lane.b32.xlu0 %v389, 126
      %v442 = vpop.permute.xlu0 %441
      %443 = vrot.lane.b32.xlu0 %v390, 126
      %v444 = vpop.permute.xlu0 %443
      %445 = vrot.lane.b32.xlu0 %v391, 126
      %v446 = vpop.permute.xlu0 %445
      %447 = vrot.lane.b32.xlu0 %v392, 126
      %v448 = vpop.permute.xlu0 %447
      %vm449 = vcmask 1031168
      %v450 = vsel %vm449, %v438, %v440
      %v451 = vsel %vm449, %v440, %v442
      %v452 = vsel %vm449, %v442, %v444
      %v453 = vsel %vm449, %v444, %v446
      %v454 = vsel %vm449, %v446, %v448
      %461 = vst [vmem:[#allocation2 + $0x60] sm:$0xff] %v450
      %462 = vst [vmem:[#allocation2 + $0x68] sm:$0xff] %v451
      %463 = vst [vmem:[#allocation2 + $0x70] sm:$0xff] %v452
      %464 = vst [vmem:[#allocation2 + $0x78] sm:$0xff] %v453
      %465 = vst [vmem:[#allocation2 + $0x80] sm:$0xff] %v454
      %466 = vst.msk [vmem:[#allocation2 + $0x88] sm:$0xff] %vm399, %v448
      %467 = vrot.lane.b32.xlu0 %v387, 100
      %v468 = vpop.permute.xlu0 %467
      %469 = vrot.lane.b32.xlu0 %v388, 100
      %v470 = vpop.permute.xlu0 %469
      %471 = vrot.lane.b32.xlu0 %v389, 100
      %v472 = vpop.permute.xlu0 %471
      %473 = vrot.lane.b32.xlu0 %v390, 100
      %v474 = vpop.permute.xlu0 %473
      %475 = vrot.lane.b32.xlu0 %v391, 100
      %v476 = vpop.permute.xlu0 %475
      %477 = vrot.lane.b32.xlu0 %v392, 100
      %v478 = vpop.permute.xlu0 %477
      %vm479 = vcmask 818176
      %v480 = vsel %vm479, %v468, %v470
      %v481 = vsel %vm479, %v470, %v472
      %v482 = vsel %vm479, %v472, %v474
      %v483 = vsel %vm479, %v474, %v476
      %v484 = vsel %vm479, %v476, %v478
      %491 = vst [vmem:[#allocation2 + $0x90] sm:$0xff] %v480
      %492 = vst [vmem:[#allocation2 + $0x98] sm:$0xff] %v481
      %493 = vst [vmem:[#allocation2 + $0xa0] sm:$0xff] %v482
      %494 = vst [vmem:[#allocation2 + $0xa8] sm:$0xff] %v483
      %495 = vst [vmem:[#allocation2 + $0xb0] sm:$0xff] %v484
      %496 = vst.msk [vmem:[#allocation2 + $0xb8] sm:$0xff] %vm399, %v478
      %497 = vrot.lane.b32.xlu0 %v387, 99
      %v498 = vpop.permute.xlu0 %497
      %499 = vrot.lane.b32.xlu0 %v388, 99
      %v500 = vpop.permute.xlu0 %499
      %501 = vrot.lane.b32.xlu0 %v389, 99
      %v502 = vpop.permute.xlu0 %501
      %503 = vrot.lane.b32.xlu0 %v390, 99
      %v504 = vpop.permute.xlu0 %503
      %505 = vrot.lane.b32.xlu0 %v391, 99
      %v506 = vpop.permute.xlu0 %505
      %507 = vrot.lane.b32.xlu0 %v392, 99
      %v508 = vpop.permute.xlu0 %507
      %vm509 = vcmask 809984
      %v510 = vsel %vm509, %v498, %v500
      %v511 = vsel %vm509, %v500, %v502
      %v512 = vsel %vm509, %v502, %v504
      %v513 = vsel %vm509, %v504, %v506
      %v514 = vsel %vm509, %v506, %v508
      %521 = vst [vmem:[#allocation2 + $0xc0] sm:$0xff] %v510
      %522 = vst [vmem:[#allocation2 + $0xc8] sm:$0xff] %v511
      %523 = vst [vmem:[#allocation2 + $0xd0] sm:$0xff] %v512
      %524 = vst [vmem:[#allocation2 + $0xd8] sm:$0xff] %v513
      %525 = vst [vmem:[#allocation2 + $0xe0] sm:$0xff] %v514
      %526 = vst.msk [vmem:[#allocation2 + $0xe8] sm:$0xff] %vm399, %v508
      %527 = vrot.lane.b32.xlu0 %v387, 98
      %v528 = vpop.permute.xlu0 %527
      %529 = vrot.lane.b32.xlu0 %v388, 98
      %v530 = vpop.permute.xlu0 %529
      %531 = vrot.lane.b32.xlu0 %v389, 98
      %v532 = vpop.permute.xlu0 %531
      %533 = vrot.lane.b32.xlu0 %v390, 98
      %v534 = vpop.permute.xlu0 %533
      %535 = vrot.lane.b32.xlu0 %v391, 98
      %v536 = vpop.permute.xlu0 %535
      %537 = vrot.lane.b32.xlu0 %v392, 98
      %v538 = vpop.permute.xlu0 %537
      %vm539 = vcmask 801792
      %v540 = vsel %vm539, %v528, %v530
      %v541 = vsel %vm539, %v530, %v532
      %v542 = vsel %vm539, %v532, %v534
      %v543 = vsel %vm539, %v534, %v536
      %v544 = vsel %vm539, %v536, %v538
      %551 = vst [vmem:[#allocation2 + $0xf0] sm:$0xff] %v540
      %552 = vst [vmem:[#allocation2 + $0xf8] sm:$0xff] %v541
      %553 = vst [vmem:[#allocation2 + $0x100] sm:$0xff] %v542
      %554 = vst [vmem:[#allocation2 + $0x108] sm:$0xff] %v543
      %555 = vst [vmem:[#allocation2 + $0x110] sm:$0xff] %v544
      %556 = vst.msk [vmem:[#allocation2 + $0x118] sm:$0xff] %vm399, %v538
      %558 = vrot.lane.b32.xlu0 %v387, 72
      %v559 = vpop.permute.xlu0 %558
      %560 = vrot.lane.b32.xlu0 %v388, 72
      %v561 = vpop.permute.xlu0 %560
      %562 = vrot.lane.b32.xlu0 %v389, 72
      %v563 = vpop.permute.xlu0 %562
      %564 = vrot.lane.b32.xlu0 %v390, 72
      %v565 = vpop.permute.xlu0 %564
      %566 = vrot.lane.b32.xlu0 %v391, 72
      %v567 = vpop.permute.xlu0 %566
      %568 = vrot.lane.b32.xlu0 %v392, 72
      %v569 = vpop.permute.xlu0 %568
      %570 = vrot.lane.b32.xlu0 %v393, 72
      %v571 = vpop.permute.xlu0 %570
      %vm572 = vcmask 588800
      %v573 = vsel %vm572, %v559, %v561
      %v574 = vsel %vm572, %v561, %v563
      %v575 = vsel %vm572, %v563, %v565
      %v576 = vsel %vm572, %v565, %v567
      %v577 = vsel %vm572, %v567, %v569
      %v578 = vsel %vm572, %v569, %v571
      %585 = vst [vmem:[#allocation2 + $0x120] sm:$0xff] %v573
      %586 = vst [vmem:[#allocation2 + $0x128] sm:$0xff] %v574
      %587 = vst [vmem:[#allocation2 + $0x130] sm:$0xff] %v575
      %588 = vst [vmem:[#allocation2 + $0x138] sm:$0xff] %v576
      %589 = vst [vmem:[#allocation2 + $0x140] sm:$0xff] %v577
      %590 = vst.msk [vmem:[#allocation2 + $0x148] sm:$0xff] %vm399, %v578
      %591 = vrot.lane.b32.xlu0 %v387, 71
      %v592 = vpop.permute.xlu0 %591
      %593 = vrot.lane.b32.xlu0 %v388, 71
      %v594 = vpop.permute.xlu0 %593
      %595 = vrot.lane.b32.xlu0 %v389, 71
      %v596 = vpop.permute.xlu0 %595
      %597 = vrot.lane.b32.xlu0 %v390, 71
      %v598 = vpop.permute.xlu0 %597
      %599 = vrot.lane.b32.xlu0 %v391, 71
      %v600 = vpop.permute.xlu0 %599
      %601 = vrot.lane.b32.xlu0 %v392, 71
      %v602 = vpop.permute.xlu0 %601
      %603 = vrot.lane.b32.xlu0 %v393, 71
      %v604 = vpop.permute.xlu0 %603
      %vm605 = vcmask 580608
      %v606 = vsel %vm605, %v592, %v594
      %v607 = vsel %vm605, %v594, %v596
      %v608 = vsel %vm605, %v596, %v598
      %v609 = vsel %vm605, %v598, %v600
      %v610 = vsel %vm605, %v600, %v602
      %v611 = vsel %vm605, %v602, %v604
      %618 = vst [vmem:[#allocation2 + $0x150] sm:$0xff] %v606
      %619 = vst [vmem:[#allocation2 + $0x158] sm:$0xff] %v607
      %620 = vst [vmem:[#allocation2 + $0x160] sm:$0xff] %v608
      %621 = vst [vmem:[#allocation2 + $0x168] sm:$0xff] %v609
      %622 = vst [vmem:[#allocation2 + $0x170] sm:$0xff] %v610
      %623 = vst.msk [vmem:[#allocation2 + $0x178] sm:$0xff] %vm399, %v611
      %624 = vrot.lane.b32.xlu0 %v387, 70
      %v625 = vpop.permute.xlu0 %624
      %626 = vrot.lane.b32.xlu0 %v388, 70
      %v627 = vpop.permute.xlu0 %626
      %628 = vrot.lane.b32.xlu0 %v389, 70
      %v629 = vpop.permute.xlu0 %628
      %630 = vrot.lane.b32.xlu0 %v390, 70
      %v631 = vpop.permute.xlu0 %630
      %632 = vrot.lane.b32.xlu0 %v391, 70
      %v633 = vpop.permute.xlu0 %632
      %634 = vrot.lane.b32.xlu0 %v392, 70
      %v635 = vpop.permute.xlu0 %634
      %636 = vrot.lane.b32.xlu0 %v393, 70
      %v637 = vpop.permute.xlu0 %636
      %vm638 = vcmask 572416
      %v639 = vsel %vm638, %v625, %v627
      %v640 = vsel %vm638, %v627, %v629
      %v641 = vsel %vm638, %v629, %v631
      %v642 = vsel %vm638, %v631, %v633
      %v643 = vsel %vm638, %v633, %v635
      %v644 = vsel %vm638, %v635, %v637
      %651 = vst [vmem:[#allocation2 + $0x180] sm:$0xff] %v639
      %652 = vst [vmem:[#allocation2 + $0x188] sm:$0xff] %v640
      %653 = vst [vmem:[#allocation2 + $0x190] sm:$0xff] %v641
      %654 = vst [vmem:[#allocation2 + $0x198] sm:$0xff] %v642
      %655 = vst [vmem:[#allocation2 + $0x1a0] sm:$0xff] %v643
      %656 = vst.msk [vmem:[#allocation2 + $0x1a8] sm:$0xff] %vm399, %v644
      %v657 = vld [vmem:[#allocation2] sm:$0xff]
      %v658 = vld [vmem:[#allocation2 + $0x8] sm:$0xff]
      %v659 = vld [vmem:[#allocation2 + $0x10] sm:$0xff]
      %v660 = vld [vmem:[#allocation2 + $0x18] sm:$0xff]
      %v661 = vld [vmem:[#allocation2 + $0x20] sm:$0xff]
      %v662 = vld [vmem:[#allocation2 + $0x28] sm:$0xff]
      %v663 = vld [vmem:[#allocation2 + $0x30] sm:$0xff]
      %v664 = vld [vmem:[#allocation2 + $0x38] sm:$0xff]
      %v665 = vld [vmem:[#allocation2 + $0x40] sm:$0xff]
      %v666 = vld [vmem:[#allocation2 + $0x48] sm:$0xff]
      %v667 = vld [vmem:[#allocation2 + $0x50] sm:$0xff]
      %v668 = vld [vmem:[#allocation2 + $0x58] sm:$0xff]
      %v669 = vld [vmem:[#allocation2 + $0x60] sm:$0xff]
      %v670 = vld [vmem:[#allocation2 + $0x68] sm:$0xff]
      %v671 = vld [vmem:[#allocation2 + $0x70] sm:$0xff]
      %v672 = vld [vmem:[#allocation2 + $0x78] sm:$0xff]
      %v673 = vld [vmem:[#allocation2 + $0x80] sm:$0xff]
      %v674 = vld [vmem:[#allocation2 + $0x88] sm:$0xff]
      %v675 = vld [vmem:[#allocation2 + $0x90] sm:$0xff]
      %v676 = vld [vmem:[#allocation2 + $0x98] sm:$0xff]
      %v677 = vld [vmem:[#allocation2 + $0xa0] sm:$0xff]
      %v678 = vld [vmem:[#allocation2 + $0xa8] sm:$0xff]
      %v679 = vld [vmem:[#allocation2 + $0xb0] sm:$0xff]
      %v680 = vld [vmem:[#allocation2 + $0xb8] sm:$0xff]
      %v681 = vld [vmem:[#allocation2 + $0xc0] sm:$0xff]
      %v682 = vld [vmem:[#allocation2 + $0xc8] sm:$0xff]
      %v683 = vld [vmem:[#allocation2 + $0xd0] sm:$0xff]
      %v684 = vld [vmem:[#allocation2 + $0xd8] sm:$0xff]
      %v685 = vld [vmem:[#allocation2 + $0xe0] sm:$0xff]
      %v686 = vld [vmem:[#allocation2 + $0xe8] sm:$0xff]
      %v687 = vld [vmem:[#allocation2 + $0xf0] sm:$0xff]
      %v688 = vld [vmem:[#allocation2 + $0xf8] sm:$0xff]
      %v689 = vld [vmem:[#allocation2 + $0x100] sm:$0xff]
      %v690 = vld [vmem:[#allocation2 + $0x108] sm:$0xff]
      %v691 = vld [vmem:[#allocation2 + $0x110] sm:$0xff]
      %v692 = vld [vmem:[#allocation2 + $0x118] sm:$0xff]
      %v693 = vld [vmem:[#allocation2 + $0x120] sm:$0xff]
      %v694 = vld [vmem:[#allocation2 + $0x128] sm:$0xff]
      %v695 = vld [vmem:[#allocation2 + $0x130] sm:$0xff]
      %v696 = vld [vmem:[#allocation2 + $0x138] sm:$0xff]
      %v697 = vld [vmem:[#allocation2 + $0x140] sm:$0xff]
      %v698 = vld [vmem:[#allocation2 + $0x148] sm:$0xff]
      %v699 = vld [vmem:[#allocation2 + $0x150] sm:$0xff]
      %v700 = vld [vmem:[#allocation2 + $0x158] sm:$0xff]
      %v701 = vld [vmem:[#allocation2 + $0x160] sm:$0xff]
      %v702 = vld [vmem:[#allocation2 + $0x168] sm:$0xff]
      %v703 = vld [vmem:[#allocation2 + $0x170] sm:$0xff]
      %v704 = vld [vmem:[#allocation2 + $0x178] sm:$0xff]
      %v705 = vld [vmem:[#allocation2 + $0x180] sm:$0xff]
      %v706 = vld [vmem:[#allocation2 + $0x188] sm:$0xff]
      %v707 = vld [vmem:[#allocation2 + $0x190] sm:$0xff]
      %v708 = vld [vmem:[#allocation2 + $0x198] sm:$0xff]
      %v709 = vld [vmem:[#allocation2 + $0x1a0] sm:$0xff]
      %v710 = vld [vmem:[#allocation2 + $0x1a8] sm:$0xff]
      %v711 = vld [vmem:[%s1] sm:$0xff]
      %v712 = vld [vmem:[%s2] sm:$0xff]
      %714 = vset.pattern.permute.xlu0 0
      %715 = vperm.xlu0 %714, %v712
      %v716 = vpop.permute.xlu0 %715
      %v719 = vsel %vm572, %v711, 0
      %721 = vmatprep.subr.mxu0 %v658
      %722 = vmatpush1.msra.mxu0 %v657
      %723 = vmatprep.subr.mxu0 %v664
      %724 = vmatpush1.msra.mxu0 %v663
      %725 = vmatprep.subr.mxu0 %v670
      %726 = vmatpush1.msra.mxu0 %v669
      %727 = vmatprep.subr.mxu0 %v676
      %728 = vmatpush1.msra.mxu0 %v675
      %729 = vmatprep.subr.mxu0 %v682
      %730 = vmatpush1.msra.mxu0 %v681
      %731 = vmatprep.subr.mxu0 %v688
      %732 = vmatpush1.msra.mxu0 %v687
      %733 = vmatprep.subr.mxu0 %v694
      %734 = vmatpush1.msra.mxu0 %v693
      %735 = vmatprep.subr.mxu0 %v700
      %736 = vmatpush1.msra.mxu0 %v699
      %737 = vmatprep.subr.mxu0 %v706
      %738 = vmatpush1.msra.mxu0 %v705
      %739 = vmatprep.subr.mxu0 0.0
      %740 = vmatpush1.msra.mxu0 0.0
      %741 = vmatprep.subr.mxu0 0.0
      %742 = vmatpush1.msra.mxu0 0.0
      %743 = vmatprep.subr.mxu0 0.0
      %744 = vmatpush1.msra.mxu0 0.0
      %745 = vmatprep.subr.mxu0 0.0
      %746 = vmatpush1.msra.mxu0 0.0
      %747 = vmatprep.subr.mxu0 0.0
      %748 = vmatpush1.msra.mxu0 0.0
      %749 = vmatprep.subr.mxu0 0.0
      %750 = vmatpush1.msra.mxu0 0.0
      %751 = vmatprep.subr.mxu0 0.0
      %752 = vmatpush1.msra.mxu0 0.0
      %753 = vmatprep.subr.mxu0 0.0
      %754 = vmatpush1.msra.mxu0 0.0
      %755 = vmatprep.subr.mxu0 0.0
      %756 = vmatpush1.msra.mxu0 0.0
      %757 = vmatprep.subr.mxu0 0.0
      %758 = vmatpush1.msra.mxu0 0.0
      %759 = vmatprep.subr.mxu0 0.0
      %760 = vmatpush1.msra.mxu0 0.0
      %761 = vmatprep.subr.mxu0 0.0
      %762 = vmatpush1.msra.mxu0 0.0
      %763 = vmatprep.subr.mxu0 0.0
      %764 = vmatpush1.msra.mxu0 0.0
      %765 = vmatprep.subr.mxu0 0.0
      %766 = vmatpush1.msra.mxu0 0.0
      %767 = vmatprep.subr.mxu0 0.0
      %768 = vmatpush1.msra.mxu0 0.0
      %769 = vmatprep.subr.mxu0 0.0
      %770 = vmatpush1.msra.mxu0 0.0
      %771 = vmatprep.subr.mxu0 0.0
      %772 = vmatpush1.msra.mxu0 0.0
      %773 = vmatprep.subr.mxu0 0.0
      %774 = vmatpush1.msra.mxu0 0.0
      %775 = vmatprep.subr.mxu0 0.0
      %776 = vmatpush1.msra.mxu0 0.0
      %777 = vmatprep.subr.mxu0 0.0
      %778 = vmatpush1.msra.mxu0 0.0
      %779 = vmatprep.subr.mxu0 0.0
      %780 = vmatpush1.msra.mxu0 0.0
      %781 = vmatprep.subr.mxu0 0.0
      %782 = vmatpush1.msra.mxu0 0.0
      %783 = vmatprep.subr.mxu0 0.0
      %784 = vmatpush1.msra.mxu0 0.0
      %785 = vmatprep.mubr.f32.mxu0 0.0
      %786 = vmatmul.mubr.f32.gmra.mrb[0].mxu0 %v719
      %v787 = vpop.f32.mrb[0].mxu0
      %v788 = vadd.f32 %v716, %v787
      %v789 = vpop.f32.mrb[0].mxu0
      %v790 = vadd.f32 %v716, %v789
      %791 = vdwg.mxu0
      %792 = vmatprep.subr.mxu0 %v660
      %793 = vmatpush1.msra.mxu0 %v659
      %794 = vmatprep.subr.mxu0 %v666
      %795 = vmatpush1.msra.mxu0 %v665
      %796 = vmatprep.subr.mxu0 %v672
      %797 = vmatpush1.msra.mxu0 %v671
      %798 = vmatprep.subr.mxu0 %v678
      %799 = vmatpush1.msra.mxu0 %v677
      %800 = vmatprep.subr.mxu0 %v684
      %801 = vmatpush1.msra.mxu0 %v683
      %802 = vmatprep.subr.mxu0 %v690
      %803 = vmatpush1.msra.mxu0 %v689
      %804 = vmatprep.subr.mxu0 %v696
      %805 = vmatpush1.msra.mxu0 %v695
      %806 = vmatprep.subr.mxu0 %v702
      %807 = vmatpush1.msra.mxu0 %v701
      %808 = vmatprep.subr.mxu0 %v708
      %809 = vmatpush1.msra.mxu0 %v707
      %810 = vmatprep.subr.mxu0 0.0
      %811 = vmatpush1.msra.mxu0 0.0
      %812 = vmatprep.subr.mxu0 0.0
      %813 = vmatpush1.msra.mxu0 0.0
      %814 = vmatprep.subr.mxu0 0.0
      %815 = vmatpush1.msra.mxu0 0.0
      %816 = vmatprep.subr.mxu0 0.0
      %817 = vmatpush1.msra.mxu0 0.0
      %818 = vmatprep.subr.mxu0 0.0
      %819 = vmatpush1.msra.mxu0 0.0
      %820 = vmatprep.subr.mxu0 0.0
      %821 = vmatpush1.msra.mxu0 0.0
      %822 = vmatprep.subr.mxu0 0.0
      %823 = vmatpush1.msra.mxu0 0.0
      %824 = vmatprep.subr.mxu0 0.0
      %825 = vmatpush1.msra.mxu0 0.0
      %826 = vmatprep.subr.mxu0 0.0
      %827 = vmatpush1.msra.mxu0 0.0
      %828 = vmatprep.subr.mxu0 0.0
      %829 = vmatpush1.msra.mxu0 0.0
      %830 = vmatprep.subr.mxu0 0.0
      %831 = vmatpush1.msra.mxu0 0.0
      %832 = vmatprep.subr.mxu0 0.0
      %833 = vmatpush1.msra.mxu0 0.0
      %834 = vmatprep.subr.mxu0 0.0
      %835 = vmatpush1.msra.mxu0 0.0
      %836 = vmatprep.subr.mxu0 0.0
      %837 = vmatpush1.msra.mxu0 0.0
      %838 = vmatprep.subr.mxu0 0.0
      %839 = vmatpush1.msra.mxu0 0.0
      %840 = vmatprep.subr.mxu0 0.0
      %841 = vmatpush1.msra.mxu0 0.0
      %842 = vmatprep.subr.mxu0 0.0
      %843 = vmatpush1.msra.mxu0 0.0
      %844 = vmatprep.subr.mxu0 0.0
      %845 = vmatpush1.msra.mxu0 0.0
      %846 = vmatprep.subr.mxu0 0.0
      %847 = vmatpush1.msra.mxu0 0.0
      %848 = vmatprep.subr.mxu0 0.0
      %849 = vmatpush1.msra.mxu0 0.0
      %850 = vmatprep.subr.mxu0 0.0
      %851 = vmatpush1.msra.mxu0 0.0
      %852 = vmatprep.subr.mxu0 0.0
      %853 = vmatpush1.msra.mxu0 0.0
      %854 = vmatprep.subr.mxu0 0.0
      %855 = vmatpush1.msra.mxu0 0.0
      %856 = vmatprep.mubr.f32.mxu0 0.0
      %857 = vmatmul.mubr.f32.gmra.mrb[0].mxu0 %v719
      %v858 = vpop.f32.mrb[0].mxu0
      %v859 = vadd.f32 %v716, %v858
      %v860 = vpop.f32.mrb[0].mxu0
      %v861 = vadd.f32 %v716, %v860
      %862 = vdwg.mxu0
      %863 = vmatprep.subr.mxu0 %v662
      %864 = vmatpush1.msra.mxu0 %v661
      %865 = vmatprep.subr.mxu0 %v668
      %866 = vmatpush1.msra.mxu0 %v667
      %867 = vmatprep.subr.mxu0 %v674
      %868 = vmatpush1.msra.mxu0 %v673
      %869 = vmatprep.subr.mxu0 %v680
      %870 = vmatpush1.msra.mxu0 %v679
      %871 = vmatprep.subr.mxu0 %v686
      %872 = vmatpush1.msra.mxu0 %v685
      %873 = vmatprep.subr.mxu0 %v692
      %874 = vmatpush1.msra.mxu0 %v691
      %875 = vmatprep.subr.mxu0 %v698
      %876 = vmatpush1.msra.mxu0 %v697
      %877 = vmatprep.subr.mxu0 %v704
      %878 = vmatpush1.msra.mxu0 %v703
      %879 = vmatprep.subr.mxu0 %v710
      %880 = vmatpush1.msra.mxu0 %v709
      %881 = vmatprep.subr.mxu0 0.0
      %882 = vmatpush1.msra.mxu0 0.0
      %883 = vmatprep.subr.mxu0 0.0
      %884 = vmatpush1.msra.mxu0 0.0
      %885 = vmatprep.subr.mxu0 0.0
      %886 = vmatpush1.msra.mxu0 0.0
      %887 = vmatprep.subr.mxu0 0.0
      %888 = vmatpush1.msra.mxu0 0.0
      %889 = vmatprep.subr.mxu0 0.0
      %890 = vmatpush1.msra.mxu0 0.0
      %891 = vmatprep.subr.mxu0 0.0
      %892 = vmatpush1.msra.mxu0 0.0
      %893 = vmatprep.subr.mxu0 0.0
      %894 = vmatpush1.msra.mxu0 0.0
      %895 = vmatprep.subr.mxu0 0.0
      %896 = vmatpush1.msra.mxu0 0.0
      %897 = vmatprep.subr.mxu0 0.0
      %898 = vmatpush1.msra.mxu0 0.0
      %899 = vmatprep.subr.mxu0 0.0
      %900 = vmatpush1.msra.mxu0 0.0
      %901 = vmatprep.subr.mxu0 0.0
      %902 = vmatpush1.msra.mxu0 0.0
      %903 = vmatprep.subr.mxu0 0.0
      %904 = vmatpush1.msra.mxu0 0.0
      %905 = vmatprep.subr.mxu0 0.0
      %906 = vmatpush1.msra.mxu0 0.0
      %907 = vmatprep.subr.mxu0 0.0
      %908 = vmatpush1.msra.mxu0 0.0
      %909 = vmatprep.subr.mxu0 0.0
      %910 = vmatpush1.msra.mxu0 0.0
      %911 = vmatprep.subr.mxu0 0.0
      %912 = vmatpush1.msra.mxu0 0.0
      %913 = vmatprep.subr.mxu0 0.0
      %914 = vmatpush1.msra.mxu0 0.0
      %915 = vmatprep.subr.mxu0 0.0
      %916 = vmatpush1.msra.mxu0 0.0
      %917 = vmatprep.subr.mxu0 0.0
      %918 = vmatpush1.msra.mxu0 0.0
      %919 = vmatprep.subr.mxu0 0.0
      %920 = vmatpush1.msra.mxu0 0.0
      %921 = vmatprep.subr.mxu0 0.0
      %922 = vmatpush1.msra.mxu0 0.0
      %923 = vmatprep.subr.mxu0 0.0
      %924 = vmatpush1.msra.mxu0 0.0
      %925 = vmatprep.subr.mxu0 0.0
      %926 = vmatpush1.msra.mxu0 0.0
      %927 = vmatprep.mubr.f32.mxu0 0.0
      %928 = vmatmul.mubr.f32.gmra.mrb[0].mxu0 %v719
      %v929 = vpop.f32.mrb[0].mxu0
      %v930 = vadd.f32 %v716, %v929
      %v931 = vpop.f32.mrb[0].mxu0
      %v932 = vadd.f32 %v716, %v931
      %933 = vdwg.mxu0
      %v934 = vmax.f32 %v788, 0.0
      %v935 = vmax.f32 %v790, 0.0
      %v936 = vmax.f32 %v859, 0.0
      %v937 = vmax.f32 %v861, 0.0
      %v938 = vmax.f32 %v930, 0.0
      %v939 = vmax.f32 %v932, 0.0
      %940 = vst [vmem:[#allocation2] sm:$0xff] %v934
      %941 = vst [vmem:[#allocation2 + $0x8] sm:$0xff] %v935
      %942 = vst [vmem:[#allocation2 + $0x10] sm:$0xff] %v936
      %943 = vst [vmem:[#allocation2 + $0x18] sm:$0xff] %v937
      %944 = vst [vmem:[#allocation2 + $0x20] sm:$0xff] %v938
      %vm945 = vcmask 228352
      %946 = vst.msk [vmem:[#allocation2 + $0x28] sm:$0xff] %vm945, %v939
      %953 = vrot.lane.b32.xlu0 %v934, 127
      %v954 = vpop.permute.xlu0 %953
      %955 = vrot.lane.b32.xlu0 %v935, 127
      %v956 = vpop.permute.xlu0 %955
      %957 = vrot.lane.b32.xlu0 %v936, 127
      %v958 = vpop.permute.xlu0 %957
      %959 = vrot.lane.b32.xlu0 %v937, 127
      %v960 = vpop.permute.xlu0 %959
      %961 = vrot.lane.b32.xlu0 %v938, 127
      %v962 = vpop.permute.xlu0 %961
      %963 = vrot.lane.b32.xlu0 %v939, 127
      %v964 = vpop.permute.xlu0 %963
      %v965 = vsel %vm419, %v954, %v956
      %v966 = vsel %vm419, %v956, %v958
      %v967 = vsel %vm419, %v958, %v960
      %v968 = vsel %vm419, %v960, %v962
      %v969 = vsel %vm419, %v962, %v964
      %976 = vst [vmem:[#allocation2 + $0x30] sm:$0xff] %v965
      %977 = vst [vmem:[#allocation2 + $0x38] sm:$0xff] %v966
      %978 = vst [vmem:[#allocation2 + $0x40] sm:$0xff] %v967
      %979 = vst [vmem:[#allocation2 + $0x48] sm:$0xff] %v968
      %980 = vst [vmem:[#allocation2 + $0x50] sm:$0xff] %v969
      %981 = vst.msk [vmem:[#allocation2 + $0x58] sm:$0xff] %vm945, %v964
      %982 = vrot.lane.b32.xlu0 %v934, 126
      %v983 = vpop.permute.xlu0 %982
      %984 = vrot.lane.b32.xlu0 %v935, 126
      %v985 = vpop.permute.xlu0 %984
      %986 = vrot.lane.b32.xlu0 %v936, 126
      %v987 = vpop.permute.xlu0 %986
      %988 = vrot.lane.b32.xlu0 %v937, 126
      %v989 = vpop.permute.xlu0 %988
      %990 = vrot.lane.b32.xlu0 %v938, 126
      %v991 = vpop.permute.xlu0 %990
      %992 = vrot.lane.b32.xlu0 %v939, 126
      %v993 = vpop.permute.xlu0 %992
      %v994 = vsel %vm449, %v983, %v985
      %v995 = vsel %vm449, %v985, %v987
      %v996 = vsel %vm449, %v987, %v989
      %v997 = vsel %vm449, %v989, %v991
      %v998 = vsel %vm449, %v991, %v993
      %1005 = vst [vmem:[#allocation2 + $0x60] sm:$0xff] %v994
      %1006 = vst [vmem:[#allocation2 + $0x68] sm:$0xff] %v995
      %1007 = vst [vmem:[#allocation2 + $0x70] sm:$0xff] %v996
      %1008 = vst [vmem:[#allocation2 + $0x78] sm:$0xff] %v997
      %1009 = vst [vmem:[#allocation2 + $0x80] sm:$0xff] %v998
      %1010 = vst.msk [vmem:[#allocation2 + $0x88] sm:$0xff] %vm945, %v993
      %1011 = vrot.lane.b32.xlu0 %v934, 100
      %v1012 = vpop.permute.xlu0 %1011
      %1013 = vrot.lane.b32.xlu0 %v935, 100
      %v1014 = vpop.permute.xlu0 %1013
      %1015 = vrot.lane.b32.xlu0 %v936, 100
      %v1016 = vpop.permute.xlu0 %1015
      %1017 = vrot.lane.b32.xlu0 %v937, 100
      %v1018 = vpop.permute.xlu0 %1017
      %1019 = vrot.lane.b32.xlu0 %v938, 100
      %v1020 = vpop.permute.xlu0 %1019
      %1021 = vrot.lane.b32.xlu0 %v939, 100
      %v1022 = vpop.permute.xlu0 %1021
      %v1023 = vsel %vm479, %v1012, %v1014
      %v1024 = vsel %vm479, %v1014, %v1016
      %v1025 = vsel %vm479, %v1016, %v1018
      %v1026 = vsel %vm479, %v1018, %v1020
      %v1027 = vsel %vm479, %v1020, %v1022
      %1034 = vst [vmem:[#allocation2 + $0x90] sm:$0xff] %v1023
      %1035 = vst [vmem:[#allocation2 + $0x98] sm:$0xff] %v1024
      %1036 = vst [vmem:[#allocation2 + $0xa0] sm:$0xff] %v1025
      %1037 = vst [vmem:[#allocation2 + $0xa8] sm:$0xff] %v1026
      %1038 = vst [vmem:[#allocation2 + $0xb0] sm:$0xff] %v1027
      %1039 = vst.msk [vmem:[#allocation2 + $0xb8] sm:$0xff] %vm945, %v1022
      %1040 = vrot.lane.b32.xlu0 %v934, 99
      %v1041 = vpop.permute.xlu0 %1040
      %1042 = vrot.lane.b32.xlu0 %v935, 99
      %v1043 = vpop.permute.xlu0 %1042
      %1044 = vrot.lane.b32.xlu0 %v936, 99
      %v1045 = vpop.permute.xlu0 %1044
      %1046 = vrot.lane.b32.xlu0 %v937, 99
      %v1047 = vpop.permute.xlu0 %1046
      %1048 = vrot.lane.b32.xlu0 %v938, 99
      %v1049 = vpop.permute.xlu0 %1048
      %1050 = vrot.lane.b32.xlu0 %v939, 99
      %v1051 = vpop.permute.xlu0 %1050
      %v1052 = vsel %vm509, %v1041, %v1043
      %v1053 = vsel %vm509, %v1043, %v1045
      %v1054 = vsel %vm509, %v1045, %v1047
      %v1055 = vsel %vm509, %v1047, %v1049
      %v1056 = vsel %vm509, %v1049, %v1051
      %1063 = vst [vmem:[#allocation2 + $0xc0] sm:$0xff] %v1052
      %1064 = vst [vmem:[#allocation2 + $0xc8] sm:$0xff] %v1053
      %1065 = vst [vmem:[#allocation2 + $0xd0] sm:$0xff] %v1054
      %1066 = vst [vmem:[#allocation2 + $0xd8] sm:$0xff] %v1055
      %1067 = vst [vmem:[#allocation2 + $0xe0] sm:$0xff] %v1056
      %1068 = vst.msk [vmem:[#allocation2 + $0xe8] sm:$0xff] %vm945, %v1051
      %1069 = vrot.lane.b32.xlu0 %v934, 98
      %v1070 = vpop.permute.xlu0 %1069
      %1071 = vrot.lane.b32.xlu0 %v935, 98
      %v1072 = vpop.permute.xlu0 %1071
      %1073 = vrot.lane.b32.xlu0 %v936, 98
      %v1074 = vpop.permute.xlu0 %1073
      %1075 = vrot.lane.b32.xlu0 %v937, 98
      %v1076 = vpop.permute.xlu0 %1075
      %1077 = vrot.lane.b32.xlu0 %v938, 98
      %v1078 = vpop.permute.xlu0 %1077
      %1079 = vrot.lane.b32.xlu0 %v939, 98
      %v1080 = vpop.permute.xlu0 %1079
      %v1081 = vsel %vm539, %v1070, %v1072
      %v1082 = vsel %vm539, %v1072, %v1074
      %v1083 = vsel %vm539, %v1074, %v1076
      %v1084 = vsel %vm539, %v1076, %v1078
      %v1085 = vsel %vm539, %v1078, %v1080
      %1092 = vst [vmem:[#allocation2 + $0xf0] sm:$0xff] %v1081
      %1093 = vst [vmem:[#allocation2 + $0xf8] sm:$0xff] %v1082
      %1094 = vst [vmem:[#allocation2 + $0x100] sm:$0xff] %v1083
      %1095 = vst [vmem:[#allocation2 + $0x108] sm:$0xff] %v1084
      %1096 = vst [vmem:[#allocation2 + $0x110] sm:$0xff] %v1085
      %1097 = vst.msk [vmem:[#allocation2 + $0x118] sm:$0xff] %vm945, %v1080
      %1098 = vrot.lane.b32.xlu0 %v934, 72
      %v1099 = vpop.permute.xlu0 %1098
      %1100 = vrot.lane.b32.xlu0 %v935, 72
      %v1101 = vpop.permute.xlu0 %1100
      %1102 = vrot.lane.b32.xlu0 %v936, 72
      %v1103 = vpop.permute.xlu0 %1102
      %1104 = vrot.lane.b32.xlu0 %v937, 72
      %v1105 = vpop.permute.xlu0 %1104
      %1106 = vrot.lane.b32.xlu0 %v938, 72
      %v1107 = vpop.permute.xlu0 %1106
      %1108 = vrot.lane.b32.xlu0 %v939, 72
      %v1109 = vpop.permute.xlu0 %1108
      %v1110 = vsel %vm572, %v1099, %v1101
      %v1111 = vsel %vm572, %v1101, %v1103
      %v1112 = vsel %vm572, %v1103, %v1105
      %v1113 = vsel %vm572, %v1105, %v1107
      %v1114 = vsel %vm572, %v1107, %v1109
      %1121 = vst [vmem:[#allocation2 + $0x120] sm:$0xff] %v1110
      %1122 = vst [vmem:[#allocation2 + $0x128] sm:$0xff] %v1111
      %1123 = vst [vmem:[#allocation2 + $0x130] sm:$0xff] %v1112
      %1124 = vst [vmem:[#allocation2 + $0x138] sm:$0xff] %v1113
      %1125 = vst [vmem:[#allocation2 + $0x140] sm:$0xff] %v1114
      %1126 = vst.msk [vmem:[#allocation2 + $0x148] sm:$0xff] %vm945, %v1109
      %1127 = vrot.lane.b32.xlu0 %v934, 71
      %v1128 = vpop.permute.xlu0 %1127
      %1129 = vrot.lane.b32.xlu0 %v935, 71
      %v1130 = vpop.permute.xlu0 %1129
      %1131 = vrot.lane.b32.xlu0 %v936, 71
      %v1132 = vpop.permute.xlu0 %1131
      %1133 = vrot.lane.b32.xlu0 %v937, 71
      %v1134 = vpop.permute.xlu0 %1133
      %1135 = vrot.lane.b32.xlu0 %v938, 71
      %v1136 = vpop.permute.xlu0 %1135
      %1137 = vrot.lane.b32.xlu0 %v939, 71
      %v1138 = vpop.permute.xlu0 %1137
      %v1139 = vsel %vm605, %v1128, %v1130
      %v1140 = vsel %vm605, %v1130, %v1132
      %v1141 = vsel %vm605, %v1132, %v1134
      %v1142 = vsel %vm605, %v1134, %v1136
      %v1143 = vsel %vm605, %v1136, %v1138
      %1150 = vst [vmem:[#allocation2 + $0x150] sm:$0xff] %v1139
      %1151 = vst [vmem:[#allocation2 + $0x158] sm:$0xff] %v1140
      %1152 = vst [vmem:[#allocation2 + $0x160] sm:$0xff] %v1141
      %1153 = vst [vmem:[#allocation2 + $0x168] sm:$0xff] %v1142
      %1154 = vst [vmem:[#allocation2 + $0x170] sm:$0xff] %v1143
      %1155 = vst.msk [vmem:[#allocation2 + $0x178] sm:$0xff] %vm945, %v1138
      %1156 = vrot.lane.b32.xlu0 %v934, 70
      %v1157 = vpop.permute.xlu0 %1156
      %1158 = vrot.lane.b32.xlu0 %v935, 70
      %v1159 = vpop.permute.xlu0 %1158
      %1160 = vrot.lane.b32.xlu0 %v936, 70
      %v1161 = vpop.permute.xlu0 %1160
      %1162 = vrot.lane.b32.xlu0 %v937, 70
      %v1163 = vpop.permute.xlu0 %1162
      %1164 = vrot.lane.b32.xlu0 %v938, 70
      %v1165 = vpop.permute.xlu0 %1164
      %1166 = vrot.lane.b32.xlu0 %v939, 70
      %v1167 = vpop.permute.xlu0 %1166
      %v1168 = vsel %vm638, %v1157, %v1159
      %v1169 = vsel %vm638, %v1159, %v1161
      %v1170 = vsel %vm638, %v1161, %v1163
      %v1171 = vsel %vm638, %v1163, %v1165
      %v1172 = vsel %vm638, %v1165, %v1167
      %1179 = vst [vmem:[#allocation2 + $0x180] sm:$0xff] %v1168
      %1180 = vst [vmem:[#allocation2 + $0x188] sm:$0xff] %v1169
      %1181 = vst [vmem:[#allocation2 + $0x190] sm:$0xff] %v1170
      %1182 = vst [vmem:[#allocation2 + $0x198] sm:$0xff] %v1171
      %1183 = vst [vmem:[#allocation2 + $0x1a0] sm:$0xff] %v1172
      %1184 = vst.msk [vmem:[#allocation2 + $0x1a8] sm:$0xff] %vm945, %v1167
      %v1185 = vld [vmem:[#allocation2] sm:$0xff]
      %v1186 = vld [vmem:[#allocation2 + $0x8] sm:$0xff]
      %v1187 = vld [vmem:[#allocation2 + $0x10] sm:$0xff]
      %v1188 = vld [vmem:[#allocation2 + $0x18] sm:$0xff]
      %v1189 = vld [vmem:[#allocation2 + $0x20] sm:$0xff]
      %v1190 = vld [vmem:[#allocation2 + $0x28] sm:$0xff]
      %v1191 = vld [vmem:[#allocation2 + $0x30] sm:$0xff]
      %v1192 = vld [vmem:[#allocation2 + $0x38] sm:$0xff]
      %v1193 = vld [vmem:[#allocation2 + $0x40] sm:$0xff]
      %v1194 = vld [vmem:[#allocation2 + $0x48] sm:$0xff]
      %v1195 = vld [vmem:[#allocation2 + $0x50] sm:$0xff]
      %v1196 = vld [vmem:[#allocation2 + $0x58] sm:$0xff]
      %v1197 = vld [vmem:[#allocation2 + $0x60] sm:$0xff]
      %v1198 = vld [vmem:[#allocation2 + $0x68] sm:$0xff]
      %v1199 = vld [vmem:[#allocation2 + $0x70] sm:$0xff]
      %v1200 = vld [vmem:[#allocation2 + $0x78] sm:$0xff]
      %v1201 = vld [vmem:[#allocation2 + $0x80] sm:$0xff]
      %v1202 = vld [vmem:[#allocation2 + $0x88] sm:$0xff]
      %v1203 = vld [vmem:[#allocation2 + $0x90] sm:$0xff]
      %v1204 = vld [vmem:[#allocation2 + $0x98] sm:$0xff]
      %v1205 = vld [vmem:[#allocation2 + $0xa0] sm:$0xff]
      %v1206 = vld [vmem:[#allocation2 + $0xa8] sm:$0xff]
      %v1207 = vld [vmem:[#allocation2 + $0xb0] sm:$0xff]
      %v1208 = vld [vmem:[#allocation2 + $0xb8] sm:$0xff]
      %v1209 = vld [vmem:[#allocation2 + $0xc0] sm:$0xff]
      %v1210 = vld [vmem:[#allocation2 + $0xc8] sm:$0xff]
      %v1211 = vld [vmem:[#allocation2 + $0xd0] sm:$0xff]
      %v1212 = vld [vmem:[#allocation2 + $0xd8] sm:$0xff]
      %v1213 = vld [vmem:[#allocation2 + $0xe0] sm:$0xff]
      %v1214 = vld [vmem:[#allocation2 + $0xe8] sm:$0xff]
      %v1215 = vld [vmem:[#allocation2 + $0xf0] sm:$0xff]
      %v1216 = vld [vmem:[#allocation2 + $0xf8] sm:$0xff]
      %v1217 = vld [vmem:[#allocation2 + $0x100] sm:$0xff]
      %v1218 = vld [vmem:[#allocation2 + $0x108] sm:$0xff]
      %v1219 = vld [vmem:[#allocation2 + $0x110] sm:$0xff]
      %v1220 = vld [vmem:[#allocation2 + $0x118] sm:$0xff]
      %v1221 = vld [vmem:[#allocation2 + $0x120] sm:$0xff]
      %v1222 = vld [vmem:[#allocation2 + $0x128] sm:$0xff]
      %v1223 = vld [vmem:[#allocation2 + $0x130] sm:$0xff]
      %v1224 = vld [vmem:[#allocation2 + $0x138] sm:$0xff]
      %v1225 = vld [vmem:[#allocation2 + $0x140] sm:$0xff]
      %v1226 = vld [vmem:[#allocation2 + $0x148] sm:$0xff]
      %v1227 = vld [vmem:[#allocation2 + $0x150] sm:$0xff]
      %v1228 = vld [vmem:[#allocation2 + $0x158] sm:$0xff]
      %v1229 = vld [vmem:[#allocation2 + $0x160] sm:$0xff]
      %v1230 = vld [vmem:[#allocation2 + $0x168] sm:$0xff]
      %v1231 = vld [vmem:[#allocation2 + $0x170] sm:$0xff]
      %v1232 = vld [vmem:[#allocation2 + $0x178] sm:$0xff]
      %v1233 = vld [vmem:[#allocation2 + $0x180] sm:$0xff]
      %v1234 = vld [vmem:[#allocation2 + $0x188] sm:$0xff]
      %v1235 = vld [vmem:[#allocation2 + $0x190] sm:$0xff]
      %v1236 = vld [vmem:[#allocation2 + $0x198] sm:$0xff]
      %v1237 = vld [vmem:[#allocation2 + $0x1a0] sm:$0xff]
      %v1238 = vld [vmem:[#allocation2 + $0x1a8] sm:$0xff]
      %v1239 = vld [vmem:[%s3] sm:$0xff]
      %v1240 = vld [vmem:[%s4] sm:$0xff]
      %1242 = vset.pattern.permute.xlu0 0
      %1243 = vperm.xlu0 %1242, %v1240
      %v1244 = vpop.permute.xlu0 %1243
      %v1247 = vsel %vm572, %v1239, 0
      %1249 = vmatprep.subr.mxu0 %v1186
      %1250 = vmatpush1.msra.mxu0 %v1185
      %1251 = vmatprep.subr.mxu0 %v1192
      %1252 = vmatpush1.msra.mxu0 %v1191
      %1253 = vmatprep.subr.mxu0 %v1198
      %1254 = vmatpush1.msra.mxu0 %v1197
      %1255 = vmatprep.subr.mxu0 %v1204
      %1256 = vmatpush1.msra.mxu0 %v1203
      %1257 = vmatprep.subr.mxu0 %v1210
      %1258 = vmatpush1.msra.mxu0 %v1209
      %1259 = vmatprep.subr.mxu0 %v1216
      %1260 = vmatpush1.msra.mxu0 %v1215
      %1261 = vmatprep.subr.mxu0 %v1222
      %1262 = vmatpush1.msra.mxu0 %v1221
      %1263 = vmatprep.subr.mxu0 %v1228
      %1264 = vmatpush1.msra.mxu0 %v1227
      %1265 = vmatprep.subr.mxu0 %v1234
      %1266 = vmatpush1.msra.mxu0 %v1233
      %1267 = vmatprep.subr.mxu0 0.0
      %1268 = vmatpush1.msra.mxu0 0.0
      %1269 = vmatprep.subr.mxu0 0.0
      %1270 = vmatpush1.msra.mxu0 0.0
      %1271 = vmatprep.subr.mxu0 0.0
      %1272 = vmatpush1.msra.mxu0 0.0
      %1273 = vmatprep.subr.mxu0 0.0
      %1274 = vmatpush1.msra.mxu0 0.0
      %1275 = vmatprep.subr.mxu0 0.0
      %1276 = vmatpush1.msra.mxu0 0.0
      %1277 = vmatprep.subr.mxu0 0.0
      %1278 = vmatpush1.msra.mxu0 0.0
      %1279 = vmatprep.subr.mxu0 0.0
      %1280 = vmatpush1.msra.mxu0 0.0
      %1281 = vmatprep.subr.mxu0 0.0
      %1282 = vmatpush1.msra.mxu0 0.0
      %1283 = vmatprep.subr.mxu0 0.0
      %1284 = vmatpush1.msra.mxu0 0.0
      %1285 = vmatprep.subr.mxu0 0.0
      %1286 = vmatpush1.msra.mxu0 0.0
      %1287 = vmatprep.subr.mxu0 0.0
      %1288 = vmatpush1.msra.mxu0 0.0
      %1289 = vmatprep.subr.mxu0 0.0
      %1290 = vmatpush1.msra.mxu0 0.0
      %1291 = vmatprep.subr.mxu0 0.0
      %1292 = vmatpush1.msra.mxu0 0.0
      %1293 = vmatprep.subr.mxu0 0.0
      %1294 = vmatpush1.msra.mxu0 0.0
      %1295 = vmatprep.subr.mxu0 0.0
      %1296 = vmatpush1.msra.mxu0 0.0
      %1297 = vmatprep.subr.mxu0 0.0
      %1298 = vmatpush1.msra.mxu0 0.0
      %1299 = vmatprep.subr.mxu0 0.0
      %1300 = vmatpush1.msra.mxu0 0.0
      %1301 = vmatprep.subr.mxu0 0.0
      %1302 = vmatpush1.msra.mxu0 0.0
      %1303 = vmatprep.subr.mxu0 0.0
      %1304 = vmatpush1.msra.mxu0 0.0
      %1305 = vmatprep.subr.mxu0 0.0
      %1306 = vmatpush1.msra.mxu0 0.0
      %1307 = vmatprep.subr.mxu0 0.0
      %1308 = vmatpush1.msra.mxu0 0.0
      %1309 = vmatprep.subr.mxu0 0.0
      %1310 = vmatpush1.msra.mxu0 0.0
      %1311 = vmatprep.subr.mxu0 0.0
      %1312 = vmatpush1.msra.mxu0 0.0
      %1313 = vmatprep.mubr.f32.mxu0 0.0
      %1314 = vmatmul.mubr.f32.gmra.mrb[0].mxu0 %v1247
      %v1315 = vpop.f32.mrb[0].mxu0
      %v1316 = vadd.f32 %v1244, %v1315
      %v1317 = vpop.f32.mrb[0].mxu0
      %v1318 = vadd.f32 %v1244, %v1317
      %1319 = vdwg.mxu0
      %1320 = vmatprep.subr.mxu0 %v1188
      %1321 = vmatpush1.msra.mxu0 %v1187
      %1322 = vmatprep.subr.mxu0 %v1194
      %1323 = vmatpush1.msra.mxu0 %v1193
      %1324 = vmatprep.subr.mxu0 %v1200
      %1325 = vmatpush1.msra.mxu0 %v1199
      %1326 = vmatprep.subr.mxu0 %v1206
      %1327 = vmatpush1.msra.mxu0 %v1205
      %1328 = vmatprep.subr.mxu0 %v1212
      %1329 = vmatpush1.msra.mxu0 %v1211
      %1330 = vmatprep.subr.mxu0 %v1218
      %1331 = vmatpush1.msra.mxu0 %v1217
      %1332 = vmatprep.subr.mxu0 %v1224
      %1333 = vmatpush1.msra.mxu0 %v1223
      %1334 = vmatprep.subr.mxu0 %v1230
      %1335 = vmatpush1.msra.mxu0 %v1229
      %1336 = vmatprep.subr.mxu0 %v1236
      %1337 = vmatpush1.msra.mxu0 %v1235
      %1338 = vmatprep.subr.mxu0 0.0
      %1339 = vmatpush1.msra.mxu0 0.0
      %1340 = vmatprep.subr.mxu0 0.0
      %1341 = vmatpush1.msra.mxu0 0.0
      %1342 = vmatprep.subr.mxu0 0.0
      %1343 = vmatpush1.msra.mxu0 0.0
      %1344 = vmatprep.subr.mxu0 0.0
      %1345 = vmatpush1.msra.mxu0 0.0
      %1346 = vmatprep.subr.mxu0 0.0
      %1347 = vmatpush1.msra.mxu0 0.0
      %1348 = vmatprep.subr.mxu0 0.0
      %1349 = vmatpush1.msra.mxu0 0.0
      %1350 = vmatprep.subr.mxu0 0.0
      %1351 = vmatpush1.msra.mxu0 0.0
      %1352 = vmatprep.subr.mxu0 0.0
      %1353 = vmatpush1.msra.mxu0 0.0
      %1354 = vmatprep.subr.mxu0 0.0
      %1355 = vmatpush1.msra.mxu0 0.0
      %1356 = vmatprep.subr.mxu0 0.0
      %1357 = vmatpush1.msra.mxu0 0.0
      %1358 = vmatprep.subr.mxu0 0.0
      %1359 = vmatpush1.msra.mxu0 0.0
      %1360 = vmatprep.subr.mxu0 0.0
      %1361 = vmatpush1.msra.mxu0 0.0
      %1362 = vmatprep.subr.mxu0 0.0
      %1363 = vmatpush1.msra.mxu0 0.0
      %1364 = vmatprep.subr.mxu0 0.0
      %1365 = vmatpush1.msra.mxu0 0.0
      %1366 = vmatprep.subr.mxu0 0.0
      %1367 = vmatpush1.msra.mxu0 0.0
      %1368 = vmatprep.subr.mxu0 0.0
      %1369 = vmatpush1.msra.mxu0 0.0
      %1370 = vmatprep.subr.mxu0 0.0
      %1371 = vmatpush1.msra.mxu0 0.0
      %1372 = vmatprep.subr.mxu0 0.0
      %1373 = vmatpush1.msra.mxu0 0.0
      %1374 = vmatprep.subr.mxu0 0.0
      %1375 = vmatpush1.msra.mxu0 0.0
      %1376 = vmatprep.subr.mxu0 0.0
      %1377 = vmatpush1.msra.mxu0 0.0
      %1378 = vmatprep.subr.mxu0 0.0
      %1379 = vmatpush1.msra.mxu0 0.0
      %1380 = vmatprep.subr.mxu0 0.0
      %1381 = vmatpush1.msra.mxu0 0.0
      %1382 = vmatprep.subr.mxu0 0.0
      %1383 = vmatpush1.msra.mxu0 0.0
      %1384 = vmatprep.mubr.f32.mxu0 0.0
      %1385 = vmatmul.mubr.f32.gmra.mrb[0].mxu0 %v1247
      %v1386 = vpop.f32.mrb[0].mxu0
      %v1387 = vadd.f32 %v1244, %v1386
      %v1388 = vpop.f32.mrb[0].mxu0
      %v1389 = vadd.f32 %v1244, %v1388
      %1390 = vdwg.mxu0
      %1391 = vmatprep.subr.mxu0 %v1190
      %1392 = vmatpush1.msra.mxu0 %v1189
      %1393 = vmatprep.subr.mxu0 %v1196
      %1394 = vmatpush1.msra.mxu0 %v1195
      %1395 = vmatprep.subr.mxu0 %v1202
      %1396 = vmatpush1.msra.mxu0 %v1201
      %1397 = vmatprep.subr.mxu0 %v1208
      %1398 = vmatpush1.msra.mxu0 %v1207
      %1399 = vmatprep.subr.mxu0 %v1214
      %1400 = vmatpush1.msra.mxu0 %v1213
      %1401 = vmatprep.subr.mxu0 %v1220
      %1402 = vmatpush1.msra.mxu0 %v1219
      %1403 = vmatprep.subr.mxu0 %v1226
      %1404 = vmatpush1.msra.mxu0 %v1225
      %1405 = vmatprep.subr.mxu0 %v1232
      %1406 = vmatpush1.msra.mxu0 %v1231
      %1407 = vmatprep.subr.mxu0 %v1238
      %1408 = vmatpush1.msra.mxu0 %v1237
      %1409 = vmatprep.subr.mxu0 0.0
      %1410 = vmatpush1.msra.mxu0 0.0
      %1411 = vmatprep.subr.mxu0 0.0
      %1412 = vmatpush1.msra.mxu0 0.0
      %1413 = vmatprep.subr.mxu0 0.0
      %1414 = vmatpush1.msra.mxu0 0.0
      %1415 = vmatprep.subr.mxu0 0.0
      %1416 = vmatpush1.msra.mxu0 0.0
      %1417 = vmatprep.subr.mxu0 0.0
      %1418 = vmatpush1.msra.mxu0 0.0
      %1419 = vmatprep.subr.mxu0 0.0
      %1420 = vmatpush1.msra.mxu0 0.0
      %1421 = vmatprep.subr.mxu0 0.0
      %1422 = vmatpush1.msra.mxu0 0.0
      %1423 = vmatprep.subr.mxu0 0.0
      %1424 = vmatpush1.msra.mxu0 0.0
      %1425 = vmatprep.subr.mxu0 0.0
      %1426 = vmatpush1.msra.mxu0 0.0
      %1427 = vmatprep.subr.mxu0 0.0
      %1428 = vmatpush1.msra.mxu0 0.0
      %1429 = vmatprep.subr.mxu0 0.0
      %1430 = vmatpush1.msra.mxu0 0.0
      %1431 = vmatprep.subr.mxu0 0.0
      %1432 = vmatpush1.msra.mxu0 0.0
      %1433 = vmatprep.subr.mxu0 0.0
      %1434 = vmatpush1.msra.mxu0 0.0
      %1435 = vmatprep.subr.mxu0 0.0
      %1436 = vmatpush1.msra.mxu0 0.0
      %1437 = vmatprep.subr.mxu0 0.0
      %1438 = vmatpush1.msra.mxu0 0.0
      %1439 = vmatprep.subr.mxu0 0.0
      %1440 = vmatpush1.msra.mxu0 0.0
      %1441 = vmatprep.subr.mxu0 0.0
      %1442 = vmatpush1.msra.mxu0 0.0
      %1443 = vmatprep.subr.mxu0 0.0
      %1444 = vmatpush1.msra.mxu0 0.0
      %1445 = vmatprep.subr.mxu0 0.0
      %1446 = vmatpush1.msra.mxu0 0.0
      %1447 = vmatprep.subr.mxu0 0.0
      %1448 = vmatpush1.msra.mxu0 0.0
      %1449 = vmatprep.subr.mxu0 0.0
      %1450 = vmatpush1.msra.mxu0 0.0
      %1451 = vmatprep.subr.mxu0 0.0
      %1452 = vmatpush1.msra.mxu0 0.0
      %1453 = vmatprep.subr.mxu0 0.0
      %1454 = vmatpush1.msra.mxu0 0.0
      %1455 = vmatprep.mubr.f32.mxu0 0.0
      %1456 = vmatmul.mubr.f32.gmra.mrb[0].mxu0 %v1247
      %v1457 = vpop.f32.mrb[0].mxu0
      %v1458 = vadd.f32 %v1244, %v1457
      %v1459 = vpop.f32.mrb[0].mxu0
      %v1460 = vadd.f32 %v1244, %v1459
      %1461 = vdwg.mxu0
      %v1462 = vmax.f32 %v1316, 0.0
      %v1463 = vmax.f32 %v1318, 0.0
      %v1464 = vmax.f32 %v1387, 0.0
      %v1465 = vmax.f32 %v1389, 0.0
      %v1466 = vmax.f32 %v1458, 0.0
      %v1467 = vmax.f32 %v1460, 0.0
      %1473 = vrot.lane.b32.xlu0 %v1462, 127
      %v1474 = vpop.permute.xlu0 %1473
      %1475 = vrot.lane.b32.xlu0 %v1463, 127
      %v1476 = vpop.permute.xlu0 %1475
      %1477 = vrot.lane.b32.xlu0 %v1464, 127
      %v1478 = vpop.permute.xlu0 %1477
      %1479 = vrot.lane.b32.xlu0 %v1465, 127
      %v1480 = vpop.permute.xlu0 %1479
      %1481 = vrot.lane.b32.xlu0 %v1466, 127
      %v1482 = vpop.permute.xlu0 %1481
      %v1483 = vsel %vm419, %v1474, %v1476
      %v1484 = vsel %vm419, %v1476, %v1478
      %v1485 = vsel %vm419, %v1478, %v1480
      %v1486 = vsel %vm419, %v1480, %v1482
      %v1492 = vmax.f32 %v1462, %v1483
      %v1493 = vmax.f32 %v1463, %v1484
      %v1494 = vmax.f32 %v1464, %v1485
      %v1495 = vmax.f32 %v1465, %v1486
      %v1496 = vmax.f32 %v1466, %v1482
      %1498 = vrot.lane.b32.xlu0 %v1467, 127
      %v1499 = vpop.permute.xlu0 %1498
      %v1500 = vsel %vm419, %v1482, %v1499
      %v1503 = vmax.f32 %v1466, %v1500
      %v1504 = vmax.f32 %v1467, %v1499
      %1511 = vrot.lane.b32.xlu0 %v1492, 100
      %v1512 = vpop.permute.xlu0 %1511
      %1513 = vrot.lane.b32.xlu0 %v1493, 100
      %v1514 = vpop.permute.xlu0 %1513
      %1515 = vrot.lane.b32.xlu0 %v1494, 100
      %v1516 = vpop.permute.xlu0 %1515
      %1517 = vrot.lane.b32.xlu0 %v1495, 100
      %v1518 = vpop.permute.xlu0 %1517
      %1519 = vrot.lane.b32.xlu0 %v1503, 100
      %v1520 = vpop.permute.xlu0 %1519
      %1521 = vrot.lane.b32.xlu0 %v1504, 100
      %v1522 = vpop.permute.xlu0 %1521
      %v1523 = vsel %vm479, %v1512, %v1514
      %v1524 = vsel %vm479, %v1514, %v1516
      %v1525 = vsel %vm479, %v1516, %v1518
      %v1526 = vsel %vm479, %v1518, %v1520
      %v1527 = vsel %vm479, %v1520, %v1522
      %v1533 = vmax.f32 %v1492, %v1523
      %v1534 = vmax.f32 %v1493, %v1524
      %v1535 = vmax.f32 %v1494, %v1525
      %v1536 = vmax.f32 %v1495, %v1526
      %v1537 = vmax.f32 %v1496, %v1527
      %1538 = vst [vmem:[#allocation2] sm:$0xff] %v1533
      %1539 = vst [vmem:[#allocation2 + $0x8] sm:$0xff] %v1534
      %1540 = vst [vmem:[#allocation2 + $0x10] sm:$0xff] %v1535
      %1541 = vst [vmem:[#allocation2 + $0x18] sm:$0xff] %v1536
      %vm1542 = vcmask 89088
      %1543 = vst.msk [vmem:[#allocation2 + $0x20] sm:$0xff] %vm1542, %v1537
      %1549 = vrot.lane.b32.xlu0 %v1533, 126
      %v1550 = vpop.permute.xlu0 %1549
      %1551 = vrot.lane.b32.xlu0 %v1534, 126
      %v1552 = vpop.permute.xlu0 %1551
      %1553 = vrot.lane.b32.xlu0 %v1535, 126
      %v1554 = vpop.permute.xlu0 %1553
      %1555 = vrot.lane.b32.xlu0 %v1536, 126
      %v1556 = vpop.permute.xlu0 %1555
      %1557 = vrot.lane.b32.xlu0 %v1537, 126
      %v1558 = vpop.permute.xlu0 %1557
      %v1559 = vsel %vm449, %v1550, %v1552
      %v1560 = vsel %vm449, %v1552, %v1554
      %v1561 = vsel %vm449, %v1554, %v1556
      %v1562 = vsel %vm449, %v1556, %v1558
      %1568 = vst [vmem:[#allocation2 + $0x30] sm:$0xff] %v1559
      %1569 = vst [vmem:[#allocation2 + $0x38] sm:$0xff] %v1560
      %1570 = vst [vmem:[#allocation2 + $0x40] sm:$0xff] %v1561
      %1571 = vst [vmem:[#allocation2 + $0x48] sm:$0xff] %v1562
      %1572 = vst.msk [vmem:[#allocation2 + $0x50] sm:$0xff] %vm1542, %v1558
      %1573 = vrot.lane.b32.xlu0 %v1533, 124
      %v1574 = vpop.permute.xlu0 %1573
      %1575 = vrot.lane.b32.xlu0 %v1534, 124
      %v1576 = vpop.permute.xlu0 %1575
      %1577 = vrot.lane.b32.xlu0 %v1535, 124
      %v1578 = vpop.permute.xlu0 %1577
      %1579 = vrot.lane.b32.xlu0 %v1536, 124
      %v1580 = vpop.permute.xlu0 %1579
      %1581 = vrot.lane.b32.xlu0 %v1537, 124
      %v1582 = vpop.permute.xlu0 %1581
      %vm1583 = vcmask 1014784
      %v1584 = vsel %vm1583, %v1574, %v1576
      %v1585 = vsel %vm1583, %v1576, %v1578
      %v1586 = vsel %vm1583, %v1578, %v1580
      %v1587 = vsel %vm1583, %v1580, %v1582
      %1593 = vst [vmem:[#allocation2 + $0x60] sm:$0xff] %v1584
      %1594 = vst [vmem:[#allocation2 + $0x68] sm:$0xff] %v1585
      %1595 = vst [vmem:[#allocation2 + $0x70] sm:$0xff] %v1586
      %1596 = vst [vmem:[#allocation2 + $0x78] sm:$0xff] %v1587
      %1597 = vst.msk [vmem:[#allocation2 + $0x80] sm:$0xff] %vm1542, %v1582
      %1598 = vrot.lane.b32.xlu0 %v1533, 72
      %v1599 = vpop.permute.xlu0 %1598
      %1600 = vrot.lane.b32.xlu0 %v1534, 72
      %v1601 = vpop.permute.xlu0 %1600
      %1602 = vrot.lane.b32.xlu0 %v1535, 72
      %v1603 = vpop.permute.xlu0 %1602
      %1604 = vrot.lane.b32.xlu0 %v1536, 72
      %v1605 = vpop.permute.xlu0 %1604
      %1606 = vrot.lane.b32.xlu0 %v1537, 72
      %v1607 = vpop.permute.xlu0 %1606
      %v1608 = vsel %vm572, %v1599, %v1601
      %v1609 = vsel %vm572, %v1601, %v1603
      %v1610 = vsel %vm572, %v1603, %v1605
      %v1611 = vsel %vm572, %v1605, %v1607
      %1617 = vst [vmem:[#allocation2 + $0x90] sm:$0xff] %v1608
      %1618 = vst [vmem:[#allocation2 + $0x98] sm:$0xff] %v1609
      %1619 = vst [vmem:[#allocation2 + $0xa0] sm:$0xff] %v1610
      %1620 = vst [vmem:[#allocation2 + $0xa8] sm:$0xff] %v1611
      %1621 = vst.msk [vmem:[#allocation2 + $0xb0] sm:$0xff] %vm1542, %v1607
      %1622 = vrot.lane.b32.xlu0 %v1533, 70
      %v1623 = vpop.permute.xlu0 %1622
      %1624 = vrot.lane.b32.xlu0 %v1534, 70
      %v1625 = vpop.permute.xlu0 %1624
      %1626 = vrot.lane.b32.xlu0 %v1535, 70
      %v1627 = vpop.permute.xlu0 %1626
      %1628 = vrot.lane.b32.xlu0 %v1536, 70
      %v1629 = vpop.permute.xlu0 %1628
      %1630 = vrot.lane.b32.xlu0 %v1537, 70
      %v1631 = vpop.permute.xlu0 %1630
      %v1632 = vsel %vm638, %v1623, %v1625
      %v1633 = vsel %vm638, %v1625, %v1627
      %v1634 = vsel %vm638, %v1627, %v1629
      %v1635 = vsel %vm638, %v1629, %v1631
      %1641 = vst [vmem:[#allocation2 + $0xc0] sm:$0xff] %v1632
      %1642 = vst [vmem:[#allocation2 + $0xc8] sm:$0xff] %v1633
      %1643 = vst [vmem:[#allocation2 + $0xd0] sm:$0xff] %v1634
      %1644 = vst [vmem:[#allocation2 + $0xd8] sm:$0xff] %v1635
      %1645 = vst.msk [vmem:[#allocation2 + $0xe0] sm:$0xff] %vm1542, %v1631
      %1646 = vrot.lane.b32.xlu0 %v1533, 68
      %v1647 = vpop.permute.xlu0 %1646
      %1648 = vrot.lane.b32.xlu0 %v1534, 68
      %v1649 = vpop.permute.xlu0 %1648
      %1650 = vrot.lane.b32.xlu0 %v1535, 68
      %v1651 = vpop.permute.xlu0 %1650
      %1652 = vrot.lane.b32.xlu0 %v1536, 68
      %v1653 = vpop.permute.xlu0 %1652
      %1654 = vrot.lane.b32.xlu0 %v1537, 68
      %v1655 = vpop.permute.xlu0 %1654
      %vm1656 = vcmask 556032
      %v1657 = vsel %vm1656, %v1647, %v1649
      %v1658 = vsel %vm1656, %v1649, %v1651
      %v1659 = vsel %vm1656, %v1651, %v1653
      %v1660 = vsel %vm1656, %v1653, %v1655
      %1666 = vst [vmem:[#allocation2 + $0xf0] sm:$0xff] %v1657
      %1667 = vst [vmem:[#allocation2 + $0xf8] sm:$0xff] %v1658
      %1668 = vst [vmem:[#allocation2 + $0x100] sm:$0xff] %v1659
      %1669 = vst [vmem:[#allocation2 + $0x108] sm:$0xff] %v1660
      %1670 = vst.msk [vmem:[#allocation2 + $0x110] sm:$0xff] %vm1542, %v1655
      %1671 = vrot.lane.b32.xlu0 %v1533, 16
      %v1672 = vpop.permute.xlu0 %1671
      %1673 = vrot.lane.b32.xlu0 %v1534, 16
      %v1674 = vpop.permute.xlu0 %1673
      %1675 = vrot.lane.b32.xlu0 %v1535, 16
      %v1676 = vpop.permute.xlu0 %1675
      %1677 = vrot.lane.b32.xlu0 %v1536, 16
      %v1678 = vpop.permute.xlu0 %1677
      %1679 = vrot.lane.b32.xlu0 %v1537, 16
      %v1680 = vpop.permute.xlu0 %1679
      %vm1681 = vcmask 130048
      %v1682 = vsel %vm1681, %v1672, %v1674
      %v1683 = vsel %vm1681, %v1674, %v1676
      %v1684 = vsel %vm1681, %v1676, %v1678
      %v1685 = vsel %vm1681, %v1678, %v1680
      %1691 = vst [vmem:[#allocation2 + $0x120] sm:$0xff] %v1682
      %1692 = vst [vmem:[#allocation2 + $0x128] sm:$0xff] %v1683
      %1693 = vst [vmem:[#allocation2 + $0x130] sm:$0xff] %v1684
      %1694 = vst [vmem:[#allocation2 + $0x138] sm:$0xff] %v1685
      %1695 = vst.msk [vmem:[#allocation2 + $0x140] sm:$0xff] %vm1542, %v1680
      %1696 = vrot.lane.b32.xlu0 %v1533, 14
      %v1697 = vpop.permute.xlu0 %1696
      %1698 = vrot.lane.b32.xlu0 %v1534, 14
      %v1699 = vpop.permute.xlu0 %1698
      %1700 = vrot.lane.b32.xlu0 %v1535, 14
      %v1701 = vpop.permute.xlu0 %1700
      %1702 = vrot.lane.b32.xlu0 %v1536, 14
      %v1703 = vpop.permute.xlu0 %1702
      %1704 = vrot.lane.b32.xlu0 %v1537, 14
      %v1705 = vpop.permute.xlu0 %1704
      %vm1706 = vcmask 113664
      %v1707 = vsel %vm1706, %v1697, %v1699
      %v1708 = vsel %vm1706, %v1699, %v1701
      %v1709 = vsel %vm1706, %v1701, %v1703
      %v1710 = vsel %vm1706, %v1703, %v1705
      %1716 = vst [vmem:[#allocation2 + $0x150] sm:$0xff] %v1707
      %1717 = vst [vmem:[#allocation2 + $0x158] sm:$0xff] %v1708
      %1718 = vst [vmem:[#allocation2 + $0x160] sm:$0xff] %v1709
      %1719 = vst [vmem:[#allocation2 + $0x168] sm:$0xff] %v1710
      %1720 = vst.msk [vmem:[#allocation2 + $0x170] sm:$0xff] %vm1542, %v1705
      %1721 = vrot.lane.b32.xlu0 %v1533, 12
      %v1722 = vpop.permute.xlu0 %1721
      %1723 = vrot.lane.b32.xlu0 %v1534, 12
      %v1724 = vpop.permute.xlu0 %1723
      %1725 = vrot.lane.b32.xlu0 %v1535, 12
      %v1726 = vpop.permute.xlu0 %1725
      %1727 = vrot.lane.b32.xlu0 %v1536, 12
      %v1728 = vpop.permute.xlu0 %1727
      %1729 = vrot.lane.b32.xlu0 %v1537, 12
      %v1730 = vpop.permute.xlu0 %1729
      %vm1731 = vcmask 97280
      %v1732 = vsel %vm1731, %v1722, %v1724
      %v1733 = vsel %vm1731, %v1724, %v1726
      %v1734 = vsel %vm1731, %v1726, %v1728
      %v1735 = vsel %vm1731, %v1728, %v1730
      %1741 = vst [vmem:[#allocation2 + $0x180] sm:$0xff] %v1732
      %1742 = vst [vmem:[#allocation2 + $0x188] sm:$0xff] %v1733
      %1743 = vst [vmem:[#allocation2 + $0x190] sm:$0xff] %v1734
      %1744 = vst [vmem:[#allocation2 + $0x198] sm:$0xff] %v1735
      %1745 = vst.msk [vmem:[#allocation2 + $0x1a0] sm:$0xff] %vm1542, %v1730
      %v1746 = vld [vmem:[#allocation2] sm:$0xff]
      %v1747 = vld [vmem:[#allocation2 + $0x8] sm:$0xff]
      %v1748 = vld [vmem:[#allocation2 + $0x10] sm:$0xff]
      %v1749 = vld [vmem:[#allocation2 + $0x18] sm:$0xff]
      %v1750 = vld [vmem:[#allocation2 + $0x20] sm:$0xff]
      %v1751 = vld [vmem:[#allocation2 + $0x30] sm:$0xff]
      %v1752 = vld [vmem:[#allocation2 + $0x38] sm:$0xff]
      %v1753 = vld [vmem:[#allocation2 + $0x40] sm:$0xff]
      %v1754 = vld [vmem:[#allocation2 + $0x48] sm:$0xff]
      %v1755 = vld [vmem:[#allocation2 + $0x50] sm:$0xff]
      %v1756 = vld [vmem:[#allocation2 + $0x60] sm:$0xff]
      %v1757 = vld [vmem:[#allocation2 + $0x68] sm:$0xff]
      %v1758 = vld [vmem:[#allocation2 + $0x70] sm:$0xff]
      %v1759 = vld [vmem:[#allocation2 + $0x78] sm:$0xff]
      %v1760 = vld [vmem:[#allocation2 + $0x80] sm:$0xff]
      %v1761 = vld [vmem:[#allocation2 + $0x90] sm:$0xff]
      %v1762 = vld [vmem:[#allocation2 + $0x98] sm:$0xff]
      %v1763 = vld [vmem:[#allocation2 + $0xa0] sm:$0xff]
      %v1764 = vld [vmem:[#allocation2 + $0xa8] sm:$0xff]
      %v1765 = vld [vmem:[#allocation2 + $0xb0] sm:$0xff]
      %v1766 = vld [vmem:[#allocation2 + $0xc0] sm:$0xff]
      %v1767 = vld [vmem:[#allocation2 + $0xc8] sm:$0xff]
      %v1768 = vld [vmem:[#allocation2 + $0xd0] sm:$0xff]
      %v1769 = vld [vmem:[#allocation2 + $0xd8] sm:$0xff]
      %v1770 = vld [vmem:[#allocation2 + $0xe0] sm:$0xff]
      %v1771 = vld [vmem:[#allocation2 + $0xf0] sm:$0xff]
      %v1772 = vld [vmem:[#allocation2 + $0xf8] sm:$0xff]
      %v1773 = vld [vmem:[#allocation2 + $0x100] sm:$0xff]
      %v1774 = vld [vmem:[#allocation2 + $0x108] sm:$0xff]
      %v1775 = vld [vmem:[#allocation2 + $0x110] sm:$0xff]
      %v1776 = vld [vmem:[#allocation2 + $0x120] sm:$0xff]
      %v1777 = vld [vmem:[#allocation2 + $0x128] sm:$0xff]
      %v1778 = vld [vmem:[#allocation2 + $0x130] sm:$0xff]
      %v1779 = vld [vmem:[#allocation2 + $0x138] sm:$0xff]
      %v1780 = vld [vmem:[#allocation2 + $0x140] sm:$0xff]
      %v1781 = vld [vmem:[#allocation2 + $0x150] sm:$0xff]
      %v1782 = vld [vmem:[#allocation2 + $0x158] sm:$0xff]
      %v1783 = vld [vmem:[#allocation2 + $0x160] sm:$0xff]
      %v1784 = vld [vmem:[#allocation2 + $0x168] sm:$0xff]
      %v1785 = vld [vmem:[#allocation2 + $0x170] sm:$0xff]
      %v1786 = vld [vmem:[#allocation2 + $0x180] sm:$0xff]
      %v1787 = vld [vmem:[#allocation2 + $0x188] sm:$0xff]
      %v1788 = vld [vmem:[#allocation2 + $0x190] sm:$0xff]
      %v1789 = vld [vmem:[#allocation2 + $0x198] sm:$0xff]
      %v1790 = vld [vmem:[#allocation2 + $0x1a0] sm:$0xff]
      %v1791 = vld [vmem:[%s5] sm:$0xff]
      %v1792 = vld [vmem:[%s5 + $0x8] sm:$0xff]
      %v1793 = vld [vmem:[%s6] sm:$0xff]
      %v1794 = vld [vmem:[%s6 + $0x8] sm:$0xff]
      %1796 = vset.pattern.permute.xlu0 0
      %1797 = vperm.xlu0 %1796, %v1793
      %v1798 = vpop.permute.xlu0 %1797
      %1801 = vset.pattern.permute.xlu0 0
      %1802 = vperm.xlu0 %1801, %v1794
      %v1803 = vpop.permute.xlu0 %1802
      %v1806 = vsel %vm572, %v1791, 0
      %v1809 = vsel %vm572, %v1792, 0
      %1811 = vmatprep.subr.mxu0 %v1747
      %1812 = vmatpush1.msra.mxu0 %v1746
      %1813 = vmatprep.subr.mxu0 %v1752
      %1814 = vmatpush1.msra.mxu0 %v1751
      %1815 = vmatprep.subr.mxu0 %v1757
      %1816 = vmatpush1.msra.mxu0 %v1756
      %1817 = vmatprep.subr.mxu0 %v1762
      %1818 = vmatpush1.msra.mxu0 %v1761
      %1819 = vmatprep.subr.mxu0 %v1767
      %1820 = vmatpush1.msra.mxu0 %v1766
      %1821 = vmatprep.subr.mxu0 %v1772
      %1822 = vmatpush1.msra.mxu0 %v1771
      %1823 = vmatprep.subr.mxu0 %v1777
      %1824 = vmatpush1.msra.mxu0 %v1776
      %1825 = vmatprep.subr.mxu0 %v1782
      %1826 = vmatpush1.msra.mxu0 %v1781
      %1827 = vmatprep.subr.mxu0 %v1787
      %1828 = vmatpush1.msra.mxu0 %v1786
      %1829 = vmatprep.subr.mxu0 0.0
      %1830 = vmatpush1.msra.mxu0 0.0
      %1831 = vmatprep.subr.mxu0 0.0
      %1832 = vmatpush1.msra.mxu0 0.0
      %1833 = vmatprep.subr.mxu0 0.0
      %1834 = vmatpush1.msra.mxu0 0.0
      %1835 = vmatprep.subr.mxu0 0.0
      %1836 = vmatpush1.msra.mxu0 0.0
      %1837 = vmatprep.subr.mxu0 0.0
      %1838 = vmatpush1.msra.mxu0 0.0
      %1839 = vmatprep.subr.mxu0 0.0
      %1840 = vmatpush1.msra.mxu0 0.0
      %1841 = vmatprep.subr.mxu0 0.0
      %1842 = vmatpush1.msra.mxu0 0.0
      %1843 = vmatprep.subr.mxu0 0.0
      %1844 = vmatpush1.msra.mxu0 0.0
      %1845 = vmatprep.subr.mxu0 0.0
      %1846 = vmatpush1.msra.mxu0 0.0
      %1847 = vmatprep.subr.mxu0 0.0
      %1848 = vmatpush1.msra.mxu0 0.0
      %1849 = vmatprep.subr.mxu0 0.0
      %1850 = vmatpush1.msra.mxu0 0.0
      %1851 = vmatprep.subr.mxu0 0.0
      %1852 = vmatpush1.msra.mxu0 0.0
      %1853 = vmatprep.subr.mxu0 0.0
      %1854 = vmatpush1.msra.mxu0 0.0
      %1855 = vmatprep.subr.mxu0 0.0
      %1856 = vmatpush1.msra.mxu0 0.0
      %1857 = vmatprep.subr.mxu0 0.0
      %1858 = vmatpush1.msra.mxu0 0.0
      %1859 = vmatprep.subr.mxu0 0.0
      %1860 = vmatpush1.msra.mxu0 0.0
      %1861 = vmatprep.subr.mxu0 0.0
      %1862 = vmatpush1.msra.mxu0 0.0
      %1863 = vmatprep.subr.mxu0 0.0
      %1864 = vmatpush1.msra.mxu0 0.0
      %1865 = vmatprep.subr.mxu0 0.0
      %1866 = vmatpush1.msra.mxu0 0.0
      %1867 = vmatprep.subr.mxu0 0.0
      %1868 = vmatpush1.msra.mxu0 0.0
      %1869 = vmatprep.subr.mxu0 0.0
      %1870 = vmatpush1.msra.mxu0 0.0
      %1871 = vmatprep.subr.mxu0 0.0
      %1872 = vmatpush1.msra.mxu0 0.0
      %1873 = vmatprep.subr.mxu0 0.0
      %1874 = vmatpush1.msra.mxu0 0.0
      %1875 = vmatprep.mubr.f32.mxu0 0.0
      %1876 = vmatmul.mubr.f32.gmra.mrb[0].mxu0 %v1806
      %v1877 = vpop.f32.mrb[0].mxu0
      %v1878 = vadd.f32 %v1798, %v1877
      %v1879 = vpop.f32.mrb[0].mxu0
      %v1880 = vadd.f32 %v1798, %v1879
      %1881 = vmatprep.mubr.f32.mxu0 0.0
      %1882 = vmatmul.mubr.f32.gmra.mrb[0].mxu0 %v1809
      %v1883 = vpop.f32.mrb[0].mxu0
      %v1884 = vadd.f32 %v1803, %v1883
      %v1885 = vpop.f32.mrb[0].mxu0
      %v1886 = vadd.f32 %v1803, %v1885
      %1887 = vdwg.mxu0
      %1888 = vmatprep.subr.mxu0 %v1749
      %1889 = vmatpush1.msra.mxu0 %v1748
      %1890 = vmatprep.subr.mxu0 %v1754
      %1891 = vmatpush1.msra.mxu0 %v1753
      %1892 = vmatprep.subr.mxu0 %v1759
      %1893 = vmatpush1.msra.mxu0 %v1758
      %1894 = vmatprep.subr.mxu0 %v1764
      %1895 = vmatpush1.msra.mxu0 %v1763
      %1896 = vmatprep.subr.mxu0 %v1769
      %1897 = vmatpush1.msra.mxu0 %v1768
      %1898 = vmatprep.subr.mxu0 %v1774
      %1899 = vmatpush1.msra.mxu0 %v1773
      %1900 = vmatprep.subr.mxu0 %v1779
      %1901 = vmatpush1.msra.mxu0 %v1778
      %1902 = vmatprep.subr.mxu0 %v1784
      %1903 = vmatpush1.msra.mxu0 %v1783
      %1904 = vmatprep.subr.mxu0 %v1789
      %1905 = vmatpush1.msra.mxu0 %v1788
      %1906 = vmatprep.subr.mxu0 0.0
      %1907 = vmatpush1.msra.mxu0 0.0
      %1908 = vmatprep.subr.mxu0 0.0
      %1909 = vmatpush1.msra.mxu0 0.0
      %1910 = vmatprep.subr.mxu0 0.0
      %1911 = vmatpush1.msra.mxu0 0.0
      %1912 = vmatprep.subr.mxu0 0.0
      %1913 = vmatpush1.msra.mxu0 0.0
      %1914 = vmatprep.subr.mxu0 0.0
      %1915 = vmatpush1.msra.mxu0 0.0
      %1916 = vmatprep.subr.mxu0 0.0
      %1917 = vmatpush1.msra.mxu0 0.0
      %1918 = vmatprep.subr.mxu0 0.0
      %1919 = vmatpush1.msra.mxu0 0.0
      %1920 = vmatprep.subr.mxu0 0.0
      %1921 = vmatpush1.msra.mxu0 0.0
      %1922 = vmatprep.subr.mxu0 0.0
      %1923 = vmatpush1.msra.mxu0 0.0
      %1924 = vmatprep.subr.mxu0 0.0
      %1925 = vmatpush1.msra.mxu0 0.0
      %1926 = vmatprep.subr.mxu0 0.0
      %1927 = vmatpush1.msra.mxu0 0.0
      %1928 = vmatprep.subr.mxu0 0.0
      %1929 = vmatpush1.msra.mxu0 0.0
      %1930 = vmatprep.subr.mxu0 0.0
      %1931 = vmatpush1.msra.mxu0 0.0
      %1932 = vmatprep.subr.mxu0 0.0
      %1933 = vmatpush1.msra.mxu0 0.0
      %1934 = vmatprep.subr.mxu0 0.0
      %1935 = vmatpush1.msra.mxu0 0.0
      %1936 = vmatprep.subr.mxu0 0.0
      %1937 = vmatpush1.msra.mxu0 0.0
      %1938 = vmatprep.subr.mxu0 0.0
      %1939 = vmatpush1.msra.mxu0 0.0
      %1940 = vmatprep.subr.mxu0 0.0
      %1941 = vmatpush1.msra.mxu0 0.0
      %1942 = vmatprep.subr.mxu0 0.0
      %1943 = vmatpush1.msra.mxu0 0.0
      %1944 = vmatprep.subr.mxu0 0.0
      %1945 = vmatpush1.msra.mxu0 0.0
      %1946 = vmatprep.subr.mxu0 0.0
      %1947 = vmatpush1.msra.mxu0 0.0
      %1948 = vmatprep.subr.mxu0 0.0
      %1949 = vmatpush1.msra.mxu0 0.0
      %1950 = vmatprep.subr.mxu0 0.0
      %1951 = vmatpush1.msra.mxu0 0.0
      %1952 = vmatprep.mubr.f32.mxu0 0.0
      %1953 = vmatmul.mubr.f32.gmra.mrb[0].mxu0 %v1806
      %v1954 = vpop.f32.mrb[0].mxu0
      %v1955 = vadd.f32 %v1798, %v1954
      %v1956 = vpop.f32.mrb[0].mxu0
      %v1957 = vadd.f32 %v1798, %v1956
      %1958 = vmatprep.mubr.f32.mxu0 0.0
      %1959 = vmatmul.mubr.f32.gmra.mrb[0].mxu0 %v1809
      %v1960 = vpop.f32.mrb[0].mxu0
      %v1961 = vadd.f32 %v1803, %v1960
      %v1962 = vpop.f32.mrb[0].mxu0
      %v1963 = vadd.f32 %v1803, %v1962
      %1964 = vdwg.mxu0
      %1965 = vmatprep.subr.mxu0 0.0
      %1966 = vmatpush1.msra.mxu0 %v1750
      %1967 = vmatprep.subr.mxu0 0.0
      %1968 = vmatpush1.msra.mxu0 %v1755
      %1969 = vmatprep.subr.mxu0 0.0
      %1970 = vmatpush1.msra.mxu0 %v1760
      %1971 = vmatprep.subr.mxu0 0.0
      %1972 = vmatpush1.msra.mxu0 %v1765
      %1973 = vmatprep.subr.mxu0 0.0
      %1974 = vmatpush1.msra.mxu0 %v1770
      %1975 = vmatprep.subr.mxu0 0.0
      %1976 = vmatpush1.msra.mxu0 %v1775
      %1977 = vmatprep.subr.mxu0 0.0
      %1978 = vmatpush1.msra.mxu0 %v1780
      %1979 = vmatprep.subr.mxu0 0.0
      %1980 = vmatpush1.msra.mxu0 %v1785
      %1981 = vmatprep.subr.mxu0 0.0
      %1982 = vmatpush1.msra.mxu0 %v1790
      %1983 = vmatprep.subr.mxu0 0.0
      %1984 = vmatpush1.msra.mxu0 0.0
      %1985 = vmatprep.subr.mxu0 0.0
      %1986 = vmatpush1.msra.mxu0 0.0
      %1987 = vmatprep.subr.mxu0 0.0
      %1988 = vmatpush1.msra.mxu0 0.0
      %1989 = vmatprep.subr.mxu0 0.0
      %1990 = vmatpush1.msra.mxu0 0.0
      %1991 = vmatprep.subr.mxu0 0.0
      %1992 = vmatpush1.msra.mxu0 0.0
      %1993 = vmatprep.subr.mxu0 0.0
      %1994 = vmatpush1.msra.mxu0 0.0
      %1995 = vmatprep.subr.mxu0 0.0
      %1996 = vmatpush1.msra.mxu0 0.0
      %1997 = vmatprep.subr.mxu0 0.0
      %1998 = vmatpush1.msra.mxu0 0.0
      %1999 = vmatprep.subr.mxu0 0.0
      %2000 = vmatpush1.msra.mxu0 0.0
      %2001 = vmatprep.subr.mxu0 0.0
      %2002 = vmatpush1.msra.mxu0 0.0
      %2003 = vmatprep.subr.mxu0 0.0
      %2004 = vmatpush1.msra.mxu0 0.0
      %2005 = vmatprep.subr.mxu0 0.0
      %2006 = vmatpush1.msra.mxu0 0.0
      %2007 = vmatprep.subr.mxu0 0.0
      %2008 = vmatpush1.msra.mxu0 0.0
      %2009 = vmatprep.subr.mxu0 0.0
      %2010 = vmatpush1.msra.mxu0 0.0
      %2011 = vmatprep.subr.mxu0 0.0
      %2012 = vmatpush1.msra.mxu0 0.0
      %2013 = vmatprep.subr.mxu0 0.0
      %2014 = vmatpush1.msra.mxu0 0.0
      %2015 = vmatprep.subr.mxu0 0.0
      %2016 = vmatpush1.msra.mxu0 0.0
      %2017 = vmatprep.subr.mxu0 0.0
      %2018 = vmatpush1.msra.mxu0 0.0
      %2019 = vmatprep.subr.mxu0 0.0
      %2020 = vmatpush1.msra.mxu0 0.0
      %2021 = vmatprep.subr.mxu0 0.0
      %2022 = vmatpush1.msra.mxu0 0.0
      %2023 = vmatprep.subr.mxu0 0.0
      %2024 = vmatpush1.msra.mxu0 0.0
      %2025 = vmatprep.subr.mxu0 0.0
      %2026 = vmatpush1.msra.mxu0 0.0
      %2027 = vmatprep.subr.mxu0 0.0
      %2028 = vmatpush1.msra.mxu0 0.0
      %2029 = vmatprep.mubr.f32.mxu0 0.0
      %2030 = vmatmul.mubr.f32.gmra.mrb[0].mxu0 %v1806
      %v2031 = vpop.f32.mrb[0].mxu0
      %v2032 = vadd.f32 %v1798, %v2031
      %v2033 = vpop.f32.mrb[0].mxu0
      %2034 = vmatprep.mubr.f32.mxu0 0.0
      %2035 = vmatmul.mubr.f32.gmra.mrb[0].mxu0 %v1809
      %v2036 = vpop.f32.mrb[0].mxu0
      %v2037 = vadd.f32 %v1803, %v2036
      %v2038 = vpop.f32.mrb[0].mxu0
      %2039 = vdwg.mxu0
      %v2040 = vmax.f32 %v1878, 0.0
      %v2041 = vmax.f32 %v1880, 0.0
      %v2042 = vmax.f32 %v1955, 0.0
      %v2043 = vmax.f32 %v1957, 0.0
      %v2044 = vmax.f32 %v2032, 0.0
      %v2045 = vmax.f32 %v1884, 0.0
      %v2046 = vmax.f32 %v1886, 0.0
      %v2047 = vmax.f32 %v1961, 0.0
      %v2048 = vmax.f32 %v1963, 0.0
      %v2049 = vmax.f32 %v2037, 0.0
      %2050 = vst [vmem:[#allocation2] sm:$0xff] %v2040
      %2051 = vst [vmem:[#allocation2 + $0x8] sm:$0xff] %v2041
      %2052 = vst [vmem:[#allocation2 + $0x10] sm:$0xff] %v2042
      %vm2053 = vcmask 187392
      %2054 = vst.msk [vmem:[#allocation2 + $0x18] sm:$0xff] %vm2053, %v2043
      %2055 = vst [vmem:[#allocation2 + $0x30] sm:$0xff] %v2045
      %2056 = vst [vmem:[#allocation2 + $0x38] sm:$0xff] %v2046
      %2057 = vst [vmem:[#allocation2 + $0x40] sm:$0xff] %v2047
      %2058 = vst.msk [vmem:[#allocation2 + $0x48] sm:$0xff] %vm2053, %v2048
      %2067 = vrot.lane.b32.xlu0 %v2040, 126
      %v2068 = vpop.permute.xlu0 %2067
      %2069 = vrot.lane.b32.xlu0 %v2041, 126
      %v2070 = vpop.permute.xlu0 %2069
      %2071 = vrot.lane.b32.xlu0 %v2042, 126
      %v2072 = vpop.permute.xlu0 %2071
      %2073 = vrot.lane.b32.xlu0 %v2043, 126
      %v2074 = vpop.permute.xlu0 %2073
      %2075 = vrot.lane.b32.xlu0 %v2045, 126
      %v2076 = vpop.permute.xlu0 %2075
      %2077 = vrot.lane.b32.xlu0 %v2046, 126
      %v2078 = vpop.permute.xlu0 %2077
      %2079 = vrot.lane.b32.xlu0 %v2047, 126
      %v2080 = vpop.permute.xlu0 %2079
      %2081 = vrot.lane.b32.xlu0 %v2048, 126
      %v2082 = vpop.permute.xlu0 %2081
      %v2083 = vsel %vm449, %v2068, %v2070
      %v2084 = vsel %vm449, %v2070, %v2072
      %v2085 = vsel %vm449, %v2072, %v2074
      %v2086 = vsel %vm449, %v2076, %v2078
      %v2087 = vsel %vm449, %v2078, %v2080
      %v2088 = vsel %vm449, %v2080, %v2082
      %2097 = vst [vmem:[#allocation2 + $0x60] sm:$0xff] %v2083
      %2098 = vst [vmem:[#allocation2 + $0x68] sm:$0xff] %v2084
      %2099 = vst [vmem:[#allocation2 + $0x70] sm:$0xff] %v2085
      %2100 = vst.msk [vmem:[#allocation2 + $0x78] sm:$0xff] %vm2053, %v2074
      %2101 = vst [vmem:[#allocation2 + $0x90] sm:$0xff] %v2086
      %2102 = vst [vmem:[#allocation2 + $0x98] sm:$0xff] %v2087
      %2103 = vst [vmem:[#allocation2 + $0xa0] sm:$0xff] %v2088
      %2104 = vst.msk [vmem:[#allocation2 + $0xa8] sm:$0xff] %vm2053, %v2082
      %2105 = vrot.lane.b32.xlu0 %v2040, 124
      %v2106 = vpop.permute.xlu0 %2105
      %2107 = vrot.lane.b32.xlu0 %v2041, 124
      %v2108 = vpop.permute.xlu0 %2107
      %2109 = vrot.lane.b32.xlu0 %v2042, 124
      %v2110 = vpop.permute.xlu0 %2109
      %2111 = vrot.lane.b32.xlu0 %v2043, 124
      %v2112 = vpop.permute.xlu0 %2111
      %2113 = vrot.lane.b32.xlu0 %v2045, 124
      %v2114 = vpop.permute.xlu0 %2113
      %2115 = vrot.lane.b32.xlu0 %v2046, 124
      %v2116 = vpop.permute.xlu0 %2115
      %2117 = vrot.lane.b32.xlu0 %v2047, 124
      %v2118 = vpop.permute.xlu0 %2117
      %2119 = vrot.lane.b32.xlu0 %v2048, 124
      %v2120 = vpop.permute.xlu0 %2119
      %v2121 = vsel %vm1583, %v2106, %v2108
      %v2122 = vsel %vm1583, %v2108, %v2110
      %v2123 = vsel %vm1583, %v2110, %v2112
      %v2124 = vsel %vm1583, %v2114, %v2116
      %v2125 = vsel %vm1583, %v2116, %v2118
      %v2126 = vsel %vm1583, %v2118, %v2120
      %2135 = vst [vmem:[#allocation2 + $0xc0] sm:$0xff] %v2121
      %2136 = vst [vmem:[#allocation2 + $0xc8] sm:$0xff] %v2122
      %2137 = vst [vmem:[#allocation2 + $0xd0] sm:$0xff] %v2123
      %2138 = vst.msk [vmem:[#allocation2 + $0xd8] sm:$0xff] %vm2053, %v2112
      %2139 = vst [vmem:[#allocation2 + $0xf0] sm:$0xff] %v2124
      %2140 = vst [vmem:[#allocation2 + $0xf8] sm:$0xff] %v2125
      %2141 = vst [vmem:[#allocation2 + $0x100] sm:$0xff] %v2126
      %2142 = vst.msk [vmem:[#allocation2 + $0x108] sm:$0xff] %vm2053, %v2120
      %2143 = vrot.lane.b32.xlu0 %v2040, 72
      %v2144 = vpop.permute.xlu0 %2143
      %2145 = vrot.lane.b32.xlu0 %v2041, 72
      %v2146 = vpop.permute.xlu0 %2145
      %2147 = vrot.lane.b32.xlu0 %v2042, 72
      %v2148 = vpop.permute.xlu0 %2147
      %2149 = vrot.lane.b32.xlu0 %v2043, 72
      %v2150 = vpop.permute.xlu0 %2149
      %2151 = vrot.lane.b32.xlu0 %v2045, 72
      %v2152 = vpop.permute.xlu0 %2151
      %2153 = vrot.lane.b32.xlu0 %v2046, 72
      %v2154 = vpop.permute.xlu0 %2153
      %2155 = vrot.lane.b32.xlu0 %v2047, 72
      %v2156 = vpop.permute.xlu0 %2155
      %2157 = vrot.lane.b32.xlu0 %v2048, 72
      %v2158 = vpop.permute.xlu0 %2157
      %v2159 = vsel %vm572, %v2144, %v2146
      %v2160 = vsel %vm572, %v2146, %v2148
      %v2161 = vsel %vm572, %v2148, %v2150
      %v2162 = vsel %vm572, %v2152, %v2154
      %v2163 = vsel %vm572, %v2154, %v2156
      %v2164 = vsel %vm572, %v2156, %v2158
      %2173 = vst [vmem:[#allocation2 + $0x120] sm:$0xff] %v2159
      %2174 = vst [vmem:[#allocation2 + $0x128] sm:$0xff] %v2160
      %2175 = vst [vmem:[#allocation2 + $0x130] sm:$0xff] %v2161
      %2176 = vst.msk [vmem:[#allocation2 + $0x138] sm:$0xff] %vm2053, %v2150
      %2177 = vst [vmem:[#allocation2 + $0x150] sm:$0xff] %v2162
      %2178 = vst [vmem:[#allocation2 + $0x158] sm:$0xff] %v2163
      %2179 = vst [vmem:[#allocation2 + $0x160] sm:$0xff] %v2164
      %2180 = vst.msk [vmem:[#allocation2 + $0x168] sm:$0xff] %vm2053, %v2158
      %2181 = vrot.lane.b32.xlu0 %v2040, 70
      %v2182 = vpop.permute.xlu0 %2181
      %2183 = vrot.lane.b32.xlu0 %v2041, 70
      %v2184 = vpop.permute.xlu0 %2183
      %2185 = vrot.lane.b32.xlu0 %v2042, 70
      %v2186 = vpop.permute.xlu0 %2185
      %2187 = vrot.lane.b32.xlu0 %v2043, 70
      %v2188 = vpop.permute.xlu0 %2187
      %2189 = vrot.lane.b32.xlu0 %v2045, 70
      %v2190 = vpop.permute.xlu0 %2189
      %2191 = vrot.lane.b32.xlu0 %v2046, 70
      %v2192 = vpop.permute.xlu0 %2191
      %2193 = vrot.lane.b32.xlu0 %v2047, 70
      %v2194 = vpop.permute.xlu0 %2193
      %2195 = vrot.lane.b32.xlu0 %v2048, 70
      %v2196 = vpop.permute.xlu0 %2195
      %v2197 = vsel %vm638, %v2182, %v2184
      %v2198 = vsel %vm638, %v2184, %v2186
      %v2199 = vsel %vm638, %v2186, %v2188
      %v2200 = vsel %vm638, %v2190, %v2192
      %v2201 = vsel %vm638, %v2192, %v2194
      %v2202 = vsel %vm638, %v2194, %v2196
      %2211 = vst [vmem:[#allocation2 + $0x180] sm:$0xff] %v2197
      %2212 = vst [vmem:[#allocation2 + $0x188] sm:$0xff] %v2198
      %2213 = vst [vmem:[#allocation2 + $0x190] sm:$0xff] %v2199
      %2214 = vst.msk [vmem:[#allocation2 + $0x198] sm:$0xff] %vm2053, %v2188
      %2215 = vst [vmem:[#allocation2 + $0x1b0] sm:$0xff] %v2200
      %2216 = vst [vmem:[#allocation2 + $0x1b8] sm:$0xff] %v2201
      %2217 = vst [vmem:[#allocation2 + $0x1c0] sm:$0xff] %v2202
      %2218 = vst.msk [vmem:[#allocation2 + $0x1c8] sm:$0xff] %vm2053, %v2196
      %2219 = vrot.lane.b32.xlu0 %v2040, 68
      %v2220 = vpop.permute.xlu0 %2219
      %2221 = vrot.lane.b32.xlu0 %v2041, 68
      %v2222 = vpop.permute.xlu0 %2221
      %2223 = vrot.lane.b32.xlu0 %v2042, 68
      %v2224 = vpop.permute.xlu0 %2223
      %2225 = vrot.lane.b32.xlu0 %v2043, 68
      %v2226 = vpop.permute.xlu0 %2225
      %2227 = vrot.lane.b32.xlu0 %v2045, 68
      %v2228 = vpop.permute.xlu0 %2227
      %2229 = vrot.lane.b32.xlu0 %v2046, 68
      %v2230 = vpop.permute.xlu0 %2229
      %2231 = vrot.lane.b32.xlu0 %v2047, 68
      %v2232 = vpop.permute.xlu0 %2231
      %2233 = vrot.lane.b32.xlu0 %v2048, 68
      %v2234 = vpop.permute.xlu0 %2233
      %v2235 = vsel %vm1656, %v2220, %v2222
      %v2236 = vsel %vm1656, %v2222, %v2224
      %v2237 = vsel %vm1656, %v2224, %v2226
      %v2238 = vsel %vm1656, %v2228, %v2230
      %v2239 = vsel %vm1656, %v2230, %v2232
      %v2240 = vsel %vm1656, %v2232, %v2234
      %2249 = vst [vmem:[#allocation2 + $0x1e0] sm:$0xff] %v2235
      %2250 = vst [vmem:[#allocation2 + $0x1e8] sm:$0xff] %v2236
      %2251 = vst [vmem:[#allocation2 + $0x1f0] sm:$0xff] %v2237
      %2252 = vst.msk [vmem:[#allocation2 + $0x1f8] sm:$0xff] %vm2053, %v2226
      %2253 = vst [vmem:[#allocation2 + $0x210] sm:$0xff] %v2238
      %2254 = vst [vmem:[#allocation2 + $0x218] sm:$0xff] %v2239
      %2255 = vst [vmem:[#allocation2 + $0x220] sm:$0xff] %v2240
      %2256 = vst.msk [vmem:[#allocation2 + $0x228] sm:$0xff] %vm2053, %v2234
      %2259 = vrot.lane.b32.xlu0 %v2040, 16
      %v2260 = vpop.permute.xlu0 %2259
      %2261 = vrot.lane.b32.xlu0 %v2041, 16
      %v2262 = vpop.permute.xlu0 %2261
      %2263 = vrot.lane.b32.xlu0 %v2042, 16
      %v2264 = vpop.permute.xlu0 %2263
      %2265 = vrot.lane.b32.xlu0 %v2043, 16
      %v2266 = vpop.permute.xlu0 %2265
      %2267 = vrot.lane.b32.xlu0 %v2044, 16
      %v2268 = vpop.permute.xlu0 %2267
      %2269 = vrot.lane.b32.xlu0 %v2045, 16
      %v2270 = vpop.permute.xlu0 %2269
      %2271 = vrot.lane.b32.xlu0 %v2046, 16
      %v2272 = vpop.permute.xlu0 %2271
      %2273 = vrot.lane.b32.xlu0 %v2047, 16
      %v2274 = vpop.permute.xlu0 %2273
      %2275 = vrot.lane.b32.xlu0 %v2048, 16
      %v2276 = vpop.permute.xlu0 %2275
      %2277 = vrot.lane.b32.xlu0 %v2049, 16
      %v2278 = vpop.permute.xlu0 %2277
      %v2279 = vsel %vm1681, %v2260, %v2262
      %v2280 = vsel %vm1681, %v2262, %v2264
      %v2281 = vsel %vm1681, %v2264, %v2266
      %v2282 = vsel %vm1681, %v2266, %v2268
      %v2283 = vsel %vm1681, %v2270, %v2272
      %v2284 = vsel %vm1681, %v2272, %v2274
      %v2285 = vsel %vm1681, %v2274, %v2276
      %v2286 = vsel %vm1681, %v2276, %v2278
      %2295 = vst [vmem:[#allocation2 + $0x240] sm:$0xff] %v2279
      %2296 = vst [vmem:[#allocation2 + $0x248] sm:$0xff] %v2280
      %2297 = vst [vmem:[#allocation2 + $0x250] sm:$0xff] %v2281
      %2298 = vst.msk [vmem:[#allocation2 + $0x258] sm:$0xff] %vm2053, %v2282
      %2299 = vst [vmem:[#allocation2 + $0x270] sm:$0xff] %v2283
      %2300 = vst [vmem:[#allocation2 + $0x278] sm:$0xff] %v2284
      %2301 = vst [vmem:[#allocation2 + $0x280] sm:$0xff] %v2285
      %2302 = vst.msk [vmem:[#allocation2 + $0x288] sm:$0xff] %vm2053, %v2286
      %2303 = vrot.lane.b32.xlu0 %v2040, 14
      %v2304 = vpop.permute.xlu0 %2303
      %2305 = vrot.lane.b32.xlu0 %v2041, 14
      %v2306 = vpop.permute.xlu0 %2305
      %2307 = vrot.lane.b32.xlu0 %v2042, 14
      %v2308 = vpop.permute.xlu0 %2307
      %2309 = vrot.lane.b32.xlu0 %v2043, 14
      %v2310 = vpop.permute.xlu0 %2309
      %2311 = vrot.lane.b32.xlu0 %v2044, 14
      %v2312 = vpop.permute.xlu0 %2311
      %2313 = vrot.lane.b32.xlu0 %v2045, 14
      %v2314 = vpop.permute.xlu0 %2313
      %2315 = vrot.lane.b32.xlu0 %v2046, 14
      %v2316 = vpop.permute.xlu0 %2315
      %2317 = vrot.lane.b32.xlu0 %v2047, 14
      %v2318 = vpop.permute.xlu0 %2317
      %2319 = vrot.lane.b32.xlu0 %v2048, 14
      %v2320 = vpop.permute.xlu0 %2319
      %2321 = vrot.lane.b32.xlu0 %v2049, 14
      %v2322 = vpop.permute.xlu0 %2321
      %v2323 = vsel %vm1706, %v2304, %v2306
      %v2324 = vsel %vm1706, %v2306, %v2308
      %v2325 = vsel %vm1706, %v2308, %v2310
      %v2326 = vsel %vm1706, %v2310, %v2312
      %v2327 = vsel %vm1706, %v2314, %v2316
      %v2328 = vsel %vm1706, %v2316, %v2318
      %v2329 = vsel %vm1706, %v2318, %v2320
      %v2330 = vsel %vm1706, %v2320, %v2322
      %2339 = vst [vmem:[#allocation2 + $0x2a0] sm:$0xff] %v2323
      %2340 = vst [vmem:[#allocation2 + $0x2a8] sm:$0xff] %v2324
      %2341 = vst [vmem:[#allocation2 + $0x2b0] sm:$0xff] %v2325
      %2342 = vst.msk [vmem:[#allocation2 + $0x2b8] sm:$0xff] %vm2053, %v2326
      %2343 = vst [vmem:[#allocation2 + $0x2d0] sm:$0xff] %v2327
      %2344 = vst [vmem:[#allocation2 + $0x2d8] sm:$0xff] %v2328
      %2345 = vst [vmem:[#allocation2 + $0x2e0] sm:$0xff] %v2329
      %2346 = vst.msk [vmem:[#allocation2 + $0x2e8] sm:$0xff] %vm2053, %v2330
      %2347 = vrot.lane.b32.xlu0 %v2040, 12
      %v2348 = vpop.permute.xlu0 %2347
      %2349 = vrot.lane.b32.xlu0 %v2041, 12
      %v2350 = vpop.permute.xlu0 %2349
      %2351 = vrot.lane.b32.xlu0 %v2042, 12
      %v2352 = vpop.permute.xlu0 %2351
      %2353 = vrot.lane.b32.xlu0 %v2043, 12
      %v2354 = vpop.permute.xlu0 %2353
      %2355 = vrot.lane.b32.xlu0 %v2044, 12
      %v2356 = vpop.permute.xlu0 %2355
      %2357 = vrot.lane.b32.xlu0 %v2045, 12
      %v2358 = vpop.permute.xlu0 %2357
      %2359 = vrot.lane.b32.xlu0 %v2046, 12
      %v2360 = vpop.permute.xlu0 %2359
      %2361 = vrot.lane.b32.xlu0 %v2047, 12
      %v2362 = vpop.permute.xlu0 %2361
      %2363 = vrot.lane.b32.xlu0 %v2048, 12
      %v2364 = vpop.permute.xlu0 %2363
      %2365 = vrot.lane.b32.xlu0 %v2049, 12
      %v2366 = vpop.permute.xlu0 %2365
      %v2367 = vsel %vm1731, %v2348, %v2350
      %v2368 = vsel %vm1731, %v2350, %v2352
      %v2369 = vsel %vm1731, %v2352, %v2354
      %v2370 = vsel %vm1731, %v2354, %v2356
      %v2371 = vsel %vm1731, %v2358, %v2360
      %v2372 = vsel %vm1731, %v2360, %v2362
      %v2373 = vsel %vm1731, %v2362, %v2364
      %v2374 = vsel %vm1731, %v2364, %v2366
      %2383 = vst [vmem:[#allocation2 + $0x300] sm:$0xff] %v2367
      %2384 = vst [vmem:[#allocation2 + $0x308] sm:$0xff] %v2368
      %2385 = vst [vmem:[#allocation2 + $0x310] sm:$0xff] %v2369
      %2386 = vst.msk [vmem:[#allocation2 + $0x318] sm:$0xff] %vm2053, %v2370
      %2387 = vst [vmem:[#allocation2 + $0x330] sm:$0xff] %v2371
      %2388 = vst [vmem:[#allocation2 + $0x338] sm:$0xff] %v2372
      %2389 = vst [vmem:[#allocation2 + $0x340] sm:$0xff] %v2373
      %2390 = vst.msk [vmem:[#allocation2 + $0x348] sm:$0xff] %vm2053, %v2374
      %v2391 = vld [vmem:[#allocation2] sm:$0xff]
      %v2392 = vld [vmem:[#allocation2 + $0x8] sm:$0xff]
      %v2393 = vld [vmem:[#allocation2 + $0x10] sm:$0xff]
      %v2394 = vld [vmem:[#allocation2 + $0x18] sm:$0xff]
      %v2395 = vld [vmem:[#allocation2 + $0x30] sm:$0xff]
      %v2396 = vld [vmem:[#allocation2 + $0x38] sm:$0xff]
      %v2397 = vld [vmem:[#allocation2 + $0x40] sm:$0xff]
      %v2398 = vld [vmem:[#allocation2 + $0x48] sm:$0xff]
      %v2399 = vld [vmem:[#allocation2 + $0x60] sm:$0xff]
      %v2400 = vld [vmem:[#allocation2 + $0x68] sm:$0xff]
      %v2401 = vld [vmem:[#allocation2 + $0x70] sm:$0xff]
      %v2402 = vld [vmem:[#allocation2 + $0x78] sm:$0xff]
      %v2403 = vld [vmem:[#allocation2 + $0x90] sm:$0xff]
      %v2404 = vld [vmem:[#allocation2 + $0x98] sm:$0xff]
      %v2405 = vld [vmem:[#allocation2 + $0xa0] sm:$0xff]
      %v2406 = vld [vmem:[#allocation2 + $0xa8] sm:$0xff]
      %v2407 = vld [vmem:[#allocation2 + $0xc0] sm:$0xff]
      %v2408 = vld [vmem:[#allocation2 + $0xc8] sm:$0xff]
      %v2409 = vld [vmem:[#allocation2 + $0xd0] sm:$0xff]
      %v2410 = vld [vmem:[#allocation2 + $0xd8] sm:$0xff]
      %v2411 = vld [vmem:[#allocation2 + $0xf0] sm:$0xff]
      %v2412 = vld [vmem:[#allocation2 + $0xf8] sm:$0xff]
      %v2413 = vld [vmem:[#allocation2 + $0x100] sm:$0xff]
      %v2414 = vld [vmem:[#allocation2 + $0x108] sm:$0xff]
      %v2415 = vld [vmem:[#allocation2 + $0x120] sm:$0xff]
      %v2416 = vld [vmem:[#allocation2 + $0x128] sm:$0xff]
      %v2417 = vld [vmem:[#allocation2 + $0x130] sm:$0xff]
      %v2418 = vld [vmem:[#allocation2 + $0x138] sm:$0xff]
      %v2419 = vld [vmem:[#allocation2 + $0x150] sm:$0xff]
      %v2420 = vld [vmem:[#allocation2 + $0x158] sm:$0xff]
      %v2421 = vld [vmem:[#allocation2 + $0x160] sm:$0xff]
      %v2422 = vld [vmem:[#allocation2 + $0x168] sm:$0xff]
      %v2423 = vld [vmem:[#allocation2 + $0x180] sm:$0xff]
      %v2424 = vld [vmem:[#allocation2 + $0x188] sm:$0xff]
      %v2425 = vld [vmem:[#allocation2 + $0x190] sm:$0xff]
      %v2426 = vld [vmem:[#allocation2 + $0x198] sm:$0xff]
      %v2427 = vld [vmem:[#allocation2 + $0x1b0] sm:$0xff]
      %v2428 = vld [vmem:[#allocation2 + $0x1b8] sm:$0xff]
      %v2429 = vld [vmem:[#allocation2 + $0x1c0] sm:$0xff]
      %v2430 = vld [vmem:[#allocation2 + $0x1c8] sm:$0xff]
      %v2431 = vld [vmem:[#allocation2 + $0x1e0] sm:$0xff]
      %v2432 = vld [vmem:[#allocation2 + $0x1e8] sm:$0xff]
      %v2433 = vld [vmem:[#allocation2 + $0x1f0] sm:$0xff]
      %v2434 = vld [vmem:[#allocation2 + $0x1f8] sm:$0xff]
      %v2435 = vld [vmem:[#allocation2 + $0x210] sm:$0xff]
      %v2436 = vld [vmem:[#allocation2 + $0x218] sm:$0xff]
      %v2437 = vld [vmem:[#allocation2 + $0x220] sm:$0xff]
      %v2438 = vld [vmem:[#allocation2 + $0x228] sm:$0xff]
      %v2439 = vld [vmem:[#allocation2 + $0x240] sm:$0xff]
      %v2440 = vld [vmem:[#allocation2 + $0x248] sm:$0xff]
      %v2441 = vld [vmem:[#allocation2 + $0x250] sm:$0xff]
      %v2442 = vld [vmem:[#allocation2 + $0x258] sm:$0xff]
      %v2443 = vld [vmem:[#allocation2 + $0x270] sm:$0xff]
      %v2444 = vld [vmem:[#allocation2 + $0x278] sm:$0xff]
      %v2445 = vld [vmem:[#allocation2 + $0x280] sm:$0xff]
      %v2446 = vld [vmem:[#allocation2 + $0x288] sm:$0xff]
      %v2447 = vld [vmem:[#allocation2 + $0x2a0] sm:$0xff]
      %v2448 = vld [vmem:[#allocation2 + $0x2a8] sm:$0xff]
      %v2449 = vld [vmem:[#allocation2 + $0x2b0] sm:$0xff]
      %v2450 = vld [vmem:[#allocation2 + $0x2b8] sm:$0xff]
      %v2451 = vld [vmem:[#allocation2 + $0x2d0] sm:$0xff]
      %v2452 = vld [vmem:[#allocation2 + $0x2d8] sm:$0xff]
      %v2453 = vld [vmem:[#allocation2 + $0x2e0] sm:$0xff]
      %v2454 = vld [vmem:[#allocation2 + $0x2e8] sm:$0xff]
      %v2455 = vld [vmem:[#allocation2 + $0x300] sm:$0xff]
      %v2456 = vld [vmem:[#allocation2 + $0x308] sm:$0xff]
      %v2457 = vld [vmem:[#allocation2 + $0x310] sm:$0xff]
      %v2458 = vld [vmem:[#allocation2 + $0x318] sm:$0xff]
      %v2459 = vld [vmem:[#allocation2 + $0x330] sm:$0xff]
      %v2460 = vld [vmem:[#allocation2 + $0x338] sm:$0xff]
      %v2461 = vld [vmem:[#allocation2 + $0x340] sm:$0xff]
      %v2462 = vld [vmem:[#allocation2 + $0x348] sm:$0xff]
      %v2463 = vld [vmem:[%s7] sm:$0xff]
      %v2464 = vld [vmem:[%s7 + $0x8] sm:$0xff]
      %v2465 = vld [vmem:[%s7 + $0x10] sm:$0xff]
      %v2466 = vld [vmem:[%s7 + $0x18] sm:$0xff]
      %v2467 = vld [vmem:[%s8] sm:$0xff]
      %v2468 = vld [vmem:[%s8 + $0x8] sm:$0xff]
      %2470 = vset.pattern.permute.xlu0 0
      %2471 = vperm.xlu0 %2470, %v2467
      %v2472 = vpop.permute.xlu0 %2471
      %2475 = vset.pattern.permute.xlu0 0
      %2476 = vperm.xlu0 %2475, %v2468
      %v2477 = vpop.permute.xlu0 %2476
      %v2480 = vsel %vm1681, %v2464, 0
      %v2483 = vsel %vm1681, %v2466, 0
      %2485 = vmatprep.subr.mxu0 %v2392
      %2486 = vmatpush1.msra.mxu0 %v2391
      %2487 = vmatprep.subr.mxu0 %v2396
      %2488 = vmatpush1.msra.mxu0 %v2395
      %2489 = vmatprep.subr.mxu0 %v2400
      %2490 = vmatpush1.msra.mxu0 %v2399
      %2491 = vmatprep.subr.mxu0 %v2404
      %2492 = vmatpush1.msra.mxu0 %v2403
      %2493 = vmatprep.subr.mxu0 %v2408
      %2494 = vmatpush1.msra.mxu0 %v2407
      %2495 = vmatprep.subr.mxu0 %v2412
      %2496 = vmatpush1.msra.mxu0 %v2411
      %2497 = vmatprep.subr.mxu0 %v2416
      %2498 = vmatpush1.msra.mxu0 %v2415
      %2499 = vmatprep.subr.mxu0 %v2420
      %2500 = vmatpush1.msra.mxu0 %v2419
      %2501 = vmatprep.subr.mxu0 %v2424
      %2502 = vmatpush1.msra.mxu0 %v2423
      %2503 = vmatprep.subr.mxu0 %v2428
      %2504 = vmatpush1.msra.mxu0 %v2427
      %2505 = vmatprep.subr.mxu0 %v2432
      %2506 = vmatpush1.msra.mxu0 %v2431
      %2507 = vmatprep.subr.mxu0 %v2436
      %2508 = vmatpush1.msra.mxu0 %v2435
      %2509 = vmatprep.subr.mxu0 %v2440
      %2510 = vmatpush1.msra.mxu0 %v2439
      %2511 = vmatprep.subr.mxu0 %v2444
      %2512 = vmatpush1.msra.mxu0 %v2443
      %2513 = vmatprep.subr.mxu0 %v2448
      %2514 = vmatpush1.msra.mxu0 %v2447
      %2515 = vmatprep.subr.mxu0 %v2452
      %2516 = vmatpush1.msra.mxu0 %v2451
      %2517 = vmatprep.subr.mxu0 %v2456
      %2518 = vmatpush1.msra.mxu0 %v2455
      %2519 = vmatprep.subr.mxu0 %v2460
      %2520 = vmatpush1.msra.mxu0 %v2459
      %2521 = vmatprep.subr.mxu0 0.0
      %2522 = vmatpush1.msra.mxu0 0.0
      %2523 = vmatprep.subr.mxu0 0.0
      %2524 = vmatpush1.msra.mxu0 0.0
      %2525 = vmatprep.subr.mxu0 0.0
      %2526 = vmatpush1.msra.mxu0 0.0
      %2527 = vmatprep.subr.mxu0 0.0
      %2528 = vmatpush1.msra.mxu0 0.0
      %2529 = vmatprep.subr.mxu0 0.0
      %2530 = vmatpush1.msra.mxu0 0.0
      %2531 = vmatprep.subr.mxu0 0.0
      %2532 = vmatpush1.msra.mxu0 0.0
      %2533 = vmatprep.subr.mxu0 0.0
      %2534 = vmatpush1.msra.mxu0 0.0
      %2535 = vmatprep.subr.mxu0 0.0
      %2536 = vmatpush1.msra.mxu0 0.0
      %2537 = vmatprep.subr.mxu0 0.0
      %2538 = vmatpush1.msra.mxu0 0.0
      %2539 = vmatprep.subr.mxu0 0.0
      %2540 = vmatpush1.msra.mxu0 0.0
      %2541 = vmatprep.subr.mxu0 0.0
      %2542 = vmatpush1.msra.mxu0 0.0
      %2543 = vmatprep.subr.mxu0 0.0
      %2544 = vmatpush1.msra.mxu0 0.0
      %2545 = vmatprep.subr.mxu0 0.0
      %2546 = vmatpush1.msra.mxu0 0.0
      %2547 = vmatprep.subr.mxu0 0.0
      %2548 = vmatpush1.msra.mxu0 0.0
      %2549 = vmatprep.mubr.f32.mxu0 %v2480
      %2550 = vmatmul.mubr.f32.gmra.mrb[0].mxu0 %v2463
      %v2551 = vpop.f32.mrb[0].mxu0
      %v2552 = vadd.f32 %v2472, %v2551
      %v2553 = vpop.f32.mrb[0].mxu0
      %v2554 = vadd.f32 %v2472, %v2553
      %2555 = vmatprep.mubr.f32.mxu0 %v2483
      %2556 = vmatmul.mubr.f32.gmra.mrb[0].mxu0 %v2465
      %v2557 = vpop.f32.mrb[0].mxu0
      %v2558 = vadd.f32 %v2477, %v2557
      %v2559 = vpop.f32.mrb[0].mxu0
      %v2560 = vadd.f32 %v2477, %v2559
      %2561 = vdwg.mxu0
      %2562 = vmatprep.subr.mxu0 %v2394
      %2563 = vmatpush1.msra.mxu0 %v2393
      %2564 = vmatprep.subr.mxu0 %v2398
      %2565 = vmatpush1.msra.mxu0 %v2397
      %2566 = vmatprep.subr.mxu0 %v2402
      %2567 = vmatpush1.msra.mxu0 %v2401
      %2568 = vmatprep.subr.mxu0 %v2406
      %2569 = vmatpush1.msra.mxu0 %v2405
      %2570 = vmatprep.subr.mxu0 %v2410
      %2571 = vmatpush1.msra.mxu0 %v2409
      %2572 = vmatprep.subr.mxu0 %v2414
      %2573 = vmatpush1.msra.mxu0 %v2413
      %2574 = vmatprep.subr.mxu0 %v2418
      %2575 = vmatpush1.msra.mxu0 %v2417
      %2576 = vmatprep.subr.mxu0 %v2422
      %2577 = vmatpush1.msra.mxu0 %v2421
      %2578 = vmatprep.subr.mxu0 %v2426
      %2579 = vmatpush1.msra.mxu0 %v2425
      %2580 = vmatprep.subr.mxu0 %v2430
      %2581 = vmatpush1.msra.mxu0 %v2429
      %2582 = vmatprep.subr.mxu0 %v2434
      %2583 = vmatpush1.msra.mxu0 %v2433
      %2584 = vmatprep.subr.mxu0 %v2438
      %2585 = vmatpush1.msra.mxu0 %v2437
      %2586 = vmatprep.subr.mxu0 %v2442
      %2587 = vmatpush1.msra.mxu0 %v2441
      %2588 = vmatprep.subr.mxu0 %v2446
      %2589 = vmatpush1.msra.mxu0 %v2445
      %2590 = vmatprep.subr.mxu0 %v2450
      %2591 = vmatpush1.msra.mxu0 %v2449
      %2592 = vmatprep.subr.mxu0 %v2454
      %2593 = vmatpush1.msra.mxu0 %v2453
      %2594 = vmatprep.subr.mxu0 %v2458
      %2595 = vmatpush1.msra.mxu0 %v2457
      %2596 = vmatprep.subr.mxu0 %v2462
      %2597 = vmatpush1.msra.mxu0 %v2461
      %2598 = vmatprep.subr.mxu0 0.0
      %2599 = vmatpush1.msra.mxu0 0.0
      %2600 = vmatprep.subr.mxu0 0.0
      %2601 = vmatpush1.msra.mxu0 0.0
      %2602 = vmatprep.subr.mxu0 0.0
      %2603 = vmatpush1.msra.mxu0 0.0
      %2604 = vmatprep.subr.mxu0 0.0
      %2605 = vmatpush1.msra.mxu0 0.0
      %2606 = vmatprep.subr.mxu0 0.0
      %2607 = vmatpush1.msra.mxu0 0.0
      %2608 = vmatprep.subr.mxu0 0.0
      %2609 = vmatpush1.msra.mxu0 0.0
      %2610 = vmatprep.subr.mxu0 0.0
      %2611 = vmatpush1.msra.mxu0 0.0
      %2612 = vmatprep.subr.mxu0 0.0
      %2613 = vmatpush1.msra.mxu0 0.0
      %2614 = vmatprep.subr.mxu0 0.0
      %2615 = vmatpush1.msra.mxu0 0.0
      %2616 = vmatprep.subr.mxu0 0.0
      %2617 = vmatpush1.msra.mxu0 0.0
      %2618 = vmatprep.subr.mxu0 0.0
      %2619 = vmatpush1.msra.mxu0 0.0
      %2620 = vmatprep.subr.mxu0 0.0
      %2621 = vmatpush1.msra.mxu0 0.0
      %2622 = vmatprep.subr.mxu0 0.0
      %2623 = vmatpush1.msra.mxu0 0.0
      %2624 = vmatprep.subr.mxu0 0.0
      %2625 = vmatpush1.msra.mxu0 0.0
      %2626 = vmatprep.mubr.f32.mxu0 %v2480
      %2627 = vmatmul.mubr.f32.gmra.mrb[0].mxu0 %v2463
      %v2628 = vpop.f32.mrb[0].mxu0
      %v2629 = vadd.f32 %v2472, %v2628
      %v2630 = vpop.f32.mrb[0].mxu0
      %v2631 = vadd.f32 %v2472, %v2630
      %2632 = vmatprep.mubr.f32.mxu0 %v2483
      %2633 = vmatmul.mubr.f32.gmra.mrb[0].mxu0 %v2465
      %v2634 = vpop.f32.mrb[0].mxu0
      %v2635 = vadd.f32 %v2477, %v2634
      %v2636 = vpop.f32.mrb[0].mxu0
      %v2637 = vadd.f32 %v2477, %v2636
      %2638 = vdwg.mxu0
      %v2639 = vmax.f32 %v2552, 0.0
      %v2640 = vmax.f32 %v2554, 0.0
      %v2641 = vmax.f32 %v2629, 0.0
      %v2642 = vmax.f32 %v2631, 0.0
      %v2643 = vmax.f32 %v2558, 0.0
      %v2644 = vmax.f32 %v2560, 0.0
      %v2645 = vmax.f32 %v2635, 0.0
      %v2646 = vmax.f32 %v2637, 0.0
      %2653 = vrot.lane.b32.xlu0 %v2639, 126
      %v2654 = vpop.permute.xlu0 %2653
      %2655 = vrot.lane.b32.xlu0 %v2640, 126
      %v2656 = vpop.permute.xlu0 %2655
      %2657 = vrot.lane.b32.xlu0 %v2641, 126
      %v2658 = vpop.permute.xlu0 %2657
      %2659 = vrot.lane.b32.xlu0 %v2643, 126
      %v2660 = vpop.permute.xlu0 %2659
      %2661 = vrot.lane.b32.xlu0 %v2644, 126
      %v2662 = vpop.permute.xlu0 %2661
      %2663 = vrot.lane.b32.xlu0 %v2645, 126
      %v2664 = vpop.permute.xlu0 %2663
      %v2665 = vsel %vm449, %v2654, %v2656
      %v2666 = vsel %vm449, %v2656, %v2658
      %v2667 = vsel %vm449, %v2660, %v2662
      %v2668 = vsel %vm449, %v2662, %v2664
      %v2675 = vmax.f32 %v2639, %v2665
      %v2676 = vmax.f32 %v2640, %v2666
      %v2677 = vmax.f32 %v2641, %v2658
      %v2678 = vmax.f32 %v2643, %v2667
      %v2679 = vmax.f32 %v2644, %v2668
      %v2680 = vmax.f32 %v2645, %v2664
      %2683 = vrot.lane.b32.xlu0 %v2642, 126
      %v2684 = vpop.permute.xlu0 %2683
      %2685 = vrot.lane.b32.xlu0 %v2646, 126
      %v2686 = vpop.permute.xlu0 %2685
      %v2687 = vsel %vm449, %v2658, %v2684
      %v2688 = vsel %vm449, %v2664, %v2686
      %v2693 = vmax.f32 %v2641, %v2687
      %v2694 = vmax.f32 %v2642, %v2684
      %v2695 = vmax.f32 %v2645, %v2688
      %v2696 = vmax.f32 %v2646, %v2686
      %2705 = vrot.lane.b32.xlu0 %v2675, 72
      %v2706 = vpop.permute.xlu0 %2705
      %2707 = vrot.lane.b32.xlu0 %v2676, 72
      %v2708 = vpop.permute.xlu0 %2707
      %2709 = vrot.lane.b32.xlu0 %v2693, 72
      %v2710 = vpop.permute.xlu0 %2709
      %2711 = vrot.lane.b32.xlu0 %v2694, 72
      %v2712 = vpop.permute.xlu0 %2711
      %2713 = vrot.lane.b32.xlu0 %v2678, 72
      %v2714 = vpop.permute.xlu0 %2713
      %2715 = vrot.lane.b32.xlu0 %v2679, 72
      %v2716 = vpop.permute.xlu0 %2715
      %2717 = vrot.lane.b32.xlu0 %v2695, 72
      %v2718 = vpop.permute.xlu0 %2717
      %2719 = vrot.lane.b32.xlu0 %v2696, 72
      %v2720 = vpop.permute.xlu0 %2719
      %v2721 = vsel %vm572, %v2706, %v2708
      %v2722 = vsel %vm572, %v2708, %v2710
      %v2723 = vsel %vm572, %v2710, %v2712
      %v2724 = vsel %vm572, %v2714, %v2716
      %v2725 = vsel %vm572, %v2716, %v2718
      %v2726 = vsel %vm572, %v2718, %v2720
      %v2733 = vmax.f32 %v2675, %v2721
      %v2734 = vmax.f32 %v2676, %v2722
      %v2735 = vmax.f32 %v2677, %v2723
      %v2736 = vmax.f32 %v2678, %v2724
      %v2737 = vmax.f32 %v2679, %v2725
      %v2738 = vmax.f32 %v2680, %v2726
      %vm2739 = vcmask 7168
      %2740 = vst.msk [vmem:[#allocation2] sm:$0xff] %vm2739, %v2733
      %2741 = vst.msk [vmem:[#allocation2 + $0x30] sm:$0xff] %vm2739, %v2736
      %2744 = vrot.lane.b32.xlu0 %v2733, 124
      %v2745 = vpop.permute.xlu0 %2744
      %2746 = vrot.lane.b32.xlu0 %v2736, 124
      %v2747 = vpop.permute.xlu0 %2746
      %2750 = vst.msk [vmem:[#allocation2 + $0x60] sm:$0xff] %vm2739, %v2745
      %2751 = vst.msk [vmem:[#allocation2 + $0x90] sm:$0xff] %vm2739, %v2747
      %2752 = vrot.lane.b32.xlu0 %v2733, 120
      %v2753 = vpop.permute.xlu0 %2752
      %2754 = vrot.lane.b32.xlu0 %v2736, 120
      %v2755 = vpop.permute.xlu0 %2754
      %2758 = vst.msk [vmem:[#allocation2 + $0xc0] sm:$0xff] %vm2739, %v2753
      %2759 = vst.msk [vmem:[#allocation2 + $0xf0] sm:$0xff] %vm2739, %v2755
      %2760 = vrot.lane.b32.xlu0 %v2733, 116
      %v2761 = vpop.permute.xlu0 %2760
      %2762 = vrot.lane.b32.xlu0 %v2736, 116
      %v2763 = vpop.permute.xlu0 %2762
      %2766 = vst.msk [vmem:[#allocation2 + $0x120] sm:$0xff] %vm2739, %v2761
      %2767 = vst.msk [vmem:[#allocation2 + $0x150] sm:$0xff] %vm2739, %v2763
      %2768 = vrot.lane.b32.xlu0 %v2733, 16
      %v2769 = vpop.permute.xlu0 %2768
      %2770 = vrot.lane.b32.xlu0 %v2736, 16
      %v2771 = vpop.permute.xlu0 %2770
      %2774 = vst.msk [vmem:[#allocation2 + $0x180] sm:$0xff] %vm2739, %v2769
      %2775 = vst.msk [vmem:[#allocation2 + $0x1b0] sm:$0xff] %vm2739, %v2771
      %2776 = vrot.lane.b32.xlu0 %v2733, 12
      %v2777 = vpop.permute.xlu0 %2776
      %2778 = vrot.lane.b32.xlu0 %v2736, 12
      %v2779 = vpop.permute.xlu0 %2778
      %2782 = vst.msk [vmem:[#allocation2 + $0x1e0] sm:$0xff] %vm2739, %v2777
      %2783 = vst.msk [vmem:[#allocation2 + $0x210] sm:$0xff] %vm2739, %v2779
      %2784 = vrot.lane.b32.xlu0 %v2733, 8
      %v2785 = vpop.permute.xlu0 %2784
      %2786 = vrot.lane.b32.xlu0 %v2736, 8
      %v2787 = vpop.permute.xlu0 %2786
      %2790 = vst.msk [vmem:[#allocation2 + $0x240] sm:$0xff] %vm2739, %v2785
      %2791 = vst.msk [vmem:[#allocation2 + $0x270] sm:$0xff] %vm2739, %v2787
      %2792 = vrot.lane.b32.xlu0 %v2733, 4
      %v2793 = vpop.permute.xlu0 %2792
      %2794 = vrot.lane.b32.xlu0 %v2736, 4
      %v2795 = vpop.permute.xlu0 %2794
      %2798 = vst.msk [vmem:[#allocation2 + $0x2a0] sm:$0xff] %vm2739, %v2793
      %2799 = vst.msk [vmem:[#allocation2 + $0x2d0] sm:$0xff] %vm2739, %v2795
      %2802 = vrot.lane.b32.xlu0 %v2734, 32
      %v2803 = vpop.permute.xlu0 %2802
      %2804 = vrot.lane.b32.xlu0 %v2737, 32
      %v2805 = vpop.permute.xlu0 %2804
      %2808 = vst.msk [vmem:[#allocation2 + $0x300] sm:$0xff] %vm2739, %v2803
      %2809 = vst.msk [vmem:[#allocation2 + $0x330] sm:$0xff] %vm2739, %v2805
      %2810 = vrot.lane.b32.xlu0 %v2734, 28
      %v2811 = vpop.permute.xlu0 %2810
      %2812 = vrot.lane.b32.xlu0 %v2737, 28
      %v2813 = vpop.permute.xlu0 %2812
      %2816 = vst.msk [vmem:[#allocation2 + $0x360] sm:$0xff] %vm2739, %v2811
      %2817 = vst.msk [vmem:[#allocation2 + $0x390] sm:$0xff] %vm2739, %v2813
      %2818 = vrot.lane.b32.xlu0 %v2734, 24
      %v2819 = vpop.permute.xlu0 %2818
      %2820 = vrot.lane.b32.xlu0 %v2737, 24
      %v2821 = vpop.permute.xlu0 %2820
      %2824 = vst.msk [vmem:[#allocation2 + $0x3c0] sm:$0xff] %vm2739, %v2819
      %2825 = vst.msk [vmem:[#allocation2 + $0x3f0] sm:$0xff] %vm2739, %v2821
      %2826 = vrot.lane.b32.xlu0 %v2734, 20
      %v2827 = vpop.permute.xlu0 %2826
      %2828 = vrot.lane.b32.xlu0 %v2737, 20
      %v2829 = vpop.permute.xlu0 %2828
      %2832 = vst.msk [vmem:[#allocation2 + $0x420] sm:$0xff] %vm2739, %v2827
      %2833 = vst.msk [vmem:[#allocation2 + $0x450] sm:$0xff] %vm2739, %v2829
      %2836 = vrot.lane.b32.xlu0 %v2735, 48
      %v2837 = vpop.permute.xlu0 %2836
      %2838 = vrot.lane.b32.xlu0 %v2738, 48
      %v2839 = vpop.permute.xlu0 %2838
      %2842 = vst.msk [vmem:[#allocation2 + $0x480] sm:$0xff] %vm2739, %v2837
      %2843 = vst.msk [vmem:[#allocation2 + $0x4b0] sm:$0xff] %vm2739, %v2839
      %2844 = vrot.lane.b32.xlu0 %v2735, 44
      %v2845 = vpop.permute.xlu0 %2844
      %2846 = vrot.lane.b32.xlu0 %v2738, 44
      %v2847 = vpop.permute.xlu0 %2846
      %2850 = vst.msk [vmem:[#allocation2 + $0x4e0] sm:$0xff] %vm2739, %v2845
      %2851 = vst.msk [vmem:[#allocation2 + $0x510] sm:$0xff] %vm2739, %v2847
      %2852 = vrot.lane.b32.xlu0 %v2735, 40
      %v2853 = vpop.permute.xlu0 %2852
      %2854 = vrot.lane.b32.xlu0 %v2738, 40
      %v2855 = vpop.permute.xlu0 %2854
      %2858 = vst.msk [vmem:[#allocation2 + $0x540] sm:$0xff] %vm2739, %v2853
      %2859 = vst.msk [vmem:[#allocation2 + $0x570] sm:$0xff] %vm2739, %v2855
      %2860 = vrot.lane.b32.xlu0 %v2735, 36
      %v2861 = vpop.permute.xlu0 %2860
      %2862 = vrot.lane.b32.xlu0 %v2738, 36
      %v2863 = vpop.permute.xlu0 %2862
      %2866 = vst.msk [vmem:[#allocation2 + $0x5a0] sm:$0xff] %vm2739, %v2861
      %2867 = vst.msk [vmem:[#allocation2 + $0x5d0] sm:$0xff] %vm2739, %v2863
      %v2868 = vld [vmem:[#allocation2] sm:$0xff]
      %v2869 = vld [vmem:[#allocation2 + $0x30] sm:$0xff]
      %v2870 = vld [vmem:[#allocation2 + $0x60] sm:$0xff]
      %v2871 = vld [vmem:[#allocation2 + $0x90] sm:$0xff]
      %v2872 = vld [vmem:[#allocation2 + $0xc0] sm:$0xff]
      %v2873 = vld [vmem:[#allocation2 + $0xf0] sm:$0xff]
      %v2874 = vld [vmem:[#allocation2 + $0x120] sm:$0xff]
      %v2875 = vld [vmem:[#allocation2 + $0x150] sm:$0xff]
      %v2876 = vld [vmem:[#allocation2 + $0x180] sm:$0xff]
      %v2877 = vld [vmem:[#allocation2 + $0x1b0] sm:$0xff]
      %v2878 = vld [vmem:[#allocation2 + $0x1e0] sm:$0xff]
      %v2879 = vld [vmem:[#allocation2 + $0x210] sm:$0xff]
      %v2880 = vld [vmem:[#allocation2 + $0x240] sm:$0xff]
      %v2881 = vld [vmem:[#allocation2 + $0x270] sm:$0xff]
      %v2882 = vld [vmem:[#allocation2 + $0x2a0] sm:$0xff]
      %v2883 = vld [vmem:[#allocation2 + $0x2d0] sm:$0xff]
      %v2884 = vld [vmem:[#allocation2 + $0x300] sm:$0xff]
      %v2885 = vld [vmem:[#allocation2 + $0x330] sm:$0xff]
      %v2886 = vld [vmem:[#allocation2 + $0x360] sm:$0xff]
      %v2887 = vld [vmem:[#allocation2 + $0x390] sm:$0xff]
      %v2888 = vld [vmem:[#allocation2 + $0x3c0] sm:$0xff]
      %v2889 = vld [vmem:[#allocation2 + $0x3f0] sm:$0xff]
      %v2890 = vld [vmem:[#allocation2 + $0x420] sm:$0xff]
      %v2891 = vld [vmem:[#allocation2 + $0x450] sm:$0xff]
      %v2892 = vld [vmem:[#allocation2 + $0x480] sm:$0xff]
      %v2893 = vld [vmem:[#allocation2 + $0x4b0] sm:$0xff]
      %v2894 = vld [vmem:[#allocation2 + $0x4e0] sm:$0xff]
      %v2895 = vld [vmem:[#allocation2 + $0x510] sm:$0xff]
      %v2896 = vld [vmem:[#allocation2 + $0x540] sm:$0xff]
      %v2897 = vld [vmem:[#allocation2 + $0x570] sm:$0xff]
      %v2898 = vld [vmem:[#allocation2 + $0x5a0] sm:$0xff]
      %v2899 = vld [vmem:[#allocation2 + $0x5d0] sm:$0xff]
      %v2900 = vld [vmem:[%s9] sm:$0xff]
      %v2901 = vld [vmem:[%s9 + $0x8] sm:$0xff]
      %v2902 = vld [vmem:[%s9 + $0x10] sm:$0x3]
      %v2903 = vld [vmem:[%s9 + $0x18] sm:$0x3]
      %v2904 = vld [vmem:[%s10] sm:$0xff]
      %v2905 = vld [vmem:[%s10 + $0x8] sm:$0x3]
      %2906 = vmatprep.subr.mxu0 0.0
      %2907 = vmatpush1.msra.mxu0 %v2868
      %2908 = vmatprep.subr.mxu0 0.0
      %2909 = vmatpush1.msra.mxu0 %v2869
      %2910 = vmatprep.subr.mxu0 0.0
      %2911 = vmatpush1.msra.mxu0 %v2870
      %2912 = vmatprep.subr.mxu0 0.0
      %2913 = vmatpush1.msra.mxu0 %v2871
      %2914 = vmatprep.subr.mxu0 0.0
      %2915 = vmatpush1.msra.mxu0 %v2872
      %2916 = vmatprep.subr.mxu0 0.0
      %2917 = vmatpush1.msra.mxu0 %v2873
      %2918 = vmatprep.subr.mxu0 0.0
      %2919 = vmatpush1.msra.mxu0 %v2874
      %2920 = vmatprep.subr.mxu0 0.0
      %2921 = vmatpush1.msra.mxu0 %v2875
      %2922 = vmatprep.subr.mxu0 0.0
      %2923 = vmatpush1.msra.mxu0 %v2876
      %2924 = vmatprep.subr.mxu0 0.0
      %2925 = vmatpush1.msra.mxu0 %v2877
      %2926 = vmatprep.subr.mxu0 0.0
      %2927 = vmatpush1.msra.mxu0 %v2878
      %2928 = vmatprep.subr.mxu0 0.0
      %2929 = vmatpush1.msra.mxu0 %v2879
      %2930 = vmatprep.subr.mxu0 0.0
      %2931 = vmatpush1.msra.mxu0 %v2880
      %2932 = vmatprep.subr.mxu0 0.0
      %2933 = vmatpush1.msra.mxu0 %v2881
      %2934 = vmatprep.subr.mxu0 0.0
      %2935 = vmatpush1.msra.mxu0 %v2882
      %2936 = vmatprep.subr.mxu0 0.0
      %2937 = vmatpush1.msra.mxu0 %v2883
      %2938 = vmatprep.subr.mxu0 0.0
      %2939 = vmatpush1.msra.mxu0 %v2884
      %2940 = vmatprep.subr.mxu0 0.0
      %2941 = vmatpush1.msra.mxu0 %v2885
      %2942 = vmatprep.subr.mxu0 0.0
      %2943 = vmatpush1.msra.mxu0 %v2886
      %2944 = vmatprep.subr.mxu0 0.0
      %2945 = vmatpush1.msra.mxu0 %v2887
      %2946 = vmatprep.subr.mxu0 0.0
      %2947 = vmatpush1.msra.mxu0 %v2888
      %2948 = vmatprep.subr.mxu0 0.0
      %2949 = vmatpush1.msra.mxu0 %v2889
      %2950 = vmatprep.subr.mxu0 0.0
      %2951 = vmatpush1.msra.mxu0 %v2890
      %2952 = vmatprep.subr.mxu0 0.0
      %2953 = vmatpush1.msra.mxu0 %v2891
      %2954 = vmatprep.subr.mxu0 0.0
      %2955 = vmatpush1.msra.mxu0 %v2892
      %2956 = vmatprep.subr.mxu0 0.0
      %2957 = vmatpush1.msra.mxu0 %v2893
      %2958 = vmatprep.subr.mxu0 0.0
      %2959 = vmatpush1.msra.mxu0 %v2894
      %2960 = vmatprep.subr.mxu0 0.0
      %2961 = vmatpush1.msra.mxu0 %v2895
      %2962 = vmatprep.subr.mxu0 0.0
      %2963 = vmatpush1.msra.mxu0 %v2896
      %2964 = vmatprep.subr.mxu0 0.0
      %2965 = vmatpush1.msra.mxu0 %v2897
      %2966 = vmatprep.subr.mxu0 0.0
      %2967 = vmatpush1.msra.mxu0 %v2898
      %2968 = vmatprep.subr.mxu0 0.0
      %2969 = vmatpush1.msra.mxu0 %v2899
      %2970 = vmatprep.mubr.f32.mxu0 %v2901
      %2971 = vmatmul.mubr.f32.gmra.mrb[0].mxu0 %v2900
      %v2972 = vpop.f32.mrb[0].mxu0
      %v2973 = vadd.f32 %v2904, %v2972
      %v2974 = vpop.f32.mrb[0].mxu0
      %2975 = vmatprep.mubr.f32.mxu0 %v2903
      %2976 = vmatmul.mubr.f32.gmra.mrb[0].mxu0 %v2902
      %v2977 = vpop.f32.mrb[0].mxu0
      %v2978 = vadd.f32 %v2905, %v2977
      %v2979 = vpop.f32.mrb[0].mxu0
      %2980 = vdwg.mxu0
      %2981 = vst.msk [vmem:[%s386] sm:$0xff] %vm2739, %v2973
      %vm2982 = vcmask 1024
      %2983 = vst.msk [vmem:[%s386 + $0x8] sm:$0x3] %vm2982, %v2978
      %p2984 = scmp.lt.s32.totalorder %s22, 1
      %s2985 = scalar_select %p2984, %s22, 1
      %s2986 = smul.addr %s2985, 2
      %s2987 = smul.addr %s2986, 8
      %s2988 = scalar_lea.vmem %s11, %s2987
      // Predicated region
      $region65: #{cnn_forward.1} parent=63 // pred_check
        %p2989 = pneg %p276
      $region66: #{cnn_forward.1} parent=63 // pred_check_branch
        %2991 = sbr.rel (%p2989) target = $region68
      $region67: #{cnn_forward.1} parent=63 // pred_region
        _
      $region68: #{cnn_forward.1} parent=63 // pred_fallthru
        _
    $region64: #{cnn_forward.1} parent=5 // pred_fallthru
      _
    %p2992 = scmp.le.s32.totalorder 2, %s17
    // Predicated region
    $region69: #{cnn_forward.1} parent=5 // pred_check
      %p2993 = pneg %p2992
    $region70: #{cnn_forward.1} parent=5 // pred_check_branch
      %2995 = sbr.rel (%p2993) target = $region72
    $region71: #{cnn_forward.1} parent=5 // pred_region
      %s2996 = ssub.s32 %s17, 2
      // Predicated region
      $region73: #{cnn_forward.1} parent=71 // pred_check
        %p2997 = pneg %p282
      $region74: #{cnn_forward.1} parent=71 // pred_check_branch
        %2999 = sbr.rel (%p2997) target = $region76
      $region75: #{cnn_forward.1} parent=71 // pred_region
        %p3000 = scmp.lt.s32.totalorder %s23, 1
        %s3001 = scalar_select %p3000, %s23, 1
        %s3002 = smul.addr %s3001, 2
        %s3003 = smul.addr %s3002, 8
        %s3004 = scalar_lea.vmem %s11, %s3003
      $region76: #{cnn_forward.1} parent=71 // pred_fallthru
        _
    $region72: #{cnn_forward.1} parent=5 // pred_fallthru
      _
  $region6: #{cnn_forward.1} parent=0 // loop_footer
    %s21 = sadd.s32 1, %s17
  $region7: #{cnn_forward.1} parent=0 // loop_footer_branch
    %16 = sbr.rel target = $region3
  $region8: #{cnn_forward.1} parent=0 // loop_exit
    _

</llo_original>
